<compile_context>
chip_gen: v7x
topology: tpu7x:2x2x1
jax: 0.10.0
libtpu: 0.0.40
codegen_flags: <defaults>
</compile_context>

<pallas_src>
import jax
import jax.numpy as jnp
import numpy as np
from jax import lax
from jax.experimental import pallas as pl
from jax.experimental.pallas import tpu as pltpu

EPS = 1e-5
TAPS = tuple((dh, dw) for dh in range(3) for dw in range(3))


def _vmem_limit_bytes():
    """Scoped-VMEM budget derived from the actual chip (re-derived per gen)."""
    try:
        info = pltpu.get_tpu_info()
        cap = getattr(info, "vmem_capacity_bytes", None) or 64 * 1024 * 1024
    except Exception:
        cap = 64 * 1024 * 1024            # conservative: v7x physical VMEM
    # ~3/4 of physical, capped: v5e/v6e -> 96 MiB, v7x -> 48 MiB.
    return int(min(cap * 3 // 4, 112 * 1024 * 1024))


def _fold_bn(stats, gamma, beta, count):
    """Exact batch stats (biased var) folded into per-channel scale/shift."""
    s = jnp.sum(stats, axis=(0, 1))                       # (2, C)
    mean = s[0] / count
    var = jnp.maximum(s[1] / count - mean * mean, 0.0)
    # TODO(synk): E[x^2]-E[x]^2 cancels for activations with large mean/std
    # ratio; a shifted two-pass reduction is safer for production inputs.
    scale = gamma * lax.rsqrt(var + EPS)
    shift = beta - mean * scale
    return scale, shift


@jax.jit
def basic_block(x_nhwc, w1, g1, b1, w2, g2, b2):
    """x_nhwc: (N,H,W,Cin) f32; w1/w2: (3,3,Ci,Co) HWIO f32; g/b: (C,) f32."""
    N, H, W, Cin = x_nhwc.shape
    Cmid, Cout = w1.shape[3], w2.shape[3]
    assert Cin == Cout, "identity skip requires in_channels == out_channels"

    TH = 8 if H % 8 == 0 else H            # H-tile (rows of output per step)
    HT = H // TH
    count = float(N * H * W)

    # bf16 operands for the MXU; accumulation stays f32.
    x_pad = jnp.pad(x_nhwc, ((0, 0), (1, 1), (1, 1), (0, 0))).astype(jnp.bfloat16)
    # HWIO -> rows ordered ((dh*3+dw)*Cin + ci), matching the im2col columns.
    w1f = w1.reshape(9 * Cin, Cmid).astype(jnp.bfloat16)
    w2f = w2.reshape(9 * Cmid, Cout).astype(jnp.bfloat16)

    cparams = pltpu.CompilerParams(
        dimension_semantics=("parallel", "parallel"),   # (N, H-tiles): both
        vmem_limit_bytes=_vmem_limit_bytes())           # independent -> v7x
                                                        # megacore can split.

    # ------------------------------------------------------------------ #
    # Kernels (closures over the static shapes).
    # ------------------------------------------------------------------ #
    def conv1_kernel(xpad_ref, w1_ref, y1_ref, st_ref, col_ref):
        # xpad_ref: (1, H+2, W+2, Cin) bf16, resident for the whole image n.
        t = pl.program_id(1)
        row0 = pl.multiple_of(t * TH, TH)
        # im2col: 9 minor-dim-preserving tap copies into the bf16 col buffer.
        for k, (dh, dw) in enumerate(TAPS):
            tap = xpad_ref[0, pl.ds(row0 + dh, TH), dw:dw + W, :]   # (TH,W,Cin)
            col_ref[:, k * Cin:(k + 1) * Cin] = tap.reshape(TH * W, Cin)
        # Single large-K matmul on the MXU, f32 accumulation.
        acc = jnp.dot(col_ref[...], w1_ref[...],
                      preferred_element_type=jnp.float32)           # (TH*W,Cmid)
        y1_ref[...] = acc.reshape(1, TH, W, Cmid)
        st_ref[0:1, 0:1, 0:1, :] = jnp.sum(acc, axis=0).reshape(1, 1, 1, Cmid)
        st_ref[0:1, 0:1, 1:2, :] = jnp.sum(acc * acc, axis=0).reshape(1, 1, 1, Cmid)

    def conv2_kernel(y1_ref, sc_ref, sh_ref, w2_ref, y2_ref, st_ref,
                     slab_ref, col_ref):
        # y1_ref: (1, H, W, Cmid) f32, resident per image (needed for halos).
        t = pl.program_id(1)
        row0 = pl.multiple_of(t * TH, TH)
        sc = sc_ref[...]                     # (1,1,Cmid) f32
        sh = sh_ref[...]

        def bn1_relu(v):                     # f32 FMA + ReLU (VPU), bf16 only
            return jnp.maximum(v * sc + sh, 0.0)   # when fed to the MXU below.

        mid = bn1_relu(y1_ref[0, pl.ds(row0, TH), :, :])            # (TH,W,Cmid)
        top_idx = jnp.maximum(row0 - 1, 0)
        bot_idx = jnp.minimum(row0 + TH, H - 1)
        top_mask = jnp.where(t > 0, 1.0, 0.0).astype(jnp.float32)
        bot_mask = jnp.where(t < HT - 1, 1.0, 0.0).astype(jnp.float32)
        top = bn1_relu(y1_ref[0, pl.ds(top_idx, 1), :, :]) * top_mask
        bot = bn1_relu(y1_ref[0, pl.ds(bot_idx, 1), :, :]) * bot_mask

        # Padded conv2-input slab (bf16): only the halo ring is zeroed.
        zcol = jnp.zeros((TH + 2, 1, Cmid), dtype=slab_ref.dtype)
        slab_ref[:, 0:1, :] = zcol
        slab_ref[:, W + 1:W + 2, :] = zcol
        slab_ref[0:1, 1:W + 1, :] = top.astype(slab_ref.dtype)
        slab_ref[1:TH + 1, 1:W + 1, :] = mid.astype(slab_ref.dtype)
        slab_ref[TH + 1:TH + 2, 1:W + 1, :] = bot.astype(slab_ref.dtype)

        for k, (dh, dw) in enumerate(TAPS):
            col_ref[:, k * Cmid:(k + 1) * Cmid] = (
                slab_ref[dh:dh + TH, dw:dw + W, :].reshape(TH * W, Cmid))

        acc = jnp.dot(col_ref[...], w2_ref[...],
                      preferred_element_type=jnp.float32)           # (TH*W,Cout)
        y2_ref[...] = acc.reshape(1, TH, W, Cout)
        st_ref[0:1, 0:1, 0:1, :] = jnp.sum(acc, axis=0).reshape(1, 1, 1, Cout)
        st_ref[0:1, 0:1, 1:2, :] = jnp.sum(acc * acc, axis=0).reshape(1, 1, 1, Cout)

    def epilogue_kernel(y2_ref, x_ref, sc_ref, sh_ref, out_ref):
        # bn2 FMA + identity residual + ReLU (pure elementwise, f32).
        out_ref[...] = jnp.maximum(
            y2_ref[...] * sc_ref[...] + sh_ref[...] + x_ref[...], 0.0)

    # ------------------------------------------------------------------ #
    # Pass 1: conv1 + bn1 statistics.
    # ------------------------------------------------------------------ #
    conv1_cost = pl.CostEstimate(
        flops=2 * N * H * W * 9 * Cin * Cmid,
        transcendentals=0,
        bytes_accessed=(x_pad.size * 2 + w1f.size * 2
                        + N * H * W * Cmid * 4 + N * HT * 2 * Cmid * 4))
    y1, st1 = pl.pallas_call(
        conv1_kernel,
        out_shape=(jax.ShapeDtypeStruct((N, H, W, Cmid), jnp.float32),
                   jax.ShapeDtypeStruct((N, HT, 2, Cmid), jnp.float32)),
        grid_spec=pltpu.PrefetchScalarGridSpec(
            num_scalar_prefetch=0,
            grid=(N, HT),
            in_specs=[
                pl.BlockSpec((1, H + 2, W + 2, Cin), lambda n, t: (n, 0, 0, 0)),
                pl.BlockSpec((9 * Cin, Cmid), lambda n, t: (0, 0)),
            ],
            out_specs=[
                pl.BlockSpec((1, TH, W, Cmid), lambda n, t: (n, t, 0, 0)),
                pl.BlockSpec((1, 1, 2, Cmid), lambda n, t: (n, t, 0, 0)),
            ],
            scratch_shapes=[pltpu.VMEM((TH * W, 9 * Cin), jnp.bfloat16)]),
        compiler_params=cparams,
        cost_estimate=conv1_cost,
    )(x_pad, w1f)

    scale1, shift1 = _fold_bn(st1, g1, b1, count)
    sc1 = scale1.reshape(1, 1, Cmid)
    sh1 = shift1.reshape(1, 1, Cmid)

    # ------------------------------------------------------------------ #
    # Pass 2: bn1+ReLU fused into conv2, conv2 + bn2 statistics.
    # ------------------------------------------------------------------ #
    conv2_cost = pl.CostEstimate(
        flops=2 * N * H * W * 9 * Cmid * Cout + 3 * N * H * W * Cmid,
        transcendentals=0,
        bytes_accessed=(N * H * W * Cmid * 4 + w2f.size * 2
                        + N * H * W * Cout * 4 + N * HT * 2 * Cout * 4))
    y2, st2 = pl.pallas_call(
        conv2_kernel,
        out_shape=(jax.ShapeDtypeStruct((N, H, W, Cout), jnp.float32),
                   jax.ShapeDtypeStruct((N, HT, 2, Cout), jnp.float32)),
        grid_spec=pltpu.PrefetchScalarGridSpec(
            num_scalar_prefetch=0,
            grid=(N, HT),
            in_specs=[
                pl.BlockSpec((1, H, W, Cmid), lambda n, t: (n, 0, 0, 0)),
                pl.BlockSpec((1, 1, Cmid), lambda n, t: (0, 0, 0)),
                pl.BlockSpec((1, 1, Cmid), lambda n, t: (0, 0, 0)),
                pl.BlockSpec((9 * Cmid, Cout), lambda n, t: (0, 0)),
            ],
            out_specs=[
                pl.BlockSpec((1, TH, W, Cout), lambda n, t: (n, t, 0, 0)),
                pl.BlockSpec((1, 1, 2, Cout), lambda n, t: (n, t, 0, 0)),
            ],
            scratch_shapes=[
                pltpu.VMEM((TH + 2, W + 2, Cmid), jnp.bfloat16),  # padded slab
                pltpu.VMEM((TH * W, 9 * Cmid), jnp.bfloat16),     # im2col
            ]),
        compiler_params=cparams,
        cost_estimate=conv2_cost,
    )(y1, sc1, sh1, w2f)

    scale2, shift2 = _fold_bn(st2, g2, b2, count)
    sc2 = scale2.reshape(1, 1, Cout)
    sh2 = shift2.reshape(1, 1, Cout)

    # ------------------------------------------------------------------ #
    # Pass 3: bn2 + identity residual + ReLU, written in place over y2.
    # ------------------------------------------------------------------ #
    epi_cost = pl.CostEstimate(
        flops=3 * N * H * W * Cout,
        transcendentals=0,
        bytes_accessed=3 * N * H * W * Cout * 4)
    out = pl.pallas_call(
        epilogue_kernel,
        out_shape=jax.ShapeDtypeStruct((N, H, W, Cout), jnp.float32),
        grid_spec=pltpu.PrefetchScalarGridSpec(
            num_scalar_prefetch=0,
            grid=(N, HT),
            in_specs=[
                pl.BlockSpec((1, TH, W, Cout), lambda n, t: (n, t, 0, 0)),
                pl.BlockSpec((1, TH, W, Cin), lambda n, t: (n, t, 0, 0)),
                pl.BlockSpec((1, 1, Cout), lambda n, t: (0, 0, 0)),
                pl.BlockSpec((1, 1, Cout), lambda n, t: (0, 0, 0)),
            ],
            out_specs=pl.BlockSpec((1, TH, W, Cout), lambda n, t: (n, t, 0, 0)),
        ),
        compiler_params=cparams,
        cost_estimate=epi_cost,
        input_output_aliases={0: 0},        # reuse y2's HBM buffer for out
    )(y2, x_nhwc, sc2, sh2)

    # TODO(synk): BatchNorm running_mean / running_var updates are stateful
    # training-side buffers; they do not affect this forward output and are
    # not materialized here.
    return out


# --------------------------------------------------------------------------- #
# Plain-JAX reference (matches PyTorch train-mode BasicBlock forward, f32).
# --------------------------------------------------------------------------- #
def reference_forward(x_nhwc, w1, g1, b1, w2, g2, b2):
    dn = ("NHWC", "HWIO", "NHWC")
    prec = lax.Precision.HIGHEST

    def bn(y, g, b):
        m = jnp.mean(y, axis=(0, 1, 2))
        v = jnp.mean((y - m) ** 2, axis=(0, 1, 2))
        return (y - m) * lax.rsqrt(v + EPS) * g + b

    y = lax.conv_general_dilated(x_nhwc, w1, (1, 1), "SAME",
                                 dimension_numbers=dn, precision=prec)
    y = jnp.maximum(bn(y, g1, b1), 0.0)
    z = lax.conv_general_dilated(y, w2, (1, 1), "SAME",
                                 dimension_numbers=dn, precision=prec)
    z = bn(z, g2, b2)
    return jnp.maximum(z + x_nhwc, 0.0)


if __name__ == "__main__":
    # Small deterministic config: in_channels=out_channels=4, stride=1,
    # expansion=1, downsample=None.
    N, C, Hs, Ws = 2, 4, 16, 16
    key = jax.random.PRNGKey(0)
    kx, kw1, kw2, kg1, kb1, kg2, kb2 = jax.random.split(key, 7)

    x_nchw = jax.random.normal(kx, (N, C, Hs, Ws), jnp.float32)   # PyTorch layout
    x_nhwc = jnp.transpose(x_nchw, (0, 2, 3, 1))                  # kernel layout

    w1 = jax.random.normal(kw1, (3, 3, C, C), jnp.float32) * 0.2  # HWIO
    w2 = jax.random.normal(kw2, (3, 3, C, C), jnp.float32) * 0.2
    g1 = 1.0 + 0.1 * jax.random.normal(kg1, (C,), jnp.float32)
    b1 = 0.1 * jax.random.normal(kb1, (C,), jnp.float32)
    g2 = 1.0 + 0.1 * jax.random.normal(kg2, (C,), jnp.float32)
    b2 = 0.1 * jax.random.normal(kb2, (C,), jnp.float32)

    out = jax.block_until_ready(basic_block(x_nhwc, w1, g1, b1, w2, g2, b2))
    ref = reference_forward(x_nhwc, w1, g1, b1, w2, g2, b2)

    # bf16 MXU operands (per the perf review) => relaxed tolerance vs the
    # f32 HIGHEST-precision reference.
    np.testing.assert_allclose(np.asarray(out), np.asarray(ref),
                               rtol=5e-2, atol=5e-2)
    print("KERNEL_OK")
</pallas_src>

<mosaic_0001>
module attributes {stable_mosaic.version = 11 : i64} {
  func.func @conv1_kernel(%arg0: i32, %arg1: i32, %arg2: memref<1x18x18x4xbf16, #tpu.memory_space<vmem>>, %arg3: memref<36x4xbf16, #tpu.memory_space<vmem>>, %arg4: memref<1x8x16x4xf32, #tpu.memory_space<vmem>>, %arg5: memref<1x1x2x4xf32, #tpu.memory_space<vmem>>, %arg6: memref<128x36xbf16, #tpu.memory_space<vmem>>) attributes {dimension_semantics = [#tpu.dimension_semantics<parallel>, #tpu.dimension_semantics<parallel>], iteration_bounds = array<i64: 2, 2>, scalar_prefetch = 0 : i64, scratch_operands = 1 : i64, tpu.core_type = #tpu.core_type<tc>, window_params = [{transform_indices = @transform_0, window_bounds = array<i64: 1, 18, 18, 4>}, {pipeline_mode = #tpu.pipeline_mode<synchronous>, transform_indices = @transform_1, window_bounds = array<i64: 36, 4>}, {transform_indices = @transform_2, window_bounds = array<i64: 1, 8, 16, 4>}, {transform_indices = @transform_3, window_bounds = array<i64: 1, 1, 2, 4>}]} {
    %c8_i32 = arith.constant 8 : i32
    %0 = arith.muli %arg1, %c8_i32 : i32
    %1 = tpu.assume_multiple %0, 8 : i32
    %c0_i32 = arith.constant 0 : i32
    %2 = arith.addi %1, %c0_i32 : i32
    %c0 = arith.constant 0 : index
    %3 = arith.index_cast %2 : i32 to index
    %c0_0 = arith.constant 0 : index
    %c0_1 = arith.constant 0 : index
    %4 = vector.load %arg2[%c0, %3, %c0_0, %c0_1] : memref<1x18x18x4xbf16, #tpu.memory_space<vmem>>, vector<1x8x16x4xbf16>
    %5 = vector.shape_cast %4 : vector<1x8x16x4xbf16> to vector<8x16x4xbf16>
    %6 = vector.shape_cast %5 : vector<8x16x4xbf16> to vector<128x4xbf16>
    %c0_2 = arith.constant 0 : index
    %c0_3 = arith.constant 0 : index
    %7 = vector.load %arg6[%c0_2, %c0_3] : memref<128x36xbf16, #tpu.memory_space<vmem>>, vector<128x4xbf16>
    tpu.vector_store %arg6[%c0_2, %c0_3], %6 {strides = array<i32>} : memref<128x36xbf16, #tpu.memory_space<vmem>>, vector<128x4xbf16>,
    %c0_i32_4 = arith.constant 0 : i32
    %8 = arith.addi %1, %c0_i32_4 : i32
    %c0_5 = arith.constant 0 : index
    %9 = arith.index_cast %8 : i32 to index
    %c1 = arith.constant 1 : index
    %c0_6 = arith.constant 0 : index
    %10 = vector.load %arg2[%c0_5, %9, %c1, %c0_6] : memref<1x18x18x4xbf16, #tpu.memory_space<vmem>>, vector<1x8x16x4xbf16>
    %11 = vector.shape_cast %10 : vector<1x8x16x4xbf16> to vector<8x16x4xbf16>
    %12 = vector.shape_cast %11 : vector<8x16x4xbf16> to vector<128x4xbf16>
    %c0_7 = arith.constant 0 : index
    %c4 = arith.constant 4 : index
    %13 = vector.load %arg6[%c0_7, %c4] : memref<128x36xbf16, #tpu.memory_space<vmem>>, vector<128x4xbf16>
    tpu.vector_store %arg6[%c0_7, %c4], %12 {strides = array<i32>} : memref<128x36xbf16, #tpu.memory_space<vmem>>, vector<128x4xbf16>,
    %c0_i32_8 = arith.constant 0 : i32
    %14 = arith.addi %1, %c0_i32_8 : i32
    %c0_9 = arith.constant 0 : index
    %15 = arith.index_cast %14 : i32 to index
    %c2 = arith.constant 2 : index
    %c0_10 = arith.constant 0 : index
    %16 = vector.load %arg2[%c0_9, %15, %c2, %c0_10] : memref<1x18x18x4xbf16, #tpu.memory_space<vmem>>, vector<1x8x16x4xbf16>
    %17 = vector.shape_cast %16 : vector<1x8x16x4xbf16> to vector<8x16x4xbf16>
    %18 = vector.shape_cast %17 : vector<8x16x4xbf16> to vector<128x4xbf16>
    %c0_11 = arith.constant 0 : index
    %c8 = arith.constant 8 : index
    %19 = vector.load %arg6[%c0_11, %c8] : memref<128x36xbf16, #tpu.memory_space<vmem>>, vector<128x4xbf16>
    tpu.vector_store %arg6[%c0_11, %c8], %18 {strides = array<i32>} : memref<128x36xbf16, #tpu.memory_space<vmem>>, vector<128x4xbf16>,
    %c1_i32 = arith.constant 1 : i32
    %20 = arith.addi %1, %c1_i32 : i32
    %c0_12 = arith.constant 0 : index
    %21 = arith.index_cast %20 : i32 to index
    %c0_13 = arith.constant 0 : index
    %c0_14 = arith.constant 0 : index
    %22 = vector.load %arg2[%c0_12, %21, %c0_13, %c0_14] : memref<1x18x18x4xbf16, #tpu.memory_space<vmem>>, vector<1x8x16x4xbf16>
    %23 = vector.shape_cast %22 : vector<1x8x16x4xbf16> to vector<8x16x4xbf16>
    %24 = vector.shape_cast %23 : vector<8x16x4xbf16> to vector<128x4xbf16>
    %c0_15 = arith.constant 0 : index
    %c12 = arith.constant 12 : index
    %25 = vector.load %arg6[%c0_15, %c12] : memref<128x36xbf16, #tpu.memory_space<vmem>>, vector<128x4xbf16>
    tpu.vector_store %arg6[%c0_15, %c12], %24 {strides = array<i32>} : memref<128x36xbf16, #tpu.memory_space<vmem>>, vector<128x4xbf16>,
    %c1_i32_16 = arith.constant 1 : i32
    %26 = arith.addi %1, %c1_i32_16 : i32
    %c0_17 = arith.constant 0 : index
    %27 = arith.index_cast %26 : i32 to index
    %c1_18 = arith.constant 1 : index
    %c0_19 = arith.constant 0 : index
    %28 = vector.load %arg2[%c0_17, %27, %c1_18, %c0_19] : memref<1x18x18x4xbf16, #tpu.memory_space<vmem>>, vector<1x8x16x4xbf16>
    %29 = vector.shape_cast %28 : vector<1x8x16x4xbf16> to vector<8x16x4xbf16>
    %30 = vector.shape_cast %29 : vector<8x16x4xbf16> to vector<128x4xbf16>
    %c0_20 = arith.constant 0 : index
    %c16 = arith.constant 16 : index
    %31 = vector.load %arg6[%c0_20, %c16] : memref<128x36xbf16, #tpu.memory_space<vmem>>, vector<128x4xbf16>
    tpu.vector_store %arg6[%c0_20, %c16], %30 {strides = array<i32>} : memref<128x36xbf16, #tpu.memory_space<vmem>>, vector<128x4xbf16>,
    %c1_i32_21 = arith.constant 1 : i32
    %32 = arith.addi %1, %c1_i32_21 : i32
    %c0_22 = arith.constant 0 : index
    %33 = arith.index_cast %32 : i32 to index
    %c2_23 = arith.constant 2 : index
    %c0_24 = arith.constant 0 : index
    %34 = vector.load %arg2[%c0_22, %33, %c2_23, %c0_24] : memref<1x18x18x4xbf16, #tpu.memory_space<vmem>>, vector<1x8x16x4xbf16>
    %35 = vector.shape_cast %34 : vector<1x8x16x4xbf16> to vector<8x16x4xbf16>
    %36 = vector.shape_cast %35 : vector<8x16x4xbf16> to vector<128x4xbf16>
    %c0_25 = arith.constant 0 : index
    %c20 = arith.constant 20 : index
    %37 = vector.load %arg6[%c0_25, %c20] : memref<128x36xbf16, #tpu.memory_space<vmem>>, vector<128x4xbf16>
    tpu.vector_store %arg6[%c0_25, %c20], %36 {strides = array<i32>} : memref<128x36xbf16, #tpu.memory_space<vmem>>, vector<128x4xbf16>,
    %c2_i32 = arith.constant 2 : i32
    %38 = arith.addi %1, %c2_i32 : i32
    %c0_26 = arith.constant 0 : index
    %39 = arith.index_cast %38 : i32 to index
    %c0_27 = arith.constant 0 : index
    %c0_28 = arith.constant 0 : index
    %40 = vector.load %arg2[%c0_26, %39, %c0_27, %c0_28] : memref<1x18x18x4xbf16, #tpu.memory_space<vmem>>, vector<1x8x16x4xbf16>
    %41 = vector.shape_cast %40 : vector<1x8x16x4xbf16> to vector<8x16x4xbf16>
    %42 = vector.shape_cast %41 : vector<8x16x4xbf16> to vector<128x4xbf16>
    %c0_29 = arith.constant 0 : index
    %c24 = arith.constant 24 : index
    %43 = vector.load %arg6[%c0_29, %c24] : memref<128x36xbf16, #tpu.memory_space<vmem>>, vector<128x4xbf16>
    tpu.vector_store %arg6[%c0_29, %c24], %42 {strides = array<i32>} : memref<128x36xbf16, #tpu.memory_space<vmem>>, vector<128x4xbf16>,
    %c2_i32_30 = arith.constant 2 : i32
    %44 = arith.addi %1, %c2_i32_30 : i32
    %c0_31 = arith.constant 0 : index
    %45 = arith.index_cast %44 : i32 to index
    %c1_32 = arith.constant 1 : index
    %c0_33 = arith.constant 0 : index
    %46 = vector.load %arg2[%c0_31, %45, %c1_32, %c0_33] : memref<1x18x18x4xbf16, #tpu.memory_space<vmem>>, vector<1x8x16x4xbf16>
    %47 = vector.shape_cast %46 : vector<1x8x16x4xbf16> to vector<8x16x4xbf16>
    %48 = vector.shape_cast %47 : vector<8x16x4xbf16> to vector<128x4xbf16>
    %c0_34 = arith.constant 0 : index
    %c28 = arith.constant 28 : index
    %49 = vector.load %arg6[%c0_34, %c28] : memref<128x36xbf16, #tpu.memory_space<vmem>>, vector<128x4xbf16>
    tpu.vector_store %arg6[%c0_34, %c28], %48 {strides = array<i32>} : memref<128x36xbf16, #tpu.memory_space<vmem>>, vector<128x4xbf16>,
    %c2_i32_35 = arith.constant 2 : i32
    %50 = arith.addi %1, %c2_i32_35 : i32
    %c0_36 = arith.constant 0 : index
    %51 = arith.index_cast %50 : i32 to index
    %c2_37 = arith.constant 2 : index
    %c0_38 = arith.constant 0 : index
    %52 = vector.load %arg2[%c0_36, %51, %c2_37, %c0_38] : memref<1x18x18x4xbf16, #tpu.memory_space<vmem>>, vector<1x8x16x4xbf16>
    %53 = vector.shape_cast %52 : vector<1x8x16x4xbf16> to vector<8x16x4xbf16>
    %54 = vector.shape_cast %53 : vector<8x16x4xbf16> to vector<128x4xbf16>
    %c0_39 = arith.constant 0 : index
    %c32 = arith.constant 32 : index
    %55 = vector.load %arg6[%c0_39, %c32] : memref<128x36xbf16, #tpu.memory_space<vmem>>, vector<128x4xbf16>
    tpu.vector_store %arg6[%c0_39, %c32], %54 {strides = array<i32>} : memref<128x36xbf16, #tpu.memory_space<vmem>>, vector<128x4xbf16>,
    %c0_40 = arith.constant 0 : index
    %c0_41 = arith.constant 0 : index
    %56 = vector.load %arg6[%c0_40, %c0_41] : memref<128x36xbf16, #tpu.memory_space<vmem>>, vector<128x36xbf16>
    %c0_42 = arith.constant 0 : index
    %c0_43 = arith.constant 0 : index
    %57 = vector.load %arg3[%c0_42, %c0_43] : memref<36x4xbf16, #tpu.memory_space<vmem>>, vector<36x4xbf16>
    %cst = arith.constant dense<0.000000e+00> : vector<128x4xf32>
    %58 = tpu.matmul %56, %57, %cst {dimension_numbers = #tpu.dot_dimension_numbers<[1], [0], [0], [1], [0, 0, 1, 1], [], []>} : vector<128x36xbf16>, vector<36x4xbf16>, vector<128x4xf32> -> vector<128x4xf32>
    %59 = vector.shape_cast %58 : vector<128x4xf32> to vector<1x8x16x4xf32>
    %c0_44 = arith.constant 0 : index
    %c0_45 = arith.constant 0 : index
    %c0_46 = arith.constant 0 : index
    %c0_47 = arith.constant 0 : index
    %60 = vector.load %arg4[%c0_44, %c0_45, %c0_46, %c0_47] : memref<1x8x16x4xf32, #tpu.memory_space<vmem>>, vector<1x8x16x4xf32>
    tpu.vector_store %arg4[%c0_44, %c0_45, %c0_46, %c0_47], %59 {strides = array<i32>} : memref<1x8x16x4xf32, #tpu.memory_space<vmem>>, vector<1x8x16x4xf32>,
    %cst_48 = arith.constant dense<0.000000e+00> : vector<4xf32>
    %61 = vector.multi_reduction <add>, %58, %cst_48 [0] : vector<128x4xf32> to vector<4xf32>
    %62 = vector.shape_cast %61 : vector<4xf32> to vector<1x1x1x4xf32>
    %c0_49 = arith.constant 0 : index
    %c0_50 = arith.constant 0 : index
    %c0_51 = arith.constant 0 : index
    %c0_52 = arith.constant 0 : index
    %63 = vector.load %arg5[%c0_49, %c0_50, %c0_51, %c0_52] : memref<1x1x2x4xf32, #tpu.memory_space<vmem>>, vector<1x1x1x4xf32>
    tpu.vector_store %arg5[%c0_49, %c0_50, %c0_51, %c0_52], %62 {strides = array<i32>} : memref<1x1x2x4xf32, #tpu.memory_space<vmem>>, vector<1x1x1x4xf32>,
    %64 = arith.mulf %58, %58 : vector<128x4xf32>
    %cst_53 = arith.constant dense<0.000000e+00> : vector<4xf32>
    %65 = vector.multi_reduction <add>, %64, %cst_53 [0] : vector<128x4xf32> to vector<4xf32>
    %66 = vector.shape_cast %65 : vector<4xf32> to vector<1x1x1x4xf32>
    %c0_54 = arith.constant 0 : index
    %c0_55 = arith.constant 0 : index
    %c1_56 = arith.constant 1 : index
    %c0_57 = arith.constant 0 : index
    %67 = vector.load %arg5[%c0_54, %c0_55, %c1_56, %c0_57] : memref<1x1x2x4xf32, #tpu.memory_space<vmem>>, vector<1x1x1x4xf32>
    tpu.vector_store %arg5[%c0_54, %c0_55, %c1_56, %c0_57], %66 {strides = array<i32>} : memref<1x1x2x4xf32, #tpu.memory_space<vmem>>, vector<1x1x1x4xf32>,
    return
  }
  func.func @transform_0(%arg0: i32, %arg1: i32) -> (i32, i32, i32, i32) {
    %c0_i32 = arith.constant 0 : i32
    %c0_i32_0 = arith.constant 0 : i32
    %c0_i32_1 = arith.constant 0 : i32
    %c0_i32_2 = arith.constant 0 : i32
    return %arg0, %c0_i32, %c0_i32_0, %c0_i32_1 : i32, i32, i32, i32
  }
  func.func @transform_1(%arg0: i32, %arg1: i32) -> (i32, i32) {
    %c0_i32 = arith.constant 0 : i32
    %c0_i32_0 = arith.constant 0 : i32
    %c0_i32_1 = arith.constant 0 : i32
    return %c0_i32, %c0_i32_0 : i32, i32
  }
  func.func @transform_2(%arg0: i32, %arg1: i32) -> (i32, i32, i32, i32) {
    %c0_i32 = arith.constant 0 : i32
    %c0_i32_0 = arith.constant 0 : i32
    %c0_i32_1 = arith.constant 0 : i32
    return %arg0, %arg1, %c0_i32, %c0_i32_0 : i32, i32, i32, i32
  }
  func.func @transform_3(%arg0: i32, %arg1: i32) -> (i32, i32, i32, i32) {
    %c0_i32 = arith.constant 0 : i32
    %c0_i32_0 = arith.constant 0 : i32
    %c0_i32_1 = arith.constant 0 : i32
    return %arg0, %arg1, %c0_i32, %c0_i32_0 : i32, i32, i32, i32
  }
}

module attributes {stable_mosaic.version = 11 : i64} {
  func.func @conv2_kernel(%arg0: i32, %arg1: i32, %arg2: memref<1x16x16x4xf32, #tpu.memory_space<vmem>>, %arg3: memref<1x1x4xf32, #tpu.memory_space<vmem>>, %arg4: memref<1x1x4xf32, #tpu.memory_space<vmem>>, %arg5: memref<36x4xbf16, #tpu.memory_space<vmem>>, %arg6: memref<1x8x16x4xf32, #tpu.memory_space<vmem>>, %arg7: memref<1x1x2x4xf32, #tpu.memory_space<vmem>>, %arg8: memref<10x18x4xbf16, #tpu.memory_space<vmem>>, %arg9: memref<128x36xbf16, #tpu.memory_space<vmem>>) attributes {dimension_semantics = [#tpu.dimension_semantics<parallel>, #tpu.dimension_semantics<parallel>], iteration_bounds = array<i64: 2, 2>, scalar_prefetch = 0 : i64, scratch_operands = 2 : i64, tpu.core_type = #tpu.core_type<tc>, window_params = [{transform_indices = @transform_0, window_bounds = array<i64: 1, 16, 16, 4>}, {pipeline_mode = #tpu.pipeline_mode<synchronous>, transform_indices = @transform_1, window_bounds = array<i64: 1, 1, 4>}, {pipeline_mode = #tpu.pipeline_mode<synchronous>, transform_indices = @transform_2, window_bounds = array<i64: 1, 1, 4>}, {pipeline_mode = #tpu.pipeline_mode<synchronous>, transform_indices = @transform_3, window_bounds = array<i64: 36, 4>}, {transform_indices = @transform_4, window_bounds = array<i64: 1, 8, 16, 4>}, {transform_indices = @transform_5, window_bounds = array<i64: 1, 1, 2, 4>}]} {
    %c8_i32 = arith.constant 8 : i32
    %0 = arith.muli %arg1, %c8_i32 : i32
    %1 = tpu.assume_multiple %0, 8 : i32
    %c0 = arith.constant 0 : index
    %c0_0 = arith.constant 0 : index
    %c0_1 = arith.constant 0 : index
    %2 = vector.load %arg3[%c0, %c0_0, %c0_1] : memref<1x1x4xf32, #tpu.memory_space<vmem>>, vector<1x1x4xf32>
    %c0_2 = arith.constant 0 : index
    %c0_3 = arith.constant 0 : index
    %c0_4 = arith.constant 0 : index
    %3 = vector.load %arg4[%c0_2, %c0_3, %c0_4] : memref<1x1x4xf32, #tpu.memory_space<vmem>>, vector<1x1x4xf32>
    %c0_5 = arith.constant 0 : index
    %4 = arith.index_cast %1 : i32 to index
    %c0_6 = arith.constant 0 : index
    %c0_7 = arith.constant 0 : index
    %5 = vector.load %arg2[%c0_5, %4, %c0_6, %c0_7] : memref<1x16x16x4xf32, #tpu.memory_space<vmem>>, vector<1x8x16x4xf32>
    %6 = vector.shape_cast %5 : vector<1x8x16x4xf32> to vector<8x16x4xf32>
    %7 = vector.broadcast %2 : vector<1x1x4xf32> to vector<8x16x4xf32>
    %8 = arith.mulf %6, %7 : vector<8x16x4xf32>
    %9 = vector.broadcast %3 : vector<1x1x4xf32> to vector<8x16x4xf32>
    %10 = arith.addf %8, %9 : vector<8x16x4xf32>
    %cst = arith.constant 0.000000e+00 : f32
    %11 = vector.broadcast %cst : f32 to vector<8x16x4xf32>
    %12 = arith.maximumf %10, %11 : vector<8x16x4xf32>
    %c1_i32 = arith.constant 1 : i32
    %13 = arith.subi %1, %c1_i32 : i32
    %c0_i32 = arith.constant 0 : i32
    %14 = arith.maxsi %13, %c0_i32 : i32
    %c8_i32_8 = arith.constant 8 : i32
    %15 = arith.addi %1, %c8_i32_8 : i32
    %c15_i32 = arith.constant 15 : i32
    %16 = arith.minsi %15, %c15_i32 : i32
    %c0_i32_9 = arith.constant 0 : i32
    %17 = arith.cmpi sgt, %arg1, %c0_i32_9 : i32
    %cst_10 = arith.constant 1.000000e+00 : f32
    %cst_11 = arith.constant 0.000000e+00 : f32
    %18 = arith.select %17, %cst_10, %cst_11 : f32
    %c1_i32_12 = arith.constant 1 : i32
    %19 = arith.cmpi slt, %arg1, %c1_i32_12 : i32
    %cst_13 = arith.constant 1.000000e+00 : f32
    %cst_14 = arith.constant 0.000000e+00 : f32
    %20 = arith.select %19, %cst_13, %cst_14 : f32
    %c0_15 = arith.constant 0 : index
    %21 = arith.index_cast %14 : i32 to index
    %c0_16 = arith.constant 0 : index
    %c0_17 = arith.constant 0 : index
    %22 = vector.load %arg2[%c0_15, %21, %c0_16, %c0_17] : memref<1x16x16x4xf32, #tpu.memory_space<vmem>>, vector<1x1x16x4xf32>
    %23 = vector.shape_cast %22 : vector<1x1x16x4xf32> to vector<1x16x4xf32>
    %24 = vector.broadcast %2 : vector<1x1x4xf32> to vector<1x16x4xf32>
    %25 = arith.mulf %23, %24 : vector<1x16x4xf32>
    %26 = vector.broadcast %3 : vector<1x1x4xf32> to vector<1x16x4xf32>
    %27 = arith.addf %25, %26 : vector<1x16x4xf32>
    %cst_18 = arith.constant 0.000000e+00 : f32
    %28 = vector.broadcast %cst_18 : f32 to vector<1x16x4xf32>
    %29 = arith.maximumf %27, %28 : vector<1x16x4xf32>
    %30 = vector.broadcast %18 : f32 to vector<1x16x4xf32>
    %31 = arith.mulf %29, %30 : vector<1x16x4xf32>
    %c0_19 = arith.constant 0 : index
    %32 = arith.index_cast %16 : i32 to index
    %c0_20 = arith.constant 0 : index
    %c0_21 = arith.constant 0 : index
    %33 = vector.load %arg2[%c0_19, %32, %c0_20, %c0_21] : memref<1x16x16x4xf32, #tpu.memory_space<vmem>>, vector<1x1x16x4xf32>
    %34 = vector.shape_cast %33 : vector<1x1x16x4xf32> to vector<1x16x4xf32>
    %35 = vector.broadcast %2 : vector<1x1x4xf32> to vector<1x16x4xf32>
    %36 = arith.mulf %34, %35 : vector<1x16x4xf32>
    %37 = vector.broadcast %3 : vector<1x1x4xf32> to vector<1x16x4xf32>
    %38 = arith.addf %36, %37 : vector<1x16x4xf32>
    %cst_22 = arith.constant 0.000000e+00 : f32
    %39 = vector.broadcast %cst_22 : f32 to vector<1x16x4xf32>
    %40 = arith.maximumf %38, %39 : vector<1x16x4xf32>
    %41 = vector.broadcast %20 : f32 to vector<1x16x4xf32>
    %42 = arith.mulf %40, %41 : vector<1x16x4xf32>
    %cst_23 = arith.constant 0.000000e+00 : bf16
    %43 = vector.broadcast %cst_23 : bf16 to vector<10x1x4xbf16>
    %c0_24 = arith.constant 0 : index
    %c0_25 = arith.constant 0 : index
    %c0_26 = arith.constant 0 : index
    %44 = vector.load %arg8[%c0_24, %c0_25, %c0_26] : memref<10x18x4xbf16, #tpu.memory_space<vmem>>, vector<10x1x4xbf16>
    tpu.vector_store %arg8[%c0_24, %c0_25, %c0_26], %43 {strides = array<i32>} : memref<10x18x4xbf16, #tpu.memory_space<vmem>>, vector<10x1x4xbf16>,
    %c0_27 = arith.constant 0 : index
    %c17 = arith.constant 17 : index
    %c0_28 = arith.constant 0 : index
    %45 = vector.load %arg8[%c0_27, %c17, %c0_28] : memref<10x18x4xbf16, #tpu.memory_space<vmem>>, vector<10x1x4xbf16>
    tpu.vector_store %arg8[%c0_27, %c17, %c0_28], %43 {strides = array<i32>} : memref<10x18x4xbf16, #tpu.memory_space<vmem>>, vector<10x1x4xbf16>,
    %46 = arith.truncf %31 : vector<1x16x4xf32> to vector<1x16x4xbf16>
    %c0_29 = arith.constant 0 : index
    %c1 = arith.constant 1 : index
    %c0_30 = arith.constant 0 : index
    %47 = vector.load %arg8[%c0_29, %c1, %c0_30] : memref<10x18x4xbf16, #tpu.memory_space<vmem>>, vector<1x16x4xbf16>
    tpu.vector_store %arg8[%c0_29, %c1, %c0_30], %46 {strides = array<i32>} : memref<10x18x4xbf16, #tpu.memory_space<vmem>>, vector<1x16x4xbf16>,
    %48 = arith.truncf %12 : vector<8x16x4xf32> to vector<8x16x4xbf16>
    %c1_31 = arith.constant 1 : index
    %c1_32 = arith.constant 1 : index
    %c0_33 = arith.constant 0 : index
    %49 = vector.load %arg8[%c1_31, %c1_32, %c0_33] : memref<10x18x4xbf16, #tpu.memory_space<vmem>>, vector<8x16x4xbf16>
    tpu.vector_store %arg8[%c1_31, %c1_32, %c0_33], %48 {strides = array<i32>} : memref<10x18x4xbf16, #tpu.memory_space<vmem>>, vector<8x16x4xbf16>,
    %50 = arith.truncf %42 : vector<1x16x4xf32> to vector<1x16x4xbf16>
    %c9 = arith.constant 9 : index
    %c1_34 = arith.constant 1 : index
    %c0_35 = arith.constant 0 : index
    %51 = vector.load %arg8[%c9, %c1_34, %c0_35] : memref<10x18x4xbf16, #tpu.memory_space<vmem>>, vector<1x16x4xbf16>
    tpu.vector_store %arg8[%c9, %c1_34, %c0_35], %50 {strides = array<i32>} : memref<10x18x4xbf16, #tpu.memory_space<vmem>>, vector<1x16x4xbf16>,
    %c0_36 = arith.constant 0 : index
    %c0_37 = arith.constant 0 : index
    %c0_38 = arith.constant 0 : index
    %52 = vector.load %arg8[%c0_36, %c0_37, %c0_38] : memref<10x18x4xbf16, #tpu.memory_space<vmem>>, vector<8x16x4xbf16>
    %53 = vector.shape_cast %52 : vector<8x16x4xbf16> to vector<128x4xbf16>
    %c0_39 = arith.constant 0 : index
    %c0_40 = arith.constant 0 : index
    %54 = vector.load %arg9[%c0_39, %c0_40] : memref<128x36xbf16, #tpu.memory_space<vmem>>, vector<128x4xbf16>
    tpu.vector_store %arg9[%c0_39, %c0_40], %53 {strides = array<i32>} : memref<128x36xbf16, #tpu.memory_space<vmem>>, vector<128x4xbf16>,
    %c0_41 = arith.constant 0 : index
    %c1_42 = arith.constant 1 : index
    %c0_43 = arith.constant 0 : index
    %55 = vector.load %arg8[%c0_41, %c1_42, %c0_43] : memref<10x18x4xbf16, #tpu.memory_space<vmem>>, vector<8x16x4xbf16>
    %56 = vector.shape_cast %55 : vector<8x16x4xbf16> to vector<128x4xbf16>
    %c0_44 = arith.constant 0 : index
    %c4 = arith.constant 4 : index
    %57 = vector.load %arg9[%c0_44, %c4] : memref<128x36xbf16, #tpu.memory_space<vmem>>, vector<128x4xbf16>
    tpu.vector_store %arg9[%c0_44, %c4], %56 {strides = array<i32>} : memref<128x36xbf16, #tpu.memory_space<vmem>>, vector<128x4xbf16>,
    %c0_45 = arith.constant 0 : index
    %c2 = arith.constant 2 : index
    %c0_46 = arith.constant 0 : index
    %58 = vector.load %arg8[%c0_45, %c2, %c0_46] : memref<10x18x4xbf16, #tpu.memory_space<vmem>>, vector<8x16x4xbf16>
    %59 = vector.shape_cast %58 : vector<8x16x4xbf16> to vector<128x4xbf16>
    %c0_47 = arith.constant 0 : index
    %c8 = arith.constant 8 : index
    %60 = vector.load %arg9[%c0_47, %c8] : memref<128x36xbf16, #tpu.memory_space<vmem>>, vector<128x4xbf16>
    tpu.vector_store %arg9[%c0_47, %c8], %59 {strides = array<i32>} : memref<128x36xbf16, #tpu.memory_space<vmem>>, vector<128x4xbf16>,
    %c1_48 = arith.constant 1 : index
    %c0_49 = arith.constant 0 : index
    %c0_50 = arith.constant 0 : index
    %61 = vector.load %arg8[%c1_48, %c0_49, %c0_50] : memref<10x18x4xbf16, #tpu.memory_space<vmem>>, vector<8x16x4xbf16>
    %62 = vector.shape_cast %61 : vector<8x16x4xbf16> to vector<128x4xbf16>
    %c0_51 = arith.constant 0 : index
    %c12 = arith.constant 12 : index
    %63 = vector.load %arg9[%c0_51, %c12] : memref<128x36xbf16, #tpu.memory_space<vmem>>, vector<128x4xbf16>
    tpu.vector_store %arg9[%c0_51, %c12], %62 {strides = array<i32>} : memref<128x36xbf16, #tpu.memory_space<vmem>>, vector<128x4xbf16>,
    %c1_52 = arith.constant 1 : index
    %c1_53 = arith.constant 1 : index
    %c0_54 = arith.constant 0 : index
    %64 = vector.load %arg8[%c1_52, %c1_53, %c0_54] : memref<10x18x4xbf16, #tpu.memory_space<vmem>>, vector<8x16x4xbf16>
    %65 = vector.shape_cast %64 : vector<8x16x4xbf16> to vector<128x4xbf16>
    %c0_55 = arith.constant 0 : index
    %c16 = arith.constant 16 : index
    %66 = vector.load %arg9[%c0_55, %c16] : memref<128x36xbf16, #tpu.memory_space<vmem>>, vector<128x4xbf16>
    tpu.vector_store %arg9[%c0_55, %c16], %65 {strides = array<i32>} : memref<128x36xbf16, #tpu.memory_space<vmem>>, vector<128x4xbf16>,
    %c1_56 = arith.constant 1 : index
    %c2_57 = arith.constant 2 : index
    %c0_58 = arith.constant 0 : index
    %67 = vector.load %arg8[%c1_56, %c2_57, %c0_58] : memref<10x18x4xbf16, #tpu.memory_space<vmem>>, vector<8x16x4xbf16>
    %68 = vector.shape_cast %67 : vector<8x16x4xbf16> to vector<128x4xbf16>
    %c0_59 = arith.constant 0 : index
    %c20 = arith.constant 20 : index
    %69 = vector.load %arg9[%c0_59, %c20] : memref<128x36xbf16, #tpu.memory_space<vmem>>, vector<128x4xbf16>
    tpu.vector_store %arg9[%c0_59, %c20], %68 {strides = array<i32>} : memref<128x36xbf16, #tpu.memory_space<vmem>>, vector<128x4xbf16>,
    %c2_60 = arith.constant 2 : index
    %c0_61 = arith.constant 0 : index
    %c0_62 = arith.constant 0 : index
    %70 = vector.load %arg8[%c2_60, %c0_61, %c0_62] : memref<10x18x4xbf16, #tpu.memory_space<vmem>>, vector<8x16x4xbf16>
    %71 = vector.shape_cast %70 : vector<8x16x4xbf16> to vector<128x4xbf16>
    %c0_63 = arith.constant 0 : index
    %c24 = arith.constant 24 : index
    %72 = vector.load %arg9[%c0_63, %c24] : memref<128x36xbf16, #tpu.memory_space<vmem>>, vector<128x4xbf16>
    tpu.vector_store %arg9[%c0_63, %c24], %71 {strides = array<i32>} : memref<128x36xbf16, #tpu.memory_space<vmem>>, vector<128x4xbf16>,
    %c2_64 = arith.constant 2 : index
    %c1_65 = arith.constant 1 : index
    %c0_66 = arith.constant 0 : index
    %73 = vector.load %arg8[%c2_64, %c1_65, %c0_66] : memref<10x18x4xbf16, #tpu.memory_space<vmem>>, vector<8x16x4xbf16>
    %74 = vector.shape_cast %73 : vector<8x16x4xbf16> to vector<128x4xbf16>
    %c0_67 = arith.constant 0 : index
    %c28 = arith.constant 28 : index
    %75 = vector.load %arg9[%c0_67, %c28] : memref<128x36xbf16, #tpu.memory_space<vmem>>, vector<128x4xbf16>
    tpu.vector_store %arg9[%c0_67, %c28], %74 {strides = array<i32>} : memref<128x36xbf16, #tpu.memory_space<vmem>>, vector<128x4xbf16>,
    %c2_68 = arith.constant 2 : index
    %c2_69 = arith.constant 2 : index
    %c0_70 = arith.constant 0 : index
    %76 = vector.load %arg8[%c2_68, %c2_69, %c0_70] : memref<10x18x4xbf16, #tpu.memory_space<vmem>>, vector<8x16x4xbf16>
    %77 = vector.shape_cast %76 : vector<8x16x4xbf16> to vector<128x4xbf16>
    %c0_71 = arith.constant 0 : index
    %c32 = arith.constant 32 : index
    %78 = vector.load %arg9[%c0_71, %c32] : memref<128x36xbf16, #tpu.memory_space<vmem>>, vector<128x4xbf16>
    tpu.vector_store %arg9[%c0_71, %c32], %77 {strides = array<i32>} : memref<128x36xbf16, #tpu.memory_space<vmem>>, vector<128x4xbf16>,
    %c0_72 = arith.constant 0 : index
    %c0_73 = arith.constant 0 : index
    %79 = vector.load %arg9[%c0_72, %c0_73] : memref<128x36xbf16, #tpu.memory_space<vmem>>, vector<128x36xbf16>
    %c0_74 = arith.constant 0 : index
    %c0_75 = arith.constant 0 : index
    %80 = vector.load %arg5[%c0_74, %c0_75] : memref<36x4xbf16, #tpu.memory_space<vmem>>, vector<36x4xbf16>
    %cst_76 = arith.constant dense<0.000000e+00> : vector<128x4xf32>
    %81 = tpu.matmul %79, %80, %cst_76 {dimension_numbers = #tpu.dot_dimension_numbers<[1], [0], [0], [1], [0, 0, 1, 1], [], []>} : vector<128x36xbf16>, vector<36x4xbf16>, vector<128x4xf32> -> vector<128x4xf32>
    %82 = vector.shape_cast %81 : vector<128x4xf32> to vector<1x8x16x4xf32>
    %c0_77 = arith.constant 0 : index
    %c0_78 = arith.constant 0 : index
    %c0_79 = arith.constant 0 : index
    %c0_80 = arith.constant 0 : index
    %83 = vector.load %arg6[%c0_77, %c0_78, %c0_79, %c0_80] : memref<1x8x16x4xf32, #tpu.memory_space<vmem>>, vector<1x8x16x4xf32>
    tpu.vector_store %arg6[%c0_77, %c0_78, %c0_79, %c0_80], %82 {strides = array<i32>} : memref<1x8x16x4xf32, #tpu.memory_space<vmem>>, vector<1x8x16x4xf32>,
    %cst_81 = arith.constant dense<0.000000e+00> : vector<4xf32>
    %84 = vector.multi_reduction <add>, %81, %cst_81 [0] : vector<128x4xf32> to vector<4xf32>
    %85 = vector.shape_cast %84 : vector<4xf32> to vector<1x1x1x4xf32>
    %c0_82 = arith.constant 0 : index
    %c0_83 = arith.constant 0 : index
    %c0_84 = arith.constant 0 : index
    %c0_85 = arith.constant 0 : index
    %86 = vector.load %arg7[%c0_82, %c0_83, %c0_84, %c0_85] : memref<1x1x2x4xf32, #tpu.memory_space<vmem>>, vector<1x1x1x4xf32>
    tpu.vector_store %arg7[%c0_82, %c0_83, %c0_84, %c0_85], %85 {strides = array<i32>} : memref<1x1x2x4xf32, #tpu.memory_space<vmem>>, vector<1x1x1x4xf32>,
    %87 = arith.mulf %81, %81 : vector<128x4xf32>
    %cst_86 = arith.constant dense<0.000000e+00> : vector<4xf32>
    %88 = vector.multi_reduction <add>, %87, %cst_86 [0] : vector<128x4xf32> to vector<4xf32>
    %89 = vector.shape_cast %88 : vector<4xf32> to vector<1x1x1x4xf32>
    %c0_87 = arith.constant 0 : index
    %c0_88 = arith.constant 0 : index
    %c1_89 = arith.constant 1 : index
    %c0_90 = arith.constant 0 : index
    %90 = vector.load %arg7[%c0_87, %c0_88, %c1_89, %c0_90] : memref<1x1x2x4xf32, #tpu.memory_space<vmem>>, vector<1x1x1x4xf32>
    tpu.vector_store %arg7[%c0_87, %c0_88, %c1_89, %c0_90], %89 {strides = array<i32>} : memref<1x1x2x4xf32, #tpu.memory_space<vmem>>, vector<1x1x1x4xf32>,
    return
  }
  func.func @transform_0(%arg0: i32, %arg1: i32) -> (i32, i32, i32, i32) {
    %c0_i32 = arith.constant 0 : i32
    %c0_i32_0 = arith.constant 0 : i32
    %c0_i32_1 = arith.constant 0 : i32
    %c0_i32_2 = arith.constant 0 : i32
    return %arg0, %c0_i32, %c0_i32_0, %c0_i32_1 : i32, i32, i32, i32
  }
  func.func @transform_1(%arg0: i32, %arg1: i32) -> (i32, i32, i32) {
    %c0_i32 = arith.constant 0 : i32
    %c0_i32_0 = arith.constant 0 : i32
    %c0_i32_1 = arith.constant 0 : i32
    %c0_i32_2 = arith.constant 0 : i32
    return %c0_i32, %c0_i32_0, %c0_i32_1 : i32, i32, i32
  }
  func.func @transform_2(%arg0: i32, %arg1: i32) -> (i32, i32, i32) {
    %c0_i32 = arith.constant 0 : i32
    %c0_i32_0 = arith.constant 0 : i32
    %c0_i32_1 = arith.constant 0 : i32
    %c0_i32_2 = arith.constant 0 : i32
    return %c0_i32, %c0_i32_0, %c0_i32_1 : i32, i32, i32
  }
  func.func @transform_3(%arg0: i32, %arg1: i32) -> (i32, i32) {
    %c0_i32 = arith.constant 0 : i32
    %c0_i32_0 = arith.constant 0 : i32
    %c0_i32_1 = arith.constant 0 : i32
    return %c0_i32, %c0_i32_0 : i32, i32
  }
  func.func @transform_4(%arg0: i32, %arg1: i32) -> (i32, i32, i32, i32) {
    %c0_i32 = arith.constant 0 : i32
    %c0_i32_0 = arith.constant 0 : i32
    %c0_i32_1 = arith.constant 0 : i32
    return %arg0, %arg1, %c0_i32, %c0_i32_0 : i32, i32, i32, i32
  }
  func.func @transform_5(%arg0: i32, %arg1: i32) -> (i32, i32, i32, i32) {
    %c0_i32 = arith.constant 0 : i32
    %c0_i32_0 = arith.constant 0 : i32
    %c0_i32_1 = arith.constant 0 : i32
    return %arg0, %arg1, %c0_i32, %c0_i32_0 : i32, i32, i32, i32
  }
}

module attributes {stable_mosaic.version = 11 : i64} {
  func.func @epilogue_kernel(%arg0: i32, %arg1: i32, %arg2: memref<1x8x16x4xf32, #tpu.memory_space<vmem>>, %arg3: memref<1x8x16x4xf32, #tpu.memory_space<vmem>>, %arg4: memref<1x1x4xf32, #tpu.memory_space<vmem>>, %arg5: memref<1x1x4xf32, #tpu.memory_space<vmem>>, %arg6: memref<1x8x16x4xf32, #tpu.memory_space<vmem>>) attributes {dimension_semantics = [#tpu.dimension_semantics<parallel>, #tpu.dimension_semantics<parallel>], iteration_bounds = array<i64: 2, 2>, scalar_prefetch = 0 : i64, scratch_operands = 0 : i64, tpu.core_type = #tpu.core_type<tc>, window_params = [{transform_indices = @transform_0, window_bounds = array<i64: 1, 8, 16, 4>}, {transform_indices = @transform_1, window_bounds = array<i64: 1, 8, 16, 4>}, {pipeline_mode = #tpu.pipeline_mode<synchronous>, transform_indices = @transform_2, window_bounds = array<i64: 1, 1, 4>}, {pipeline_mode = #tpu.pipeline_mode<synchronous>, transform_indices = @transform_3, window_bounds = array<i64: 1, 1, 4>}, {transform_indices = @transform_4, window_bounds = array<i64: 1, 8, 16, 4>}]} {
    %c0 = arith.constant 0 : index
    %c0_0 = arith.constant 0 : index
    %c0_1 = arith.constant 0 : index
    %c0_2 = arith.constant 0 : index
    %0 = vector.load %arg2[%c0, %c0_0, %c0_1, %c0_2] : memref<1x8x16x4xf32, #tpu.memory_space<vmem>>, vector<1x8x16x4xf32>
    %c0_3 = arith.constant 0 : index
    %c0_4 = arith.constant 0 : index
    %c0_5 = arith.constant 0 : index
    %1 = vector.load %arg4[%c0_3, %c0_4, %c0_5] : memref<1x1x4xf32, #tpu.memory_space<vmem>>, vector<1x1x4xf32>
    %2 = vector.shape_cast %1 : vector<1x1x4xf32> to vector<1x1x1x4xf32>
    %3 = vector.broadcast %2 : vector<1x1x1x4xf32> to vector<1x8x16x4xf32>
    %4 = arith.mulf %0, %3 : vector<1x8x16x4xf32>
    %c0_6 = arith.constant 0 : index
    %c0_7 = arith.constant 0 : index
    %c0_8 = arith.constant 0 : index
    %5 = vector.load %arg5[%c0_6, %c0_7, %c0_8] : memref<1x1x4xf32, #tpu.memory_space<vmem>>, vector<1x1x4xf32>
    %6 = vector.shape_cast %5 : vector<1x1x4xf32> to vector<1x1x1x4xf32>
    %7 = vector.broadcast %6 : vector<1x1x1x4xf32> to vector<1x8x16x4xf32>
    %8 = arith.addf %4, %7 : vector<1x8x16x4xf32>
    %c0_9 = arith.constant 0 : index
    %c0_10 = arith.constant 0 : index
    %c0_11 = arith.constant 0 : index
    %c0_12 = arith.constant 0 : index
    %9 = vector.load %arg3[%c0_9, %c0_10, %c0_11, %c0_12] : memref<1x8x16x4xf32, #tpu.memory_space<vmem>>, vector<1x8x16x4xf32>
    %10 = arith.addf %8, %9 : vector<1x8x16x4xf32>
    %cst = arith.constant 0.000000e+00 : f32
    %11 = vector.broadcast %cst : f32 to vector<1x8x16x4xf32>
    %12 = arith.maximumf %10, %11 : vector<1x8x16x4xf32>
    %c0_13 = arith.constant 0 : index
    %c0_14 = arith.constant 0 : index
    %c0_15 = arith.constant 0 : index
    %c0_16 = arith.constant 0 : index
    %13 = vector.load %arg6[%c0_13, %c0_14, %c0_15, %c0_16] : memref<1x8x16x4xf32, #tpu.memory_space<vmem>>, vector<1x8x16x4xf32>
    tpu.vector_store %arg6[%c0_13, %c0_14, %c0_15, %c0_16], %12 {strides = array<i32>} : memref<1x8x16x4xf32, #tpu.memory_space<vmem>>, vector<1x8x16x4xf32>,
    return
  }
  func.func @transform_0(%arg0: i32, %arg1: i32) -> (i32, i32, i32, i32) {
    %c0_i32 = arith.constant 0 : i32
    %c0_i32_0 = arith.constant 0 : i32
    %c0_i32_1 = arith.constant 0 : i32
    return %arg0, %arg1, %c0_i32, %c0_i32_0 : i32, i32, i32, i32
  }
  func.func @transform_1(%arg0: i32, %arg1: i32) -> (i32, i32, i32, i32) {
    %c0_i32 = arith.constant 0 : i32
    %c0_i32_0 = arith.constant 0 : i32
    %c0_i32_1 = arith.constant 0 : i32
    return %arg0, %arg1, %c0_i32, %c0_i32_0 : i32, i32, i32, i32
  }
  func.func @transform_2(%arg0: i32, %arg1: i32) -> (i32, i32, i32) {
    %c0_i32 = arith.constant 0 : i32
    %c0_i32_0 = arith.constant 0 : i32
    %c0_i32_1 = arith.constant 0 : i32
    %c0_i32_2 = arith.constant 0 : i32
    return %c0_i32, %c0_i32_0, %c0_i32_1 : i32, i32, i32
  }
  func.func @transform_3(%arg0: i32, %arg1: i32) -> (i32, i32, i32) {
    %c0_i32 = arith.constant 0 : i32
    %c0_i32_0 = arith.constant 0 : i32
    %c0_i32_1 = arith.constant 0 : i32
    %c0_i32_2 = arith.constant 0 : i32
    return %c0_i32, %c0_i32_0, %c0_i32_1 : i32, i32, i32
  }
  func.func @transform_4(%arg0: i32, %arg1: i32) -> (i32, i32, i32, i32) {
    %c0_i32 = arith.constant 0 : i32
    %c0_i32_0 = arith.constant 0 : i32
    %c0_i32_1 = arith.constant 0 : i32
    return %arg0, %arg1, %c0_i32, %c0_i32_0 : i32, i32, i32, i32
  }
}

</mosaic_0001>

<llo_original>
// kernel: basic_block.5
$region0: #{basic_block.5}
  #allocation0 [shape = 'u32[]', space=smem, size = 0x4, offset = 0x4, fixed_abs, tag = 'smem constant byte address 0x4 - core index']
  #allocation1 [shape = 'u32[144,128]{1,0:T(1,128)}', space=vmem, size = 0x12000, scoped, tag = 'internal scratch']
  %s0 = inlined_call_operand.vmem [shape: f32[2,16,16,4], index: 0, kind: input, shape index: {}, may-alias: {0,4}]
  %s1 = inlined_call_operand.vmem [shape: f32[2,16,16,4], index: 1, kind: input, shape index: {}]
  %s2 = inlined_call_operand.vmem [shape: f32[1,1,4], index: 2, kind: input, shape index: {}]
  %s3 = inlined_call_operand.vmem [shape: f32[1,1,4], index: 3, kind: input, shape index: {}]
  %s4 = inlined_call_operand.vmem [shape: f32[2,16,16,4], index: 4, kind: output, shape index: {}, may-alias: {0,4}]
  %s5 = sld [smem:[#allocation0]]
  $region49: #{basic_block.5} parent=0
    _
  %s7 = ssub.s32 1, %s5
  %s8 = scalar_select 0, %s7, %s5
  loop: start=0, step=1, limit=6
  $region2: #{basic_block.5} parent=0 // loop_pre_header
    _
  $region3: #{basic_block.5} parent=0 // loop_header
    %s10 = sphi 0, %s14
    %p11 = scmp.ge.s32.totalorder %s10, 6
    %s17 = sphi 0, %s29
    %s18 = sphi 0, %s25
    %s19 = sphi 0, %s17
    %s20 = sphi 0, %s18
    %s21 = sphi 0, %s19
    %s22 = sphi 0, %s20
    %s34 = sphi 0, %s36
    %s37 = sphi 0, %s34
    %s38 = sphi 0, %s37
    %s54 = sphi 0, %s38
    %s62 = sphi 0, %s64
    %s65 = sphi 0, %s62
    %s66 = sphi 0, %s65
    %s82 = sphi 0, %s66
    %s86 = sphi 0, %s86
    %s88 = sphi 0, %s86
    %s89 = sphi 0, %s88
    %s103 = sphi 0, %s89
    %s107 = sphi 0, %s107
    %s109 = sphi 0, %s107
    %s110 = sphi 0, %s109
    %s124 = sphi 0, %s110
    %s132 = sphi 0, %s134
    %s135 = sphi 0, %s132
    %s136 = sphi 0, %s135
    %s152 = sphi 0, %s136
  $region4: #{basic_block.5} parent=0 // loop_header_branch
    %13 = sbr.rel (%p11) target = $region8
  $region5: #{basic_block.5} parent=0 // loop_body
    %s15 = ssub.s32 %s10, 1
    %s16 = ssub.s32 %s10, 2
    %s23 = sadd.s32 1, %s18
    %p24 = scmp.ge.s32.totalorder %s23, 2
    %s25 = scalar_select %p24, 0, %s23
    %s26 = sadd.s32 1, %s17
    %s27 = scalar_select %p24, %s26, %s17
    %p28 = scmp.ge.s32.totalorder %s27, 2
    %s29 = scalar_select %p28, 0, %s27
    %s30 = ssub.s32 %s17, %s29
    %s31 = ssub.s32 %s18, %s25
    %s32 = sor.u32 %s30, %s31
    %p33 = scmp.eq.s32.totalorder %s32, 0
    %s35 = sadd.s32 %s34, 1
    %s36 = scalar_select %p33, %s34, %s35
    %p39 = pneg %p33
    %p40 = scmp.eq.s32.totalorder %s10, 3
    %p41 = por %p39, %p40
    %p42 = scmp.ne.s32.totalorder %s34, %s37
    %p43 = scmp.eq.s32.totalorder %s10, 0
    %p44 = por %p42, %p43
    %p45 = scmp.ne.s32.totalorder %s34, %s37
    %p46 = scmp.eq.s32.totalorder %s15, 3
    %p47 = por %p45, %p46
    %p48 = scmp.ne.s32.totalorder %s37, %s38
    %p49 = scmp.eq.s32.totalorder %s15, 0
    %p50 = por %p48, %p49
    %p51 = scmp.ne.s32.totalorder %s37, %s38
    %p52 = scmp.eq.s32.totalorder %s16, 3
    %p53 = por %p51, %p52
    %p55 = scmp.ne.s32.totalorder %s38, %s54
    %p56 = scmp.eq.s32.totalorder %s16, 0
    %p57 = por %p55, %p56
    %s58 = ssub.s32 %s17, %s29
    %s59 = ssub.s32 %s18, %s25
    %s60 = sor.u32 %s58, %s59
    %p61 = scmp.eq.s32.totalorder %s60, 0
    %s63 = sadd.s32 %s62, 1
    %s64 = scalar_select %p61, %s62, %s63
    %p67 = pneg %p61
    %p68 = scmp.eq.s32.totalorder %s10, 3
    %p69 = por %p67, %p68
    %p70 = scmp.ne.s32.totalorder %s62, %s65
    %p71 = scmp.eq.s32.totalorder %s10, 0
    %p72 = por %p70, %p71
    %p73 = scmp.ne.s32.totalorder %s62, %s65
    %p74 = scmp.eq.s32.totalorder %s15, 3
    %p75 = por %p73, %p74
    %p76 = scmp.ne.s32.totalorder %s65, %s66
    %p77 = scmp.eq.s32.totalorder %s15, 0
    %p78 = por %p76, %p77
    %p79 = scmp.ne.s32.totalorder %s65, %s66
    %p80 = scmp.eq.s32.totalorder %s16, 3
    %p81 = por %p79, %p80
    %p83 = scmp.ne.s32.totalorder %s66, %s82
    %p84 = scmp.eq.s32.totalorder %s16, 0
    %p85 = por %p83, %p84
    %s87 = sadd.s32 %s86, 1
    %p90 = scmp.eq.s32.totalorder %s10, 3
    %p91 = scmp.ne.s32.totalorder %s86, %s88
    %p92 = scmp.eq.s32.totalorder %s10, 0
    %p93 = por %p91, %p92
    %p94 = scmp.ne.s32.totalorder %s86, %s88
    %p95 = scmp.eq.s32.totalorder %s15, 3
    %p96 = por %p94, %p95
    %p97 = scmp.ne.s32.totalorder %s88, %s89
    %p98 = scmp.eq.s32.totalorder %s15, 0
    %p99 = por %p97, %p98
    %p100 = scmp.ne.s32.totalorder %s88, %s89
    %p101 = scmp.eq.s32.totalorder %s16, 3
    %p102 = por %p100, %p101
    %p104 = scmp.ne.s32.totalorder %s89, %s103
    %p105 = scmp.eq.s32.totalorder %s16, 0
    %p106 = por %p104, %p105
    %s108 = sadd.s32 %s107, 1
    %p111 = scmp.eq.s32.totalorder %s10, 3
    %p112 = scmp.ne.s32.totalorder %s107, %s109
    %p113 = scmp.eq.s32.totalorder %s10, 0
    %p114 = por %p112, %p113
    %p115 = scmp.ne.s32.totalorder %s107, %s109
    %p116 = scmp.eq.s32.totalorder %s15, 3
    %p117 = por %p115, %p116
    %p118 = scmp.ne.s32.totalorder %s109, %s110
    %p119 = scmp.eq.s32.totalorder %s15, 0
    %p120 = por %p118, %p119
    %p121 = scmp.ne.s32.totalorder %s109, %s110
    %p122 = scmp.eq.s32.totalorder %s16, 3
    %p123 = por %p121, %p122
    %p125 = scmp.ne.s32.totalorder %s110, %s124
    %p126 = scmp.eq.s32.totalorder %s16, 0
    %p127 = por %p125, %p126
    %s128 = ssub.s32 %s17, %s29
    %s129 = ssub.s32 %s18, %s25
    %s130 = sor.u32 %s128, %s129
    %p131 = scmp.eq.s32.totalorder %s130, 0
    %s133 = sadd.s32 %s132, 1
    %s134 = scalar_select %p131, %s132, %s133
    %p137 = pneg %p131
    %p138 = scmp.eq.s32.totalorder %s10, 3
    %p139 = por %p137, %p138
    %p140 = scmp.ne.s32.totalorder %s132, %s135
    %p141 = scmp.eq.s32.totalorder %s10, 0
    %p142 = por %p140, %p141
    %p143 = scmp.ne.s32.totalorder %s132, %s135
    %p144 = scmp.eq.s32.totalorder %s15, 3
    %p145 = por %p143, %p144
    %p146 = scmp.ne.s32.totalorder %s135, %s136
    %p147 = scmp.eq.s32.totalorder %s15, 0
    %p148 = por %p146, %p147
    %p149 = scmp.ne.s32.totalorder %s135, %s136
    %p150 = scmp.eq.s32.totalorder %s16, 3
    %p151 = por %p149, %p150
    %p153 = scmp.ne.s32.totalorder %s136, %s152
    %p154 = scmp.eq.s32.totalorder %s16, 0
    %p155 = por %p153, %p154
    %p156 = scmp.le.s32.totalorder 1, %s10
    %p157 = scmp.lt.s32.totalorder %s10, 5
    %p158 = pnand %p156, %p157
    %p159 = pneg %p158
    // Predicated region
    $region9: #{basic_block.5} parent=5 // pred_check
      _
    $region10: #{basic_block.5} parent=5 // pred_check_branch
      %161 = sbr.rel (%p158) target = $region12
    $region11: #{basic_block.5} parent=5 // pred_region
      %s162 = ssub.s32 %s10, 1
      // Predicated region
      $region13: #{basic_block.5} parent=11 // pred_check
        %p163 = pneg %p99
      $region14: #{basic_block.5} parent=11 // pred_check_branch
        %165 = sbr.rel (%p163) target = $region16
      $region15: #{basic_block.5} parent=11 // pred_region
        _
      $region16: #{basic_block.5} parent=11 // pred_fallthru
        _
      // Predicated region
      $region17: #{basic_block.5} parent=11 // pred_check
        %p166 = pneg %p120
      $region18: #{basic_block.5} parent=11 // pred_check_branch
        %168 = sbr.rel (%p166) target = $region20
      $region19: #{basic_block.5} parent=11 // pred_region
        _
      $region20: #{basic_block.5} parent=11 // pred_fallthru
        _
    $region12: #{basic_block.5} parent=5 // pred_fallthru
      _
    %p169 = scmp.lt.s32.totalorder %s10, 4
    // Predicated region
    $region21: #{basic_block.5} parent=5 // pred_check
      %p170 = pneg %p169
    $region22: #{basic_block.5} parent=5 // pred_check_branch
      %172 = sbr.rel (%p170) target = $region24
    $region23: #{basic_block.5} parent=5 // pred_region
      // Predicated region
      $region25: #{basic_block.5} parent=23 // pred_check
        %p173 = pneg %p44
      $region26: #{basic_block.5} parent=23 // pred_check_branch
        %175 = sbr.rel (%p173) target = $region28
      $region27: #{basic_block.5} parent=23 // pred_region
        %s176 = smul.u32 8, %s18
        %p177 = scmp.lt.s32.totalorder %s17, 1
        %s178 = scalar_select %p177, %s17, 1
        %p179 = scmp.lt.s32.totalorder %s176, 15
        %s180 = scalar_select %p179, %s176, 15
        %s181 = smul.addr %s180, 2
        %s182 = smul.addr %s178, 32
        %s183 = sadd.s32 %s181, %s182
        %s184 = smul.addr %s183, 8
        %s185 = scalar_lea.vmem %s0, %s184
        %s186 = smul.u32 8, %s18
      $region28: #{basic_block.5} parent=23 // pred_fallthru
        _
      // Predicated region
      $region29: #{basic_block.5} parent=23 // pred_check
        %p187 = pneg %p72
      $region30: #{basic_block.5} parent=23 // pred_check_branch
        %189 = sbr.rel (%p187) target = $region32
      $region31: #{basic_block.5} parent=23 // pred_region
        %s190 = smul.u32 8, %s18
        %p191 = scmp.lt.s32.totalorder %s17, 1
        %s192 = scalar_select %p191, %s17, 1
        %p193 = scmp.lt.s32.totalorder %s190, 15
        %s194 = scalar_select %p193, %s190, 15
        %s195 = smul.addr %s194, 2
        %s196 = smul.addr %s192, 32
        %s197 = sadd.s32 %s195, %s196
        %s198 = smul.addr %s197, 8
        %s199 = scalar_lea.vmem %s1, %s198
        %s200 = smul.u32 8, %s18
      $region32: #{basic_block.5} parent=23 // pred_fallthru
        _
    $region24: #{basic_block.5} parent=5 // pred_fallthru
      _
    %p201 = scmp.le.s32.totalorder 1, %s10
    %p202 = scmp.lt.s32.totalorder %s10, 5
    %p203 = pnand %p201, %p202
    %p204 = pneg %p203
    // Predicated region
    $region33: #{basic_block.5} parent=5 // pred_check
      _
    $region34: #{basic_block.5} parent=5 // pred_check_branch
      %206 = sbr.rel (%p203) target = $region36
    $region35: #{basic_block.5} parent=5 // pred_region
      %s207 = ssub.s32 %s10, 1
      %s208 = smul.u32 8, %s20
      %p209 = scmp.lt.s32.totalorder %s19, 1
      %s210 = scalar_select %p209, %s19, 1
      %p211 = scmp.lt.s32.totalorder %s208, 15
      %s212 = scalar_select %p211, %s208, 15
      %s213 = smul.addr %s212, 2
      %s214 = smul.addr %s210, 32
      %s215 = sadd.s32 %s213, %s214
      %s216 = smul.addr %s215, 8
      %s217 = scalar_lea.vmem %s0, %s216
      %p218 = pneg %p50
      %p219 = pneg %p47
      %s220 = smul.u32 8, %s20
      %p221 = scmp.lt.s32.totalorder %s19, 1
      %s222 = scalar_select %p221, %s19, 1
      %p223 = scmp.lt.s32.totalorder %s220, 15
      %s224 = scalar_select %p223, %s220, 15
      %s225 = smul.addr %s224, 2
      %s226 = smul.addr %s222, 32
      %s227 = sadd.s32 %s225, %s226
      %s228 = smul.addr %s227, 8
      %s229 = scalar_lea.vmem %s1, %s228
      %p230 = pneg %p78
      %p231 = pneg %p75
      %p232 = pneg %p99
      %p233 = pneg %p96
      %p234 = pneg %p120
      %p235 = pneg %p117
      %p236 = pneg %p148
      %p237 = pneg %p145
      %s238 = smul.u32 8, %s20
      %p239 = scmp.lt.s32.totalorder %s19, 1
      %s240 = scalar_select %p239, %s19, 1
      %p241 = scmp.lt.s32.totalorder %s238, 15
      %s242 = scalar_select %p241, %s238, 15
      %s243 = smul.addr %s242, 2
      %s244 = smul.addr %s240, 32
      %s245 = sadd.s32 %s243, %s244
      %s246 = smul.addr %s245, 8
      %s247 = scalar_lea.vmem %s4, %s246
      %s248 = smul.u32 8, %s20
      %p249 = scmp.lt.s32.totalorder %s19, 1
      %s250 = scalar_select %p249, %s19, 1
      %p251 = scmp.lt.s32.totalorder %s248, 15
      %s252 = scalar_select %p251, %s248, 15
      %s253 = smul.addr %s252, 2
      %s254 = smul.addr %s250, 32
      %s255 = sadd.s32 %s253, %s254
      %s256 = smul.addr %s255, 8
      %s257 = scalar_lea.vmem %s0, %s256
      %s258 = smul.u32 8, %s20
      %s259 = smul.u32 8, %s20
      %p260 = scmp.lt.s32.totalorder %s19, 1
      %s261 = scalar_select %p260, %s19, 1
      %p262 = scmp.lt.s32.totalorder %s259, 15
      %s263 = scalar_select %p262, %s259, 15
      %s264 = smul.addr %s263, 2
      %s265 = smul.addr %s261, 32
      %s266 = sadd.s32 %s264, %s265
      %s267 = smul.addr %s266, 8
      %s268 = scalar_lea.vmem %s1, %s267
      %s269 = smul.u32 8, %s20
      %s270 = smul.u32 8, %s20
      %p271 = scmp.lt.s32.totalorder %s19, 1
      %s272 = scalar_select %p271, %s19, 1
      %p273 = scmp.lt.s32.totalorder %s270, 15
      %s274 = scalar_select %p273, %s270, 15
      %s275 = smul.addr %s274, 2
      %s276 = smul.addr %s272, 32
      %s277 = sadd.s32 %s275, %s276
      %s278 = smul.addr %s277, 8
      %s279 = scalar_lea.vmem %s4, %s278
      %s280 = smul.u32 8, %s20
      %v281 = vld [vmem:[%s257] sm:$0xff]
      %v282 = vld [vmem:[%s257 + $0x8] sm:$0xff]
      %v283 = vld [vmem:[%s257 + $0x10] sm:$0xff]
      %v284 = vld [vmem:[%s257 + $0x18] sm:$0xff]
      %v285 = vld [vmem:[%s257 + $0x20] sm:$0xff]
      %v286 = vld [vmem:[%s257 + $0x28] sm:$0xff]
      %v287 = vld [vmem:[%s257 + $0x30] sm:$0xff]
      %v288 = vld [vmem:[%s257 + $0x38] sm:$0xff]
      %v289 = vld [vmem:[%s257 + $0x40] sm:$0xff]
      %v290 = vld [vmem:[%s257 + $0x48] sm:$0xff]
      %v291 = vld [vmem:[%s257 + $0x50] sm:$0xff]
      %v292 = vld [vmem:[%s257 + $0x58] sm:$0xff]
      %v293 = vld [vmem:[%s257 + $0x60] sm:$0xff]
      %v294 = vld [vmem:[%s257 + $0x68] sm:$0xff]
      %v295 = vld [vmem:[%s257 + $0x70] sm:$0xff]
      %v296 = vld [vmem:[%s257 + $0x78] sm:$0xff]
      %v297 = vld [vmem:[%s2] sm:$0x1]
      %v299 = vlaneseq
      %v300 = vshrl.u32 %v299, 7
      %v301 = vsub.s32 0, %v300
      %v302 = vrot.slane %v297, %v301
      %v304 = vmul.f32 %v281, %v302
      %v305 = vmul.f32 %v282, %v302
      %v306 = vmul.f32 %v283, %v302
      %v307 = vmul.f32 %v284, %v302
      %v308 = vmul.f32 %v285, %v302
      %v309 = vmul.f32 %v286, %v302
      %v310 = vmul.f32 %v287, %v302
      %v311 = vmul.f32 %v288, %v302
      %v312 = vmul.f32 %v289, %v302
      %v313 = vmul.f32 %v290, %v302
      %v314 = vmul.f32 %v291, %v302
      %v315 = vmul.f32 %v292, %v302
      %v316 = vmul.f32 %v293, %v302
      %v317 = vmul.f32 %v294, %v302
      %v318 = vmul.f32 %v295, %v302
      %v319 = vmul.f32 %v296, %v302
      %v320 = vld [vmem:[%s3] sm:$0x1]
      %v322 = vlaneseq
      %v323 = vshrl.u32 %v322, 7
      %v324 = vsub.s32 0, %v323
      %v325 = vrot.slane %v320, %v324
      %v327 = vadd.f32 %v304, %v325
      %v328 = vadd.f32 %v305, %v325
      %v329 = vadd.f32 %v306, %v325
      %v330 = vadd.f32 %v307, %v325
      %v331 = vadd.f32 %v308, %v325
      %v332 = vadd.f32 %v309, %v325
      %v333 = vadd.f32 %v310, %v325
      %v334 = vadd.f32 %v311, %v325
      %v335 = vadd.f32 %v312, %v325
      %v336 = vadd.f32 %v313, %v325
      %v337 = vadd.f32 %v314, %v325
      %v338 = vadd.f32 %v315, %v325
      %v339 = vadd.f32 %v316, %v325
      %v340 = vadd.f32 %v317, %v325
      %v341 = vadd.f32 %v318, %v325
      %v342 = vadd.f32 %v319, %v325
      %v343 = vld [vmem:[%s268] sm:$0xff]
      %v344 = vld [vmem:[%s268 + $0x8] sm:$0xff]
      %v345 = vld [vmem:[%s268 + $0x10] sm:$0xff]
      %v346 = vld [vmem:[%s268 + $0x18] sm:$0xff]
      %v347 = vld [vmem:[%s268 + $0x20] sm:$0xff]
      %v348 = vld [vmem:[%s268 + $0x28] sm:$0xff]
      %v349 = vld [vmem:[%s268 + $0x30] sm:$0xff]
      %v350 = vld [vmem:[%s268 + $0x38] sm:$0xff]
      %v351 = vld [vmem:[%s268 + $0x40] sm:$0xff]
      %v352 = vld [vmem:[%s268 + $0x48] sm:$0xff]
      %v353 = vld [vmem:[%s268 + $0x50] sm:$0xff]
      %v354 = vld [vmem:[%s268 + $0x58] sm:$0xff]
      %v355 = vld [vmem:[%s268 + $0x60] sm:$0xff]
      %v356 = vld [vmem:[%s268 + $0x68] sm:$0xff]
      %v357 = vld [vmem:[%s268 + $0x70] sm:$0xff]
      %v358 = vld [vmem:[%s268 + $0x78] sm:$0xff]
      %v359 = vadd.f32 %v327, %v343
      %v360 = vadd.f32 %v328, %v344
      %v361 = vadd.f32 %v329, %v345
      %v362 = vadd.f32 %v330, %v346
      %v363 = vadd.f32 %v331, %v347
      %v364 = vadd.f32 %v332, %v348
      %v365 = vadd.f32 %v333, %v349
      %v366 = vadd.f32 %v334, %v350
      %v367 = vadd.f32 %v335, %v351
      %v368 = vadd.f32 %v336, %v352
      %v369 = vadd.f32 %v337, %v353
      %v370 = vadd.f32 %v338, %v354
      %v371 = vadd.f32 %v339, %v355
      %v372 = vadd.f32 %v340, %v356
      %v373 = vadd.f32 %v341, %v357
      %v374 = vadd.f32 %v342, %v358
      %v375 = vmax.f32 %v359, 0.0
      %v376 = vmax.f32 %v360, 0.0
      %v377 = vmax.f32 %v361, 0.0
      %v378 = vmax.f32 %v362, 0.0
      %v379 = vmax.f32 %v363, 0.0
      %v380 = vmax.f32 %v364, 0.0
      %v381 = vmax.f32 %v365, 0.0
      %v382 = vmax.f32 %v366, 0.0
      %v383 = vmax.f32 %v367, 0.0
      %v384 = vmax.f32 %v368, 0.0
      %v385 = vmax.f32 %v369, 0.0
      %v386 = vmax.f32 %v370, 0.0
      %v387 = vmax.f32 %v371, 0.0
      %v388 = vmax.f32 %v372, 0.0
      %v389 = vmax.f32 %v373, 0.0
      %v390 = vmax.f32 %v374, 0.0
      %vm391 = vcmask 31744
      %392 = vst.msk [vmem:[%s279] sm:$0xff] %vm391, %v375
      %393 = vst.msk [vmem:[%s279 + $0x8] sm:$0xff] %vm391, %v376
      %394 = vst.msk [vmem:[%s279 + $0x10] sm:$0xff] %vm391, %v377
      %395 = vst.msk [vmem:[%s279 + $0x18] sm:$0xff] %vm391, %v378
      %396 = vst.msk [vmem:[%s279 + $0x20] sm:$0xff] %vm391, %v379
      %397 = vst.msk [vmem:[%s279 + $0x28] sm:$0xff] %vm391, %v380
      %398 = vst.msk [vmem:[%s279 + $0x30] sm:$0xff] %vm391, %v381
      %399 = vst.msk [vmem:[%s279 + $0x38] sm:$0xff] %vm391, %v382
      %400 = vst.msk [vmem:[%s279 + $0x40] sm:$0xff] %vm391, %v383
      %401 = vst.msk [vmem:[%s279 + $0x48] sm:$0xff] %vm391, %v384
      %402 = vst.msk [vmem:[%s279 + $0x50] sm:$0xff] %vm391, %v385
      %403 = vst.msk [vmem:[%s279 + $0x58] sm:$0xff] %vm391, %v386
      %404 = vst.msk [vmem:[%s279 + $0x60] sm:$0xff] %vm391, %v387
      %405 = vst.msk [vmem:[%s279 + $0x68] sm:$0xff] %vm391, %v388
      %406 = vst.msk [vmem:[%s279 + $0x70] sm:$0xff] %vm391, %v389
      %407 = vst.msk [vmem:[%s279 + $0x78] sm:$0xff] %vm391, %v390
      %s408 = smul.u32 8, %s20
      %p409 = scmp.lt.s32.totalorder %s19, 1
      %s410 = scalar_select %p409, %s19, 1
      %p411 = scmp.lt.s32.totalorder %s408, 15
      %s412 = scalar_select %p411, %s408, 15
      %s413 = smul.addr %s412, 2
      %s414 = smul.addr %s410, 32
      %s415 = sadd.s32 %s413, %s414
      %s416 = smul.addr %s415, 8
      %s417 = scalar_lea.vmem %s4, %s416
      // Predicated region
      $region37: #{basic_block.5} parent=35 // pred_check
        %p418 = pneg %p145
      $region38: #{basic_block.5} parent=35 // pred_check_branch
        %420 = sbr.rel (%p418) target = $region40
      $region39: #{basic_block.5} parent=35 // pred_region
        %s421 = smul.u32 8, %s20
      $region40: #{basic_block.5} parent=35 // pred_fallthru
        _
    $region36: #{basic_block.5} parent=5 // pred_fallthru
      _
    %p422 = scmp.le.s32.totalorder 2, %s10
    // Predicated region
    $region41: #{basic_block.5} parent=5 // pred_check
      %p423 = pneg %p422
    $region42: #{basic_block.5} parent=5 // pred_check_branch
      %425 = sbr.rel (%p423) target = $region44
    $region43: #{basic_block.5} parent=5 // pred_region
      %s426 = ssub.s32 %s10, 2
      // Predicated region
      $region45: #{basic_block.5} parent=43 // pred_check
        %p427 = pneg %p151
      $region46: #{basic_block.5} parent=43 // pred_check_branch
        %429 = sbr.rel (%p427) target = $region48
      $region47: #{basic_block.5} parent=43 // pred_region
        %s430 = smul.u32 8, %s22
        %p431 = scmp.lt.s32.totalorder %s21, 1
        %s432 = scalar_select %p431, %s21, 1
        %p433 = scmp.lt.s32.totalorder %s430, 15
        %s434 = scalar_select %p433, %s430, 15
        %s435 = smul.addr %s434, 2
        %s436 = smul.addr %s432, 32
        %s437 = sadd.s32 %s435, %s436
        %s438 = smul.addr %s437, 8
        %s439 = scalar_lea.vmem %s4, %s438
      $region48: #{basic_block.5} parent=43 // pred_fallthru
        _
    $region44: #{basic_block.5} parent=5 // pred_fallthru
      _
  $region6: #{basic_block.5} parent=0 // loop_footer
    %s14 = sadd.s32 1, %s10
  $region7: #{basic_block.5} parent=0 // loop_footer_branch
    %9 = sbr.rel target = $region3
  $region8: #{basic_block.5} parent=0 // loop_exit
    _

// kernel: basic_block.3
$region0: #{basic_block.3}
  #allocation0 [shape = 'u32[]', space=smem, size = 0x4, offset = 0x4, fixed_abs, tag = 'smem constant byte address 0x4 - core index']
  #allocation1 [shape = 'u32[144,128]{1,0:T(1,128)}', space=vmem, size = 0x12000, scoped, tag = 'internal scratch']
  #allocation2 [shape = 'bf16[128,36]{1,0:T(16,128)(2,1)}', space=vmem, size = 0x8000, scoped, tag = 'scratch operand']
  %s0 = inlined_call_operand.vmem [shape: bf16[2,18,18,4], index: 0, kind: input, shape index: {}]
  %s1 = inlined_call_operand.vmem [shape: bf16[36,4], index: 1, kind: input, shape index: {}]
  %s2 = inlined_call_operand.vmem [shape: f32[2,16,16,4], index: 2, kind: output, shape index: {0}]
  %s3 = inlined_call_operand.vmem [shape: f32[2,2,2,4], index: 3, kind: output, shape index: {1}]
  %4 = xla_tuple %s2, %s3
  %s5 = sld [smem:[#allocation0]]
  $region49: #{basic_block.3} parent=0
    _
  %s7 = ssub.s32 1, %s5
  %s8 = scalar_select 0, %s7, %s5
  loop: start=0, step=1, limit=6
  $region2: #{basic_block.3} parent=0 // loop_pre_header
    _
  $region3: #{basic_block.3} parent=0 // loop_header
    %s10 = sphi 0, %s14
    %p11 = scmp.ge.s32.totalorder %s10, 6
    %s17 = sphi 0, %s29
    %s18 = sphi 0, %s25
    %s19 = sphi 0, %s17
    %s20 = sphi 0, %s18
    %s21 = sphi 0, %s19
    %s22 = sphi 0, %s20
    %s32 = sphi 0, %s34
    %s35 = sphi 0, %s32
    %s36 = sphi 0, %s35
    %s52 = sphi 0, %s36
    %s56 = sphi 0, %s56
    %s58 = sphi 0, %s56
    %s59 = sphi 0, %s58
    %s73 = sphi 0, %s59
    %s81 = sphi 0, %s83
    %s84 = sphi 0, %s81
    %s85 = sphi 0, %s84
    %s101 = sphi 0, %s85
    %s109 = sphi 0, %s111
    %s112 = sphi 0, %s109
    %s113 = sphi 0, %s112
    %s129 = sphi 0, %s113
  $region4: #{basic_block.3} parent=0 // loop_header_branch
    %13 = sbr.rel (%p11) target = $region8
  $region5: #{basic_block.3} parent=0 // loop_body
    %s15 = ssub.s32 %s10, 1
    %s16 = ssub.s32 %s10, 2
    %s23 = sadd.s32 1, %s18
    %p24 = scmp.ge.s32.totalorder %s23, 2
    %s25 = scalar_select %p24, 0, %s23
    %s26 = sadd.s32 1, %s17
    %s27 = scalar_select %p24, %s26, %s17
    %p28 = scmp.ge.s32.totalorder %s27, 2
    %s29 = scalar_select %p28, 0, %s27
    %s30 = ssub.s32 %s17, %s29
    %p31 = scmp.eq.s32.totalorder %s30, 0
    %s33 = sadd.s32 %s32, 1
    %s34 = scalar_select %p31, %s32, %s33
    %p37 = pneg %p31
    %p38 = scmp.eq.s32.totalorder %s10, 3
    %p39 = por %p37, %p38
    %p40 = scmp.ne.s32.totalorder %s32, %s35
    %p41 = scmp.eq.s32.totalorder %s10, 0
    %p42 = por %p40, %p41
    %p43 = scmp.ne.s32.totalorder %s32, %s35
    %p44 = scmp.eq.s32.totalorder %s15, 3
    %p45 = por %p43, %p44
    %p46 = scmp.ne.s32.totalorder %s35, %s36
    %p47 = scmp.eq.s32.totalorder %s15, 0
    %p48 = por %p46, %p47
    %p49 = scmp.ne.s32.totalorder %s35, %s36
    %p50 = scmp.eq.s32.totalorder %s16, 3
    %p51 = por %p49, %p50
    %p53 = scmp.ne.s32.totalorder %s36, %s52
    %p54 = scmp.eq.s32.totalorder %s16, 0
    %p55 = por %p53, %p54
    %s57 = sadd.s32 %s56, 1
    %p60 = scmp.eq.s32.totalorder %s10, 3
    %p61 = scmp.ne.s32.totalorder %s56, %s58
    %p62 = scmp.eq.s32.totalorder %s10, 0
    %p63 = por %p61, %p62
    %p64 = scmp.ne.s32.totalorder %s56, %s58
    %p65 = scmp.eq.s32.totalorder %s15, 3
    %p66 = por %p64, %p65
    %p67 = scmp.ne.s32.totalorder %s58, %s59
    %p68 = scmp.eq.s32.totalorder %s15, 0
    %p69 = por %p67, %p68
    %p70 = scmp.ne.s32.totalorder %s58, %s59
    %p71 = scmp.eq.s32.totalorder %s16, 3
    %p72 = por %p70, %p71
    %p74 = scmp.ne.s32.totalorder %s59, %s73
    %p75 = scmp.eq.s32.totalorder %s16, 0
    %p76 = por %p74, %p75
    %s77 = ssub.s32 %s17, %s29
    %s78 = ssub.s32 %s18, %s25
    %s79 = sor.u32 %s77, %s78
    %p80 = scmp.eq.s32.totalorder %s79, 0
    %s82 = sadd.s32 %s81, 1
    %s83 = scalar_select %p80, %s81, %s82
    %p86 = pneg %p80
    %p87 = scmp.eq.s32.totalorder %s10, 3
    %p88 = por %p86, %p87
    %p89 = scmp.ne.s32.totalorder %s81, %s84
    %p90 = scmp.eq.s32.totalorder %s10, 0
    %p91 = por %p89, %p90
    %p92 = scmp.ne.s32.totalorder %s81, %s84
    %p93 = scmp.eq.s32.totalorder %s15, 3
    %p94 = por %p92, %p93
    %p95 = scmp.ne.s32.totalorder %s84, %s85
    %p96 = scmp.eq.s32.totalorder %s15, 0
    %p97 = por %p95, %p96
    %p98 = scmp.ne.s32.totalorder %s84, %s85
    %p99 = scmp.eq.s32.totalorder %s16, 3
    %p100 = por %p98, %p99
    %p102 = scmp.ne.s32.totalorder %s85, %s101
    %p103 = scmp.eq.s32.totalorder %s16, 0
    %p104 = por %p102, %p103
    %s105 = ssub.s32 %s17, %s29
    %s106 = ssub.s32 %s18, %s25
    %s107 = sor.u32 %s105, %s106
    %p108 = scmp.eq.s32.totalorder %s107, 0
    %s110 = sadd.s32 %s109, 1
    %s111 = scalar_select %p108, %s109, %s110
    %p114 = pneg %p108
    %p115 = scmp.eq.s32.totalorder %s10, 3
    %p116 = por %p114, %p115
    %p117 = scmp.ne.s32.totalorder %s109, %s112
    %p118 = scmp.eq.s32.totalorder %s10, 0
    %p119 = por %p117, %p118
    %p120 = scmp.ne.s32.totalorder %s109, %s112
    %p121 = scmp.eq.s32.totalorder %s15, 3
    %p122 = por %p120, %p121
    %p123 = scmp.ne.s32.totalorder %s112, %s113
    %p124 = scmp.eq.s32.totalorder %s15, 0
    %p125 = por %p123, %p124
    %p126 = scmp.ne.s32.totalorder %s112, %s113
    %p127 = scmp.eq.s32.totalorder %s16, 3
    %p128 = por %p126, %p127
    %p130 = scmp.ne.s32.totalorder %s113, %s129
    %p131 = scmp.eq.s32.totalorder %s16, 0
    %p132 = por %p130, %p131
    %p133 = scmp.le.s32.totalorder 1, %s10
    %p134 = scmp.lt.s32.totalorder %s10, 5
    %p135 = pnand %p133, %p134
    %p136 = pneg %p135
    // Predicated region
    $region9: #{basic_block.3} parent=5 // pred_check
      _
    $region10: #{basic_block.3} parent=5 // pred_check_branch
      %138 = sbr.rel (%p135) target = $region12
    $region11: #{basic_block.3} parent=5 // pred_region
      %s139 = ssub.s32 %s10, 1
      // Predicated region
      $region13: #{basic_block.3} parent=11 // pred_check
        %p140 = pneg %p69
      $region14: #{basic_block.3} parent=11 // pred_check_branch
        %142 = sbr.rel (%p140) target = $region16
      $region15: #{basic_block.3} parent=11 // pred_region
        _
      $region16: #{basic_block.3} parent=11 // pred_fallthru
        _
    $region12: #{basic_block.3} parent=5 // pred_fallthru
      _
    %p143 = scmp.lt.s32.totalorder %s10, 4
    // Predicated region
    $region17: #{basic_block.3} parent=5 // pred_check
      %p144 = pneg %p143
    $region18: #{basic_block.3} parent=5 // pred_check_branch
      %146 = sbr.rel (%p144) target = $region20
    $region19: #{basic_block.3} parent=5 // pred_region
      // Predicated region
      $region21: #{basic_block.3} parent=19 // pred_check
        %p147 = pneg %p42
      $region22: #{basic_block.3} parent=19 // pred_check_branch
        %149 = sbr.rel (%p147) target = $region24
      $region23: #{basic_block.3} parent=19 // pred_region
        %p150 = scmp.lt.s32.totalorder %s17, 1
        %s151 = scalar_select %p150, %s17, 1
        %s152 = smul.addr %s151, 54
        %s153 = smul.addr %s152, 4
        %s154 = scalar_lea.vmem %s0, %s153
      $region24: #{basic_block.3} parent=19 // pred_fallthru
        _
    $region20: #{basic_block.3} parent=5 // pred_fallthru
      _
    %p155 = scmp.le.s32.totalorder 1, %s10
    %p156 = scmp.lt.s32.totalorder %s10, 5
    %p157 = pnand %p155, %p156
    %p158 = pneg %p157
    // Predicated region
    $region25: #{basic_block.3} parent=5 // pred_check
      _
    $region26: #{basic_block.3} parent=5 // pred_check_branch
      %160 = sbr.rel (%p157) target = $region28
    $region27: #{basic_block.3} parent=5 // pred_region
      %s161 = ssub.s32 %s10, 1
      %p162 = scmp.lt.s32.totalorder %s19, 1
      %s163 = scalar_select %p162, %s19, 1
      %s164 = smul.addr %s163, 54
      %s165 = smul.addr %s164, 4
      %s166 = scalar_lea.vmem %s0, %s165
      %p167 = pneg %p48
      %p168 = pneg %p45
      %p169 = pneg %p69
      %p170 = pneg %p66
      %p171 = pneg %p97
      %p172 = pneg %p94
      %s173 = smul.u32 8, %s20
      %p174 = scmp.lt.s32.totalorder %s19, 1
      %s175 = scalar_select %p174, %s19, 1
      %p176 = scmp.lt.s32.totalorder %s173, 15
      %s177 = scalar_select %p176, %s173, 15
      %s178 = smul.addr %s177, 2
      %s179 = smul.addr %s175, 32
      %s180 = sadd.s32 %s178, %s179
      %s181 = smul.addr %s180, 8
      %s182 = scalar_lea.vmem %s2, %s181
      %p183 = pneg %p125
      %p184 = pneg %p122
      %p185 = scmp.lt.s32.totalorder %s19, 1
      %s186 = scalar_select %p185, %s19, 1
      %p187 = scmp.lt.s32.totalorder %s20, 1
      %s188 = scalar_select %p187, %s20, 1
      %s189 = smul.addr %s186, 2
      %s190 = sadd.s32 %s188, %s189
      %s191 = smul.addr %s190, 2
      %s192 = scalar_lea.vmem %s3, %s191
      %p193 = scmp.lt.s32.totalorder %s19, 1
      %s194 = scalar_select %p193, %s19, 1
      %s195 = smul.addr %s194, 54
      %s196 = smul.addr %s195, 4
      %s197 = scalar_lea.vmem %s0, %s196
      %s198 = smul.u32 8, %s20
      %p199 = scmp.lt.s32.totalorder %s19, 1
      %s200 = scalar_select %p199, %s19, 1
      %p201 = scmp.lt.s32.totalorder %s198, 15
      %s202 = scalar_select %p201, %s198, 15
      %s203 = smul.addr %s202, 2
      %s204 = smul.addr %s200, 32
      %s205 = sadd.s32 %s203, %s204
      %s206 = smul.addr %s205, 8
      %s207 = scalar_lea.vmem %s2, %s206
      %s208 = smul.u32 8, %s20
      %p209 = scmp.lt.s32.totalorder %s19, 1
      %s210 = scalar_select %p209, %s19, 1
      %p211 = scmp.lt.s32.totalorder %s20, 1
      %s212 = scalar_select %p211, %s20, 1
      %s213 = smul.addr %s210, 2
      %s214 = sadd.s32 %s212, %s213
      %s215 = smul.addr %s214, 2
      %s216 = scalar_lea.vmem %s3, %s215
      %s218 = smul.u32 %s20, 8
      %s219 = smul.u32 %s218, 3
      %s220 = smul.addr %s219, 4
      %s221 = scalar_lea.vmem %s197, %s220
      %v222 = vld [vmem:[%s221] sm:$0xf]
      %v223 = vld [vmem:[%s221 + $0x4] sm:$0xf]
      %v224 = vld [vmem:[%s221 + $0xc] sm:$0xf]
      %v225 = vld [vmem:[%s221 + $0x10] sm:$0xf]
      %v226 = vld [vmem:[%s221 + $0x18] sm:$0xf]
      %v227 = vld [vmem:[%s221 + $0x1c] sm:$0xf]
      %v228 = vld [vmem:[%s221 + $0x24] sm:$0xf]
      %v229 = vld [vmem:[%s221 + $0x28] sm:$0xf]
      %v230 = vld [vmem:[%s221 + $0x30] sm:$0xf]
      %v231 = vld [vmem:[%s221 + $0x34] sm:$0xf]
      %v232 = vld [vmem:[%s221 + $0x3c] sm:$0xf]
      %v233 = vld [vmem:[%s221 + $0x40] sm:$0xf]
      %v234 = vld [vmem:[%s221 + $0x48] sm:$0xf]
      %v235 = vld [vmem:[%s221 + $0x4c] sm:$0xf]
      %v236 = vld [vmem:[%s221 + $0x54] sm:$0xf]
      %v237 = vld [vmem:[%s221 + $0x58] sm:$0xf]
      %v254 = vunpack.c.l.b16 %v222
      %v255 = vunpack.c.l.b16 %v223
      %v256 = vunpack.c.l.b16 %v224
      %v257 = vunpack.c.l.b16 %v225
      %v258 = vunpack.c.l.b16 %v226
      %v259 = vunpack.c.l.b16 %v227
      %v260 = vunpack.c.l.b16 %v228
      %v261 = vunpack.c.l.b16 %v229
      %v262 = vunpack.c.l.b16 %v230
      %v263 = vunpack.c.l.b16 %v231
      %v264 = vunpack.c.l.b16 %v232
      %v265 = vunpack.c.l.b16 %v233
      %v266 = vunpack.c.l.b16 %v234
      %v267 = vunpack.c.l.b16 %v235
      %v268 = vunpack.c.l.b16 %v236
      %v269 = vunpack.c.l.b16 %v237
      %v270 = vpack.c.b16 %v255, %v254
      %v271 = vpack.c.b16 %v257, %v256
      %v272 = vpack.c.b16 %v259, %v258
      %v273 = vpack.c.b16 %v261, %v260
      %v274 = vpack.c.b16 %v263, %v262
      %v275 = vpack.c.b16 %v265, %v264
      %v276 = vpack.c.b16 %v267, %v266
      %v277 = vpack.c.b16 %v269, %v268
      %vm286 = vcmask 31744
      %287 = vst.msk [vmem:[#allocation2] sm:$0xff] %vm286, %v270
      %288 = vst.msk [vmem:[#allocation2 + $0x8] sm:$0xff] %vm286, %v271
      %289 = vst.msk [vmem:[#allocation2 + $0x10] sm:$0xff] %vm286, %v272
      %290 = vst.msk [vmem:[#allocation2 + $0x18] sm:$0xff] %vm286, %v273
      %291 = vst.msk [vmem:[#allocation2 + $0x20] sm:$0xff] %vm286, %v274
      %292 = vst.msk [vmem:[#allocation2 + $0x28] sm:$0xff] %vm286, %v275
      %293 = vst.msk [vmem:[#allocation2 + $0x30] sm:$0xff] %vm286, %v276
      %294 = vst.msk [vmem:[#allocation2 + $0x38] sm:$0xff] %vm286, %v277
      %v295 = vld [vmem:[%s221] sm:$0xf]
      %v296 = vld [vmem:[%s221 + $0x4] sm:$0xf]
      %v297 = vld [vmem:[%s221 + $0x8] sm:$0x1]
      %v298 = vld [vmem:[%s221 + $0xc] sm:$0xf]
      %v299 = vld [vmem:[%s221 + $0x10] sm:$0xf]
      %v300 = vld [vmem:[%s221 + $0x14] sm:$0x1]
      %v301 = vld [vmem:[%s221 + $0x18] sm:$0xf]
      %v302 = vld [vmem:[%s221 + $0x1c] sm:$0xf]
      %v303 = vld [vmem:[%s221 + $0x20] sm:$0x1]
      %v304 = vld [vmem:[%s221 + $0x24] sm:$0xf]
      %v305 = vld [vmem:[%s221 + $0x28] sm:$0xf]
      %v306 = vld [vmem:[%s221 + $0x2c] sm:$0x1]
      %v307 = vld [vmem:[%s221 + $0x30] sm:$0xf]
      %v308 = vld [vmem:[%s221 + $0x34] sm:$0xf]
      %v309 = vld [vmem:[%s221 + $0x38] sm:$0x1]
      %v310 = vld [vmem:[%s221 + $0x3c] sm:$0xf]
      %v311 = vld [vmem:[%s221 + $0x40] sm:$0xf]
      %v312 = vld [vmem:[%s221 + $0x44] sm:$0x1]
      %v313 = vld [vmem:[%s221 + $0x48] sm:$0xf]
      %v314 = vld [vmem:[%s221 + $0x4c] sm:$0xf]
      %v315 = vld [vmem:[%s221 + $0x50] sm:$0x1]
      %v316 = vld [vmem:[%s221 + $0x54] sm:$0xf]
      %v317 = vld [vmem:[%s221 + $0x58] sm:$0xf]
      %v318 = vld [vmem:[%s221 + $0x5c] sm:$0x1]
      %vm319 = vsmask.f32 3328
      %vm320 = vsmask.f32 7440
      %vm321 = vmor %vm319, %vm320
      %v323 = vshrl.u32 %v295, 16
      %v325 = vrot.slane %v323, 4
      %v326 = vshll.u32 %v295, 16
      %v328 = vrot.slane %v326, 5
      %v329 = vor.u32 %v325, %v328
      %v330 = vrot.slane %v329, 4
      %v332 = vshll.u32 %v296, 16
      %v334 = vrot.slane %v332, 5
      %v335 = vsel %vm321, %v330, %v334
      %v336 = vshrl.u32 %v296, 16
      %v338 = vrot.slane %v336, 4
      %v339 = vor.u32 %v338, %v334
      %v340 = vrot.slane %v339, 4
      %v342 = vshll.u32 %v297, 16
      %v344 = vrot.slane %v342, 5
      %v345 = vsel %vm321, %v340, %v344
      %v347 = vshrl.u32 %v298, 16
      %v349 = vrot.slane %v347, 4
      %v350 = vshll.u32 %v298, 16
      %v352 = vrot.slane %v350, 5
      %v353 = vor.u32 %v349, %v352
      %v354 = vrot.slane %v353, 4
      %v356 = vshll.u32 %v299, 16
      %v358 = vrot.slane %v356, 5
      %v359 = vsel %vm321, %v354, %v358
      %v360 = vshrl.u32 %v299, 16
      %v362 = vrot.slane %v360, 4
      %v363 = vor.u32 %v362, %v358
      %v364 = vrot.slane %v363, 4
      %v366 = vshll.u32 %v300, 16
      %v368 = vrot.slane %v366, 5
      %v369 = vsel %vm321, %v364, %v368
      %v371 = vshrl.u32 %v301, 16
      %v373 = vrot.slane %v371, 4
      %v374 = vshll.u32 %v301, 16
      %v376 = vrot.slane %v374, 5
      %v377 = vor.u32 %v373, %v376
      %v378 = vrot.slane %v377, 4
      %v380 = vshll.u32 %v302, 16
      %v382 = vrot.slane %v380, 5
      %v383 = vsel %vm321, %v378, %v382
      %v384 = vshrl.u32 %v302, 16
      %v386 = vrot.slane %v384, 4
      %v387 = vor.u32 %v386, %v382
      %v388 = vrot.slane %v387, 4
      %v390 = vshll.u32 %v303, 16
      %v392 = vrot.slane %v390, 5
      %v393 = vsel %vm321, %v388, %v392
      %v395 = vshrl.u32 %v304, 16
      %v397 = vrot.slane %v395, 4
      %v398 = vshll.u32 %v304, 16
      %v400 = vrot.slane %v398, 5
      %v401 = vor.u32 %v397, %v400
      %v402 = vrot.slane %v401, 4
      %v404 = vshll.u32 %v305, 16
      %v406 = vrot.slane %v404, 5
      %v407 = vsel %vm321, %v402, %v406
      %v408 = vshrl.u32 %v305, 16
      %v410 = vrot.slane %v408, 4
      %v411 = vor.u32 %v410, %v406
      %v412 = vrot.slane %v411, 4
      %v414 = vshll.u32 %v306, 16
      %v416 = vrot.slane %v414, 5
      %v417 = vsel %vm321, %v412, %v416
      %v419 = vshrl.u32 %v307, 16
      %v421 = vrot.slane %v419, 4
      %v422 = vshll.u32 %v307, 16
      %v424 = vrot.slane %v422, 5
      %v425 = vor.u32 %v421, %v424
      %v426 = vrot.slane %v425, 4
      %v428 = vshll.u32 %v308, 16
      %v430 = vrot.slane %v428, 5
      %v431 = vsel %vm321, %v426, %v430
      %v432 = vshrl.u32 %v308, 16
      %v434 = vrot.slane %v432, 4
      %v435 = vor.u32 %v434, %v430
      %v436 = vrot.slane %v435, 4
      %v438 = vshll.u32 %v309, 16
      %v440 = vrot.slane %v438, 5
      %v441 = vsel %vm321, %v436, %v440
      %v443 = vshrl.u32 %v310, 16
      %v445 = vrot.slane %v443, 4
      %v446 = vshll.u32 %v310, 16
      %v448 = vrot.slane %v446, 5
      %v449 = vor.u32 %v445, %v448
      %v450 = vrot.slane %v449, 4
      %v452 = vshll.u32 %v311, 16
      %v454 = vrot.slane %v452, 5
      %v455 = vsel %vm321, %v450, %v454
      %v456 = vshrl.u32 %v311, 16
      %v458 = vrot.slane %v456, 4
      %v459 = vor.u32 %v458, %v454
      %v460 = vrot.slane %v459, 4
      %v462 = vshll.u32 %v312, 16
      %v464 = vrot.slane %v462, 5
      %v465 = vsel %vm321, %v460, %v464
      %v467 = vshrl.u32 %v313, 16
      %v469 = vrot.slane %v467, 4
      %v470 = vshll.u32 %v313, 16
      %v472 = vrot.slane %v470, 5
      %v473 = vor.u32 %v469, %v472
      %v474 = vrot.slane %v473, 4
      %v476 = vshll.u32 %v314, 16
      %v478 = vrot.slane %v476, 5
      %v479 = vsel %vm321, %v474, %v478
      %v480 = vshrl.u32 %v314, 16
      %v482 = vrot.slane %v480, 4
      %v483 = vor.u32 %v482, %v478
      %v484 = vrot.slane %v483, 4
      %v486 = vshll.u32 %v315, 16
      %v488 = vrot.slane %v486, 5
      %v489 = vsel %vm321, %v484, %v488
      %v491 = vshrl.u32 %v316, 16
      %v493 = vrot.slane %v491, 4
      %v494 = vshll.u32 %v316, 16
      %v496 = vrot.slane %v494, 5
      %v497 = vor.u32 %v493, %v496
      %v498 = vrot.slane %v497, 4
      %v500 = vshll.u32 %v317, 16
      %v502 = vrot.slane %v500, 5
      %v503 = vsel %vm321, %v498, %v502
      %v504 = vshrl.u32 %v317, 16
      %v506 = vrot.slane %v504, 4
      %v507 = vor.u32 %v506, %v502
      %v508 = vrot.slane %v507, 4
      %v510 = vshll.u32 %v318, 16
      %v512 = vrot.slane %v510, 5
      %v513 = vsel %vm321, %v508, %v512
      %v514 = vunpack.c.l.b16 %v335
      %v515 = vunpack.c.l.b16 %v345
      %v516 = vunpack.c.l.b16 %v359
      %v517 = vunpack.c.l.b16 %v369
      %v518 = vunpack.c.l.b16 %v383
      %v519 = vunpack.c.l.b16 %v393
      %v520 = vunpack.c.l.b16 %v407
      %v521 = vunpack.c.l.b16 %v417
      %v522 = vunpack.c.l.b16 %v431
      %v523 = vunpack.c.l.b16 %v441
      %v524 = vunpack.c.l.b16 %v455
      %v525 = vunpack.c.l.b16 %v465
      %v526 = vunpack.c.l.b16 %v479
      %v527 = vunpack.c.l.b16 %v489
      %v528 = vunpack.c.l.b16 %v503
      %v529 = vunpack.c.l.b16 %v513
      %v530 = vpack.c.b16 %v515, %v514
      %v531 = vpack.c.b16 %v517, %v516
      %v532 = vpack.c.b16 %v519, %v518
      %v533 = vpack.c.b16 %v521, %v520
      %v534 = vpack.c.b16 %v523, %v522
      %v535 = vpack.c.b16 %v525, %v524
      %v536 = vpack.c.b16 %v527, %v526
      %v537 = vpack.c.b16 %v529, %v528
      %538 = vrot.lane.b32.xlu0 %v530, 4
      %v539 = vpop.permute.xlu0 %538
      %540 = vrot.lane.b32.xlu0 %v531, 4
      %v541 = vpop.permute.xlu0 %540
      %542 = vrot.lane.b32.xlu0 %v532, 4
      %v543 = vpop.permute.xlu0 %542
      %544 = vrot.lane.b32.xlu0 %v533, 4
      %v545 = vpop.permute.xlu0 %544
      %546 = vrot.lane.b32.xlu0 %v534, 4
      %v547 = vpop.permute.xlu0 %546
      %548 = vrot.lane.b32.xlu0 %v535, 4
      %v549 = vpop.permute.xlu0 %548
      %550 = vrot.lane.b32.xlu0 %v536, 4
      %v551 = vpop.permute.xlu0 %550
      %552 = vrot.lane.b32.xlu0 %v537, 4
      %v553 = vpop.permute.xlu0 %552
      %vm562 = vcmask 64544
      %563 = vst.msk [vmem:[#allocation2] sm:$0xff] %vm562, %v539
      %564 = vst.msk [vmem:[#allocation2 + $0x8] sm:$0xff] %vm562, %v541
      %565 = vst.msk [vmem:[#allocation2 + $0x10] sm:$0xff] %vm562, %v543
      %566 = vst.msk [vmem:[#allocation2 + $0x18] sm:$0xff] %vm562, %v545
      %567 = vst.msk [vmem:[#allocation2 + $0x20] sm:$0xff] %vm562, %v547
      %568 = vst.msk [vmem:[#allocation2 + $0x28] sm:$0xff] %vm562, %v549
      %569 = vst.msk [vmem:[#allocation2 + $0x30] sm:$0xff] %vm562, %v551
      %570 = vst.msk [vmem:[#allocation2 + $0x38] sm:$0xff] %vm562, %v553
      %v571 = vld [vmem:[%s221] sm:$0xe]
      %v572 = vld [vmem:[%s221 + $0x4] sm:$0xf]
      %v573 = vld [vmem:[%s221 + $0x8] sm:$0x1]
      %v574 = vld [vmem:[%s221 + $0xc] sm:$0xe]
      %v575 = vld [vmem:[%s221 + $0x10] sm:$0xf]
      %v576 = vld [vmem:[%s221 + $0x14] sm:$0x1]
      %v577 = vld [vmem:[%s221 + $0x18] sm:$0xe]
      %v578 = vld [vmem:[%s221 + $0x1c] sm:$0xf]
      %v579 = vld [vmem:[%s221 + $0x20] sm:$0x1]
      %v580 = vld [vmem:[%s221 + $0x24] sm:$0xe]
      %v581 = vld [vmem:[%s221 + $0x28] sm:$0xf]
      %v582 = vld [vmem:[%s221 + $0x2c] sm:$0x1]
      %v583 = vld [vmem:[%s221 + $0x30] sm:$0xe]
      %v584 = vld [vmem:[%s221 + $0x34] sm:$0xf]
      %v585 = vld [vmem:[%s221 + $0x38] sm:$0x1]
      %v586 = vld [vmem:[%s221 + $0x3c] sm:$0xe]
      %v587 = vld [vmem:[%s221 + $0x40] sm:$0xf]
      %v588 = vld [vmem:[%s221 + $0x44] sm:$0x1]
      %v589 = vld [vmem:[%s221 + $0x48] sm:$0xe]
      %v590 = vld [vmem:[%s221 + $0x4c] sm:$0xf]
      %v591 = vld [vmem:[%s221 + $0x50] sm:$0x1]
      %v592 = vld [vmem:[%s221 + $0x54] sm:$0xe]
      %v593 = vld [vmem:[%s221 + $0x58] sm:$0xf]
      %v594 = vld [vmem:[%s221 + $0x5c] sm:$0x1]
      %vm619 = vcmask 1042432
      %vm620 = vcmask 1046532
      %vm621 = vmor %vm619, %vm620
      %v622 = vrot.slane %v571, 5
      %v623 = vrot.slane %v622, 4
      %v624 = vrot.slane %v572, 5
      %v625 = vsel %vm621, %v623, %v624
      %v626 = vrot.slane %v624, 4
      %v627 = vrot.slane %v573, 5
      %v628 = vsel %vm621, %v626, %v627
      %v629 = vrot.slane %v574, 5
      %v630 = vrot.slane %v629, 4
      %v631 = vrot.slane %v575, 5
      %v632 = vsel %vm621, %v630, %v631
      %v633 = vrot.slane %v631, 4
      %v634 = vrot.slane %v576, 5
      %v635 = vsel %vm621, %v633, %v634
      %v636 = vrot.slane %v577, 5
      %v637 = vrot.slane %v636, 4
      %v638 = vrot.slane %v578, 5
      %v639 = vsel %vm621, %v637, %v638
      %v640 = vrot.slane %v638, 4
      %v641 = vrot.slane %v579, 5
      %v642 = vsel %vm621, %v640, %v641
      %v643 = vrot.slane %v580, 5
      %v644 = vrot.slane %v643, 4
      %v645 = vrot.slane %v581, 5
      %v646 = vsel %vm621, %v644, %v645
      %v647 = vrot.slane %v645, 4
      %v648 = vrot.slane %v582, 5
      %v649 = vsel %vm621, %v647, %v648
      %v650 = vrot.slane %v583, 5
      %v651 = vrot.slane %v650, 4
      %v652 = vrot.slane %v584, 5
      %v653 = vsel %vm621, %v651, %v652
      %v654 = vrot.slane %v652, 4
      %v655 = vrot.slane %v585, 5
      %v656 = vsel %vm621, %v654, %v655
      %v657 = vrot.slane %v586, 5
      %v658 = vrot.slane %v657, 4
      %v659 = vrot.slane %v587, 5
      %v660 = vsel %vm621, %v658, %v659
      %v661 = vrot.slane %v659, 4
      %v662 = vrot.slane %v588, 5
      %v663 = vsel %vm621, %v661, %v662
      %v664 = vrot.slane %v589, 5
      %v665 = vrot.slane %v664, 4
      %v666 = vrot.slane %v590, 5
      %v667 = vsel %vm621, %v665, %v666
      %v668 = vrot.slane %v666, 4
      %v669 = vrot.slane %v591, 5
      %v670 = vsel %vm621, %v668, %v669
      %v671 = vrot.slane %v592, 5
      %v672 = vrot.slane %v671, 4
      %v673 = vrot.slane %v593, 5
      %v674 = vsel %vm621, %v672, %v673
      %v675 = vrot.slane %v673, 4
      %v676 = vrot.slane %v594, 5
      %v677 = vsel %vm621, %v675, %v676
      %v678 = vunpack.c.l.b16 %v625
      %v679 = vunpack.c.l.b16 %v628
      %v680 = vunpack.c.l.b16 %v632
      %v681 = vunpack.c.l.b16 %v635
      %v682 = vunpack.c.l.b16 %v639
      %v683 = vunpack.c.l.b16 %v642
      %v684 = vunpack.c.l.b16 %v646
      %v685 = vunpack.c.l.b16 %v649
      %v686 = vunpack.c.l.b16 %v653
      %v687 = vunpack.c.l.b16 %v656
      %v688 = vunpack.c.l.b16 %v660
      %v689 = vunpack.c.l.b16 %v663
      %v690 = vunpack.c.l.b16 %v667
      %v691 = vunpack.c.l.b16 %v670
      %v692 = vunpack.c.l.b16 %v674
      %v693 = vunpack.c.l.b16 %v677
      %v694 = vpack.c.b16 %v679, %v678
      %v695 = vpack.c.b16 %v681, %v680
      %v696 = vpack.c.b16 %v683, %v682
      %v697 = vpack.c.b16 %v685, %v684
      %v698 = vpack.c.b16 %v687, %v686
      %v699 = vpack.c.b16 %v689, %v688
      %v700 = vpack.c.b16 %v691, %v690
      %v701 = vpack.c.b16 %v693, %v692
      %702 = vrot.lane.b32.xlu0 %v694, 8
      %v703 = vpop.permute.xlu0 %702
      %704 = vrot.lane.b32.xlu0 %v695, 8
      %v705 = vpop.permute.xlu0 %704
      %706 = vrot.lane.b32.xlu0 %v696, 8
      %v707 = vpop.permute.xlu0 %706
      %708 = vrot.lane.b32.xlu0 %v697, 8
      %v709 = vpop.permute.xlu0 %708
      %710 = vrot.lane.b32.xlu0 %v698, 8
      %v711 = vpop.permute.xlu0 %710
      %712 = vrot.lane.b32.xlu0 %v699, 8
      %v713 = vpop.permute.xlu0 %712
      %714 = vrot.lane.b32.xlu0 %v700, 8
      %v715 = vpop.permute.xlu0 %714
      %716 = vrot.lane.b32.xlu0 %v701, 8
      %v717 = vpop.permute.xlu0 %716
      %vm726 = vcmask 97344
      %727 = vst.msk [vmem:[#allocation2] sm:$0xff] %vm726, %v703
      %728 = vst.msk [vmem:[#allocation2 + $0x8] sm:$0xff] %vm726, %v705
      %729 = vst.msk [vmem:[#allocation2 + $0x10] sm:$0xff] %vm726, %v707
      %730 = vst.msk [vmem:[#allocation2 + $0x18] sm:$0xff] %vm726, %v709
      %731 = vst.msk [vmem:[#allocation2 + $0x20] sm:$0xff] %vm726, %v711
      %732 = vst.msk [vmem:[#allocation2 + $0x28] sm:$0xff] %vm726, %v713
      %733 = vst.msk [vmem:[#allocation2 + $0x30] sm:$0xff] %vm726, %v715
      %734 = vst.msk [vmem:[#allocation2 + $0x38] sm:$0xff] %vm726, %v717
      %s735 = sadd.s32 %s218, 1
      %s736 = smul.u32 %s735, 3
      %s737 = smul.addr %s736, 4
      %s738 = scalar_lea.vmem %s197, %s737
      %v739 = vld [vmem:[%s738] sm:$0xf]
      %v740 = vld [vmem:[%s738 + $0x4] sm:$0xf]
      %v741 = vld [vmem:[%s738 + $0xc] sm:$0xf]
      %v742 = vld [vmem:[%s738 + $0x10] sm:$0xf]
      %v743 = vld [vmem:[%s738 + $0x18] sm:$0xf]
      %v744 = vld [vmem:[%s738 + $0x1c] sm:$0xf]
      %v745 = vld [vmem:[%s738 + $0x24] sm:$0xf]
      %v746 = vld [vmem:[%s738 + $0x28] sm:$0xf]
      %v747 = vld [vmem:[%s738 + $0x30] sm:$0xf]
      %v748 = vld [vmem:[%s738 + $0x34] sm:$0xf]
      %v749 = vld [vmem:[%s738 + $0x3c] sm:$0xf]
      %v750 = vld [vmem:[%s738 + $0x40] sm:$0xf]
      %v751 = vld [vmem:[%s738 + $0x48] sm:$0xf]
      %v752 = vld [vmem:[%s738 + $0x4c] sm:$0xf]
      %v753 = vld [vmem:[%s738 + $0x54] sm:$0xf]
      %v754 = vld [vmem:[%s738 + $0x58] sm:$0xf]
      %v771 = vunpack.c.l.b16 %v739
      %v772 = vunpack.c.l.b16 %v740
      %v773 = vunpack.c.l.b16 %v741
      %v774 = vunpack.c.l.b16 %v742
      %v775 = vunpack.c.l.b16 %v743
      %v776 = vunpack.c.l.b16 %v744
      %v777 = vunpack.c.l.b16 %v745
      %v778 = vunpack.c.l.b16 %v746
      %v779 = vunpack.c.l.b16 %v747
      %v780 = vunpack.c.l.b16 %v748
      %v781 = vunpack.c.l.b16 %v749
      %v782 = vunpack.c.l.b16 %v750
      %v783 = vunpack.c.l.b16 %v751
      %v784 = vunpack.c.l.b16 %v752
      %v785 = vunpack.c.l.b16 %v753
      %v786 = vunpack.c.l.b16 %v754
      %v787 = vpack.c.b16 %v772, %v771
      %v788 = vpack.c.b16 %v774, %v773
      %v789 = vpack.c.b16 %v776, %v775
      %v790 = vpack.c.b16 %v778, %v777
      %v791 = vpack.c.b16 %v780, %v779
      %v792 = vpack.c.b16 %v782, %v781
      %v793 = vpack.c.b16 %v784, %v783
      %v794 = vpack.c.b16 %v786, %v785
      %795 = vrot.lane.b32.xlu0 %v787, 12
      %v796 = vpop.permute.xlu0 %795
      %797 = vrot.lane.b32.xlu0 %v788, 12
      %v798 = vpop.permute.xlu0 %797
      %799 = vrot.lane.b32.xlu0 %v789, 12
      %v800 = vpop.permute.xlu0 %799
      %801 = vrot.lane.b32.xlu0 %v790, 12
      %v802 = vpop.permute.xlu0 %801
      %803 = vrot.lane.b32.xlu0 %v791, 12
      %v804 = vpop.permute.xlu0 %803
      %805 = vrot.lane.b32.xlu0 %v792, 12
      %v806 = vpop.permute.xlu0 %805
      %807 = vrot.lane.b32.xlu0 %v793, 12
      %v808 = vpop.permute.xlu0 %807
      %809 = vrot.lane.b32.xlu0 %v794, 12
      %v810 = vpop.permute.xlu0 %809
      %vm819 = vcmask 130144
      %820 = vst.msk [vmem:[#allocation2] sm:$0xff] %vm819, %v796
      %821 = vst.msk [vmem:[#allocation2 + $0x8] sm:$0xff] %vm819, %v798
      %822 = vst.msk [vmem:[#allocation2 + $0x10] sm:$0xff] %vm819, %v800
      %823 = vst.msk [vmem:[#allocation2 + $0x18] sm:$0xff] %vm819, %v802
      %824 = vst.msk [vmem:[#allocation2 + $0x20] sm:$0xff] %vm819, %v804
      %825 = vst.msk [vmem:[#allocation2 + $0x28] sm:$0xff] %vm819, %v806
      %826 = vst.msk [vmem:[#allocation2 + $0x30] sm:$0xff] %vm819, %v808
      %827 = vst.msk [vmem:[#allocation2 + $0x38] sm:$0xff] %vm819, %v810
      %v828 = vld [vmem:[%s738] sm:$0xf]
      %v829 = vld [vmem:[%s738 + $0x4] sm:$0xf]
      %v830 = vld [vmem:[%s738 + $0x8] sm:$0x1]
      %v831 = vld [vmem:[%s738 + $0xc] sm:$0xf]
      %v832 = vld [vmem:[%s738 + $0x10] sm:$0xf]
      %v833 = vld [vmem:[%s738 + $0x14] sm:$0x1]
      %v834 = vld [vmem:[%s738 + $0x18] sm:$0xf]
      %v835 = vld [vmem:[%s738 + $0x1c] sm:$0xf]
      %v836 = vld [vmem:[%s738 + $0x20] sm:$0x1]
      %v837 = vld [vmem:[%s738 + $0x24] sm:$0xf]
      %v838 = vld [vmem:[%s738 + $0x28] sm:$0xf]
      %v839 = vld [vmem:[%s738 + $0x2c] sm:$0x1]
      %v840 = vld [vmem:[%s738 + $0x30] sm:$0xf]
      %v841 = vld [vmem:[%s738 + $0x34] sm:$0xf]
      %v842 = vld [vmem:[%s738 + $0x38] sm:$0x1]
      %v843 = vld [vmem:[%s738 + $0x3c] sm:$0xf]
      %v844 = vld [vmem:[%s738 + $0x40] sm:$0xf]
      %v845 = vld [vmem:[%s738 + $0x44] sm:$0x1]
      %v846 = vld [vmem:[%s738 + $0x48] sm:$0xf]
      %v847 = vld [vmem:[%s738 + $0x4c] sm:$0xf]
      %v848 = vld [vmem:[%s738 + $0x50] sm:$0x1]
      %v849 = vld [vmem:[%s738 + $0x54] sm:$0xf]
      %v850 = vld [vmem:[%s738 + $0x58] sm:$0xf]
      %v851 = vld [vmem:[%s738 + $0x5c] sm:$0x1]
      %v853 = vshrl.u32 %v828, 16
      %v855 = vrot.slane %v853, 4
      %v856 = vshll.u32 %v828, 16
      %v858 = vrot.slane %v856, 5
      %v859 = vor.u32 %v855, %v858
      %v860 = vrot.slane %v859, 4
      %v862 = vshll.u32 %v829, 16
      %v864 = vrot.slane %v862, 5
      %v865 = vsel %vm321, %v860, %v864
      %v866 = vshrl.u32 %v829, 16
      %v868 = vrot.slane %v866, 4
      %v869 = vor.u32 %v868, %v864
      %v870 = vrot.slane %v869, 4
      %v872 = vshll.u32 %v830, 16
      %v874 = vrot.slane %v872, 5
      %v875 = vsel %vm321, %v870, %v874
      %v877 = vshrl.u32 %v831, 16
      %v879 = vrot.slane %v877, 4
      %v880 = vshll.u32 %v831, 16
      %v882 = vrot.slane %v880, 5
      %v883 = vor.u32 %v879, %v882
      %v884 = vrot.slane %v883, 4
      %v886 = vshll.u32 %v832, 16
      %v888 = vrot.slane %v886, 5
      %v889 = vsel %vm321, %v884, %v888
      %v890 = vshrl.u32 %v832, 16
      %v892 = vrot.slane %v890, 4
      %v893 = vor.u32 %v892, %v888
      %v894 = vrot.slane %v893, 4
      %v896 = vshll.u32 %v833, 16
      %v898 = vrot.slane %v896, 5
      %v899 = vsel %vm321, %v894, %v898
      %v901 = vshrl.u32 %v834, 16
      %v903 = vrot.slane %v901, 4
      %v904 = vshll.u32 %v834, 16
      %v906 = vrot.slane %v904, 5
      %v907 = vor.u32 %v903, %v906
      %v908 = vrot.slane %v907, 4
      %v910 = vshll.u32 %v835, 16
      %v912 = vrot.slane %v910, 5
      %v913 = vsel %vm321, %v908, %v912
      %v914 = vshrl.u32 %v835, 16
      %v916 = vrot.slane %v914, 4
      %v917 = vor.u32 %v916, %v912
      %v918 = vrot.slane %v917, 4
      %v920 = vshll.u32 %v836, 16
      %v922 = vrot.slane %v920, 5
      %v923 = vsel %vm321, %v918, %v922
      %v925 = vshrl.u32 %v837, 16
      %v927 = vrot.slane %v925, 4
      %v928 = vshll.u32 %v837, 16
      %v930 = vrot.slane %v928, 5
      %v931 = vor.u32 %v927, %v930
      %v932 = vrot.slane %v931, 4
      %v934 = vshll.u32 %v838, 16
      %v936 = vrot.slane %v934, 5
      %v937 = vsel %vm321, %v932, %v936
      %v938 = vshrl.u32 %v838, 16
      %v940 = vrot.slane %v938, 4
      %v941 = vor.u32 %v940, %v936
      %v942 = vrot.slane %v941, 4
      %v944 = vshll.u32 %v839, 16
      %v946 = vrot.slane %v944, 5
      %v947 = vsel %vm321, %v942, %v946
      %v949 = vshrl.u32 %v840, 16
      %v951 = vrot.slane %v949, 4
      %v952 = vshll.u32 %v840, 16
      %v954 = vrot.slane %v952, 5
      %v955 = vor.u32 %v951, %v954
      %v956 = vrot.slane %v955, 4
      %v958 = vshll.u32 %v841, 16
      %v960 = vrot.slane %v958, 5
      %v961 = vsel %vm321, %v956, %v960
      %v962 = vshrl.u32 %v841, 16
      %v964 = vrot.slane %v962, 4
      %v965 = vor.u32 %v964, %v960
      %v966 = vrot.slane %v965, 4
      %v968 = vshll.u32 %v842, 16
      %v970 = vrot.slane %v968, 5
      %v971 = vsel %vm321, %v966, %v970
      %v973 = vshrl.u32 %v843, 16
      %v975 = vrot.slane %v973, 4
      %v976 = vshll.u32 %v843, 16
      %v978 = vrot.slane %v976, 5
      %v979 = vor.u32 %v975, %v978
      %v980 = vrot.slane %v979, 4
      %v982 = vshll.u32 %v844, 16
      %v984 = vrot.slane %v982, 5
      %v985 = vsel %vm321, %v980, %v984
      %v986 = vshrl.u32 %v844, 16
      %v988 = vrot.slane %v986, 4
      %v989 = vor.u32 %v988, %v984
      %v990 = vrot.slane %v989, 4
      %v992 = vshll.u32 %v845, 16
      %v994 = vrot.slane %v992, 5
      %v995 = vsel %vm321, %v990, %v994
      %v997 = vshrl.u32 %v846, 16
      %v999 = vrot.slane %v997, 4
      %v1000 = vshll.u32 %v846, 16
      %v1002 = vrot.slane %v1000, 5
      %v1003 = vor.u32 %v999, %v1002
      %v1004 = vrot.slane %v1003, 4
      %v1006 = vshll.u32 %v847, 16
      %v1008 = vrot.slane %v1006, 5
      %v1009 = vsel %vm321, %v1004, %v1008
      %v1010 = vshrl.u32 %v847, 16
      %v1012 = vrot.slane %v1010, 4
      %v1013 = vor.u32 %v1012, %v1008
      %v1014 = vrot.slane %v1013, 4
      %v1016 = vshll.u32 %v848, 16
      %v1018 = vrot.slane %v1016, 5
      %v1019 = vsel %vm321, %v1014, %v1018
      %v1021 = vshrl.u32 %v849, 16
      %v1023 = vrot.slane %v1021, 4
      %v1024 = vshll.u32 %v849, 16
      %v1026 = vrot.slane %v1024, 5
      %v1027 = vor.u32 %v1023, %v1026
      %v1028 = vrot.slane %v1027, 4
      %v1030 = vshll.u32 %v850, 16
      %v1032 = vrot.slane %v1030, 5
      %v1033 = vsel %vm321, %v1028, %v1032
      %v1034 = vshrl.u32 %v850, 16
      %v1036 = vrot.slane %v1034, 4
      %v1037 = vor.u32 %v1036, %v1032
      %v1038 = vrot.slane %v1037, 4
      %v1040 = vshll.u32 %v851, 16
      %v1042 = vrot.slane %v1040, 5
      %v1043 = vsel %vm321, %v1038, %v1042
      %v1044 = vunpack.c.l.b16 %v865
      %v1045 = vunpack.c.l.b16 %v875
      %v1046 = vunpack.c.l.b16 %v889
      %v1047 = vunpack.c.l.b16 %v899
      %v1048 = vunpack.c.l.b16 %v913
      %v1049 = vunpack.c.l.b16 %v923
      %v1050 = vunpack.c.l.b16 %v937
      %v1051 = vunpack.c.l.b16 %v947
      %v1052 = vunpack.c.l.b16 %v961
      %v1053 = vunpack.c.l.b16 %v971
      %v1054 = vunpack.c.l.b16 %v985
      %v1055 = vunpack.c.l.b16 %v995
      %v1056 = vunpack.c.l.b16 %v1009
      %v1057 = vunpack.c.l.b16 %v1019
      %v1058 = vunpack.c.l.b16 %v1033
      %v1059 = vunpack.c.l.b16 %v1043
      %v1060 = vpack.c.b16 %v1045, %v1044
      %v1061 = vpack.c.b16 %v1047, %v1046
      %v1062 = vpack.c.b16 %v1049, %v1048
      %v1063 = vpack.c.b16 %v1051, %v1050
      %v1064 = vpack.c.b16 %v1053, %v1052
      %v1065 = vpack.c.b16 %v1055, %v1054
      %v1066 = vpack.c.b16 %v1057, %v1056
      %v1067 = vpack.c.b16 %v1059, %v1058
      %1068 = vrot.lane.b32.xlu0 %v1060, 16
      %v1069 = vpop.permute.xlu0 %1068
      %1070 = vrot.lane.b32.xlu0 %v1061, 16
      %v1071 = vpop.permute.xlu0 %1070
      %1072 = vrot.lane.b32.xlu0 %v1062, 16
      %v1073 = vpop.permute.xlu0 %1072
      %1074 = vrot.lane.b32.xlu0 %v1063, 16
      %v1075 = vpop.permute.xlu0 %1074
      %1076 = vrot.lane.b32.xlu0 %v1064, 16
      %v1077 = vpop.permute.xlu0 %1076
      %1078 = vrot.lane.b32.xlu0 %v1065, 16
      %v1079 = vpop.permute.xlu0 %1078
      %1080 = vrot.lane.b32.xlu0 %v1066, 16
      %v1081 = vpop.permute.xlu0 %1080
      %1082 = vrot.lane.b32.xlu0 %v1067, 16
      %v1083 = vpop.permute.xlu0 %1082
      %vm1092 = vcmask 162944
      %1093 = vst.msk [vmem:[#allocation2] sm:$0xff] %vm1092, %v1069
      %1094 = vst.msk [vmem:[#allocation2 + $0x8] sm:$0xff] %vm1092, %v1071
      %1095 = vst.msk [vmem:[#allocation2 + $0x10] sm:$0xff] %vm1092, %v1073
      %1096 = vst.msk [vmem:[#allocation2 + $0x18] sm:$0xff] %vm1092, %v1075
      %1097 = vst.msk [vmem:[#allocation2 + $0x20] sm:$0xff] %vm1092, %v1077
      %1098 = vst.msk [vmem:[#allocation2 + $0x28] sm:$0xff] %vm1092, %v1079
      %1099 = vst.msk [vmem:[#allocation2 + $0x30] sm:$0xff] %vm1092, %v1081
      %1100 = vst.msk [vmem:[#allocation2 + $0x38] sm:$0xff] %vm1092, %v1083
      %v1101 = vld [vmem:[%s738] sm:$0xe]
      %v1102 = vld [vmem:[%s738 + $0x4] sm:$0xf]
      %v1103 = vld [vmem:[%s738 + $0x8] sm:$0x1]
      %v1104 = vld [vmem:[%s738 + $0xc] sm:$0xe]
      %v1105 = vld [vmem:[%s738 + $0x10] sm:$0xf]
      %v1106 = vld [vmem:[%s738 + $0x14] sm:$0x1]
      %v1107 = vld [vmem:[%s738 + $0x18] sm:$0xe]
      %v1108 = vld [vmem:[%s738 + $0x1c] sm:$0xf]
      %v1109 = vld [vmem:[%s738 + $0x20] sm:$0x1]
      %v1110 = vld [vmem:[%s738 + $0x24] sm:$0xe]
      %v1111 = vld [vmem:[%s738 + $0x28] sm:$0xf]
      %v1112 = vld [vmem:[%s738 + $0x2c] sm:$0x1]
      %v1113 = vld [vmem:[%s738 + $0x30] sm:$0xe]
      %v1114 = vld [vmem:[%s738 + $0x34] sm:$0xf]
      %v1115 = vld [vmem:[%s738 + $0x38] sm:$0x1]
      %v1116 = vld [vmem:[%s738 + $0x3c] sm:$0xe]
      %v1117 = vld [vmem:[%s738 + $0x40] sm:$0xf]
      %v1118 = vld [vmem:[%s738 + $0x44] sm:$0x1]
      %v1119 = vld [vmem:[%s738 + $0x48] sm:$0xe]
      %v1120 = vld [vmem:[%s738 + $0x4c] sm:$0xf]
      %v1121 = vld [vmem:[%s738 + $0x50] sm:$0x1]
      %v1122 = vld [vmem:[%s738 + $0x54] sm:$0xe]
      %v1123 = vld [vmem:[%s738 + $0x58] sm:$0xf]
      %v1124 = vld [vmem:[%s738 + $0x5c] sm:$0x1]
      %v1149 = vrot.slane %v1101, 5
      %v1150 = vrot.slane %v1149, 4
      %v1151 = vrot.slane %v1102, 5
      %v1152 = vsel %vm621, %v1150, %v1151
      %v1153 = vrot.slane %v1151, 4
      %v1154 = vrot.slane %v1103, 5
      %v1155 = vsel %vm621, %v1153, %v1154
      %v1156 = vrot.slane %v1104, 5
      %v1157 = vrot.slane %v1156, 4
      %v1158 = vrot.slane %v1105, 5
      %v1159 = vsel %vm621, %v1157, %v1158
      %v1160 = vrot.slane %v1158, 4
      %v1161 = vrot.slane %v1106, 5
      %v1162 = vsel %vm621, %v1160, %v1161
      %v1163 = vrot.slane %v1107, 5
      %v1164 = vrot.slane %v1163, 4
      %v1165 = vrot.slane %v1108, 5
      %v1166 = vsel %vm621, %v1164, %v1165
      %v1167 = vrot.slane %v1165, 4
      %v1168 = vrot.slane %v1109, 5
      %v1169 = vsel %vm621, %v1167, %v1168
      %v1170 = vrot.slane %v1110, 5
      %v1171 = vrot.slane %v1170, 4
      %v1172 = vrot.slane %v1111, 5
      %v1173 = vsel %vm621, %v1171, %v1172
      %v1174 = vrot.slane %v1172, 4
      %v1175 = vrot.slane %v1112, 5
      %v1176 = vsel %vm621, %v1174, %v1175
      %v1177 = vrot.slane %v1113, 5
      %v1178 = vrot.slane %v1177, 4
      %v1179 = vrot.slane %v1114, 5
      %v1180 = vsel %vm621, %v1178, %v1179
      %v1181 = vrot.slane %v1179, 4
      %v1182 = vrot.slane %v1115, 5
      %v1183 = vsel %vm621, %v1181, %v1182
      %v1184 = vrot.slane %v1116, 5
      %v1185 = vrot.slane %v1184, 4
      %v1186 = vrot.slane %v1117, 5
      %v1187 = vsel %vm621, %v1185, %v1186
      %v1188 = vrot.slane %v1186, 4
      %v1189 = vrot.slane %v1118, 5
      %v1190 = vsel %vm621, %v1188, %v1189
      %v1191 = vrot.slane %v1119, 5
      %v1192 = vrot.slane %v1191, 4
      %v1193 = vrot.slane %v1120, 5
      %v1194 = vsel %vm621, %v1192, %v1193
      %v1195 = vrot.slane %v1193, 4
      %v1196 = vrot.slane %v1121, 5
      %v1197 = vsel %vm621, %v1195, %v1196
      %v1198 = vrot.slane %v1122, 5
      %v1199 = vrot.slane %v1198, 4
      %v1200 = vrot.slane %v1123, 5
      %v1201 = vsel %vm621, %v1199, %v1200
      %v1202 = vrot.slane %v1200, 4
      %v1203 = vrot.slane %v1124, 5
      %v1204 = vsel %vm621, %v1202, %v1203
      %v1205 = vunpack.c.l.b16 %v1152
      %v1206 = vunpack.c.l.b16 %v1155
      %v1207 = vunpack.c.l.b16 %v1159
      %v1208 = vunpack.c.l.b16 %v1162
      %v1209 = vunpack.c.l.b16 %v1166
      %v1210 = vunpack.c.l.b16 %v1169
      %v1211 = vunpack.c.l.b16 %v1173
      %v1212 = vunpack.c.l.b16 %v1176
      %v1213 = vunpack.c.l.b16 %v1180
      %v1214 = vunpack.c.l.b16 %v1183
      %v1215 = vunpack.c.l.b16 %v1187
      %v1216 = vunpack.c.l.b16 %v1190
      %v1217 = vunpack.c.l.b16 %v1194
      %v1218 = vunpack.c.l.b16 %v1197
      %v1219 = vunpack.c.l.b16 %v1201
      %v1220 = vunpack.c.l.b16 %v1204
      %v1221 = vpack.c.b16 %v1206, %v1205
      %v1222 = vpack.c.b16 %v1208, %v1207
      %v1223 = vpack.c.b16 %v1210, %v1209
      %v1224 = vpack.c.b16 %v1212, %v1211
      %v1225 = vpack.c.b16 %v1214, %v1213
      %v1226 = vpack.c.b16 %v1216, %v1215
      %v1227 = vpack.c.b16 %v1218, %v1217
      %v1228 = vpack.c.b16 %v1220, %v1219
      %1229 = vrot.lane.b32.xlu0 %v1221, 20
      %v1230 = vpop.permute.xlu0 %1229
      %1231 = vrot.lane.b32.xlu0 %v1222, 20
      %v1232 = vpop.permute.xlu0 %1231
      %1233 = vrot.lane.b32.xlu0 %v1223, 20
      %v1234 = vpop.permute.xlu0 %1233
      %1235 = vrot.lane.b32.xlu0 %v1224, 20
      %v1236 = vpop.permute.xlu0 %1235
      %1237 = vrot.lane.b32.xlu0 %v1225, 20
      %v1238 = vpop.permute.xlu0 %1237
      %1239 = vrot.lane.b32.xlu0 %v1226, 20
      %v1240 = vpop.permute.xlu0 %1239
      %1241 = vrot.lane.b32.xlu0 %v1227, 20
      %v1242 = vpop.permute.xlu0 %1241
      %1243 = vrot.lane.b32.xlu0 %v1228, 20
      %v1244 = vpop.permute.xlu0 %1243
      %vm1253 = vcmask 195744
      %1254 = vst.msk [vmem:[#allocation2] sm:$0xff] %vm1253, %v1230
      %1255 = vst.msk [vmem:[#allocation2 + $0x8] sm:$0xff] %vm1253, %v1232
      %1256 = vst.msk [vmem:[#allocation2 + $0x10] sm:$0xff] %vm1253, %v1234
      %1257 = vst.msk [vmem:[#allocation2 + $0x18] sm:$0xff] %vm1253, %v1236
      %1258 = vst.msk [vmem:[#allocation2 + $0x20] sm:$0xff] %vm1253, %v1238
      %1259 = vst.msk [vmem:[#allocation2 + $0x28] sm:$0xff] %vm1253, %v1240
      %1260 = vst.msk [vmem:[#allocation2 + $0x30] sm:$0xff] %vm1253, %v1242
      %1261 = vst.msk [vmem:[#allocation2 + $0x38] sm:$0xff] %vm1253, %v1244
      %s1262 = sadd.s32 %s218, 2
      %s1263 = smul.u32 %s1262, 3
      %s1264 = smul.addr %s1263, 4
      %s1265 = scalar_lea.vmem %s197, %s1264
      %v1266 = vld [vmem:[%s1265] sm:$0xf]
      %v1267 = vld [vmem:[%s1265 + $0x4] sm:$0xf]
      %v1268 = vld [vmem:[%s1265 + $0xc] sm:$0xf]
      %v1269 = vld [vmem:[%s1265 + $0x10] sm:$0xf]
      %v1270 = vld [vmem:[%s1265 + $0x18] sm:$0xf]
      %v1271 = vld [vmem:[%s1265 + $0x1c] sm:$0xf]
      %v1272 = vld [vmem:[%s1265 + $0x24] sm:$0xf]
      %v1273 = vld [vmem:[%s1265 + $0x28] sm:$0xf]
      %v1274 = vld [vmem:[%s1265 + $0x30] sm:$0xf]
      %v1275 = vld [vmem:[%s1265 + $0x34] sm:$0xf]
      %v1276 = vld [vmem:[%s1265 + $0x3c] sm:$0xf]
      %v1277 = vld [vmem:[%s1265 + $0x40] sm:$0xf]
      %v1278 = vld [vmem:[%s1265 + $0x48] sm:$0xf]
      %v1279 = vld [vmem:[%s1265 + $0x4c] sm:$0xf]
      %v1280 = vld [vmem:[%s1265 + $0x54] sm:$0xf]
      %v1281 = vld [vmem:[%s1265 + $0x58] sm:$0xf]
      %v1298 = vunpack.c.l.b16 %v1266
      %v1299 = vunpack.c.l.b16 %v1267
      %v1300 = vunpack.c.l.b16 %v1268
      %v1301 = vunpack.c.l.b16 %v1269
      %v1302 = vunpack.c.l.b16 %v1270
      %v1303 = vunpack.c.l.b16 %v1271
      %v1304 = vunpack.c.l.b16 %v1272
      %v1305 = vunpack.c.l.b16 %v1273
      %v1306 = vunpack.c.l.b16 %v1274
      %v1307 = vunpack.c.l.b16 %v1275
      %v1308 = vunpack.c.l.b16 %v1276
      %v1309 = vunpack.c.l.b16 %v1277
      %v1310 = vunpack.c.l.b16 %v1278
      %v1311 = vunpack.c.l.b16 %v1279
      %v1312 = vunpack.c.l.b16 %v1280
      %v1313 = vunpack.c.l.b16 %v1281
      %v1314 = vpack.c.b16 %v1299, %v1298
      %v1315 = vpack.c.b16 %v1301, %v1300
      %v1316 = vpack.c.b16 %v1303, %v1302
      %v1317 = vpack.c.b16 %v1305, %v1304
      %v1318 = vpack.c.b16 %v1307, %v1306
      %v1319 = vpack.c.b16 %v1309, %v1308
      %v1320 = vpack.c.b16 %v1311, %v1310
      %v1321 = vpack.c.b16 %v1313, %v1312
      %1322 = vrot.lane.b32.xlu0 %v1314, 24
      %v1323 = vpop.permute.xlu0 %1322
      %1324 = vrot.lane.b32.xlu0 %v1315, 24
      %v1325 = vpop.permute.xlu0 %1324
      %1326 = vrot.lane.b32.xlu0 %v1316, 24
      %v1327 = vpop.permute.xlu0 %1326
      %1328 = vrot.lane.b32.xlu0 %v1317, 24
      %v1329 = vpop.permute.xlu0 %1328
      %1330 = vrot.lane.b32.xlu0 %v1318, 24
      %v1331 = vpop.permute.xlu0 %1330
      %1332 = vrot.lane.b32.xlu0 %v1319, 24
      %v1333 = vpop.permute.xlu0 %1332
      %1334 = vrot.lane.b32.xlu0 %v1320, 24
      %v1335 = vpop.permute.xlu0 %1334
      %1336 = vrot.lane.b32.xlu0 %v1321, 24
      %v1337 = vpop.permute.xlu0 %1336
      %vm1346 = vcmask 228544
      %1347 = vst.msk [vmem:[#allocation2] sm:$0xff] %vm1346, %v1323
      %1348 = vst.msk [vmem:[#allocation2 + $0x8] sm:$0xff] %vm1346, %v1325
      %1349 = vst.msk [vmem:[#allocation2 + $0x10] sm:$0xff] %vm1346, %v1327
      %1350 = vst.msk [vmem:[#allocation2 + $0x18] sm:$0xff] %vm1346, %v1329
      %1351 = vst.msk [vmem:[#allocation2 + $0x20] sm:$0xff] %vm1346, %v1331
      %1352 = vst.msk [vmem:[#allocation2 + $0x28] sm:$0xff] %vm1346, %v1333
      %1353 = vst.msk [vmem:[#allocation2 + $0x30] sm:$0xff] %vm1346, %v1335
      %1354 = vst.msk [vmem:[#allocation2 + $0x38] sm:$0xff] %vm1346, %v1337
      %v1355 = vld [vmem:[%s1265] sm:$0xf]
      %v1356 = vld [vmem:[%s1265 + $0x4] sm:$0xf]
      %v1357 = vld [vmem:[%s1265 + $0x8] sm:$0x1]
      %v1358 = vld [vmem:[%s1265 + $0xc] sm:$0xf]
      %v1359 = vld [vmem:[%s1265 + $0x10] sm:$0xf]
      %v1360 = vld [vmem:[%s1265 + $0x14] sm:$0x1]
      %v1361 = vld [vmem:[%s1265 + $0x18] sm:$0xf]
      %v1362 = vld [vmem:[%s1265 + $0x1c] sm:$0xf]
      %v1363 = vld [vmem:[%s1265 + $0x20] sm:$0x1]
      %v1364 = vld [vmem:[%s1265 + $0x24] sm:$0xf]
      %v1365 = vld [vmem:[%s1265 + $0x28] sm:$0xf]
      %v1366 = vld [vmem:[%s1265 + $0x2c] sm:$0x1]
      %v1367 = vld [vmem:[%s1265 + $0x30] sm:$0xf]
      %v1368 = vld [vmem:[%s1265 + $0x34] sm:$0xf]
      %v1369 = vld [vmem:[%s1265 + $0x38] sm:$0x1]
      %v1370 = vld [vmem:[%s1265 + $0x3c] sm:$0xf]
      %v1371 = vld [vmem:[%s1265 + $0x40] sm:$0xf]
      %v1372 = vld [vmem:[%s1265 + $0x44] sm:$0x1]
      %v1373 = vld [vmem:[%s1265 + $0x48] sm:$0xf]
      %v1374 = vld [vmem:[%s1265 + $0x4c] sm:$0xf]
      %v1375 = vld [vmem:[%s1265 + $0x50] sm:$0x1]
      %v1376 = vld [vmem:[%s1265 + $0x54] sm:$0xf]
      %v1377 = vld [vmem:[%s1265 + $0x58] sm:$0xf]
      %v1378 = vld [vmem:[%s1265 + $0x5c] sm:$0x1]
      %v1380 = vshrl.u32 %v1355, 16
      %v1382 = vrot.slane %v1380, 4
      %v1383 = vshll.u32 %v1355, 16
      %v1385 = vrot.slane %v1383, 5
      %v1386 = vor.u32 %v1382, %v1385
      %v1387 = vrot.slane %v1386, 4
      %v1389 = vshll.u32 %v1356, 16
      %v1391 = vrot.slane %v1389, 5
      %v1392 = vsel %vm321, %v1387, %v1391
      %v1393 = vshrl.u32 %v1356, 16
      %v1395 = vrot.slane %v1393, 4
      %v1396 = vor.u32 %v1395, %v1391
      %v1397 = vrot.slane %v1396, 4
      %v1399 = vshll.u32 %v1357, 16
      %v1401 = vrot.slane %v1399, 5
      %v1402 = vsel %vm321, %v1397, %v1401
      %v1404 = vshrl.u32 %v1358, 16
      %v1406 = vrot.slane %v1404, 4
      %v1407 = vshll.u32 %v1358, 16
      %v1409 = vrot.slane %v1407, 5
      %v1410 = vor.u32 %v1406, %v1409
      %v1411 = vrot.slane %v1410, 4
      %v1413 = vshll.u32 %v1359, 16
      %v1415 = vrot.slane %v1413, 5
      %v1416 = vsel %vm321, %v1411, %v1415
      %v1417 = vshrl.u32 %v1359, 16
      %v1419 = vrot.slane %v1417, 4
      %v1420 = vor.u32 %v1419, %v1415
      %v1421 = vrot.slane %v1420, 4
      %v1423 = vshll.u32 %v1360, 16
      %v1425 = vrot.slane %v1423, 5
      %v1426 = vsel %vm321, %v1421, %v1425
      %v1428 = vshrl.u32 %v1361, 16
      %v1430 = vrot.slane %v1428, 4
      %v1431 = vshll.u32 %v1361, 16
      %v1433 = vrot.slane %v1431, 5
      %v1434 = vor.u32 %v1430, %v1433
      %v1435 = vrot.slane %v1434, 4
      %v1437 = vshll.u32 %v1362, 16
      %v1439 = vrot.slane %v1437, 5
      %v1440 = vsel %vm321, %v1435, %v1439
      %v1441 = vshrl.u32 %v1362, 16
      %v1443 = vrot.slane %v1441, 4
      %v1444 = vor.u32 %v1443, %v1439
      %v1445 = vrot.slane %v1444, 4
      %v1447 = vshll.u32 %v1363, 16
      %v1449 = vrot.slane %v1447, 5
      %v1450 = vsel %vm321, %v1445, %v1449
      %v1452 = vshrl.u32 %v1364, 16
      %v1454 = vrot.slane %v1452, 4
      %v1455 = vshll.u32 %v1364, 16
      %v1457 = vrot.slane %v1455, 5
      %v1458 = vor.u32 %v1454, %v1457
      %v1459 = vrot.slane %v1458, 4
      %v1461 = vshll.u32 %v1365, 16
      %v1463 = vrot.slane %v1461, 5
      %v1464 = vsel %vm321, %v1459, %v1463
      %v1465 = vshrl.u32 %v1365, 16
      %v1467 = vrot.slane %v1465, 4
      %v1468 = vor.u32 %v1467, %v1463
      %v1469 = vrot.slane %v1468, 4
      %v1471 = vshll.u32 %v1366, 16
      %v1473 = vrot.slane %v1471, 5
      %v1474 = vsel %vm321, %v1469, %v1473
      %v1476 = vshrl.u32 %v1367, 16
      %v1478 = vrot.slane %v1476, 4
      %v1479 = vshll.u32 %v1367, 16
      %v1481 = vrot.slane %v1479, 5
      %v1482 = vor.u32 %v1478, %v1481
      %v1483 = vrot.slane %v1482, 4
      %v1485 = vshll.u32 %v1368, 16
      %v1487 = vrot.slane %v1485, 5
      %v1488 = vsel %vm321, %v1483, %v1487
      %v1489 = vshrl.u32 %v1368, 16
      %v1491 = vrot.slane %v1489, 4
      %v1492 = vor.u32 %v1491, %v1487
      %v1493 = vrot.slane %v1492, 4
      %v1495 = vshll.u32 %v1369, 16
      %v1497 = vrot.slane %v1495, 5
      %v1498 = vsel %vm321, %v1493, %v1497
      %v1500 = vshrl.u32 %v1370, 16
      %v1502 = vrot.slane %v1500, 4
      %v1503 = vshll.u32 %v1370, 16
      %v1505 = vrot.slane %v1503, 5
      %v1506 = vor.u32 %v1502, %v1505
      %v1507 = vrot.slane %v1506, 4
      %v1509 = vshll.u32 %v1371, 16
      %v1511 = vrot.slane %v1509, 5
      %v1512 = vsel %vm321, %v1507, %v1511
      %v1513 = vshrl.u32 %v1371, 16
      %v1515 = vrot.slane %v1513, 4
      %v1516 = vor.u32 %v1515, %v1511
      %v1517 = vrot.slane %v1516, 4
      %v1519 = vshll.u32 %v1372, 16
      %v1521 = vrot.slane %v1519, 5
      %v1522 = vsel %vm321, %v1517, %v1521
      %v1524 = vshrl.u32 %v1373, 16
      %v1526 = vrot.slane %v1524, 4
      %v1527 = vshll.u32 %v1373, 16
      %v1529 = vrot.slane %v1527, 5
      %v1530 = vor.u32 %v1526, %v1529
      %v1531 = vrot.slane %v1530, 4
      %v1533 = vshll.u32 %v1374, 16
      %v1535 = vrot.slane %v1533, 5
      %v1536 = vsel %vm321, %v1531, %v1535
      %v1537 = vshrl.u32 %v1374, 16
      %v1539 = vrot.slane %v1537, 4
      %v1540 = vor.u32 %v1539, %v1535
      %v1541 = vrot.slane %v1540, 4
      %v1543 = vshll.u32 %v1375, 16
      %v1545 = vrot.slane %v1543, 5
      %v1546 = vsel %vm321, %v1541, %v1545
      %v1548 = vshrl.u32 %v1376, 16
      %v1550 = vrot.slane %v1548, 4
      %v1551 = vshll.u32 %v1376, 16
      %v1553 = vrot.slane %v1551, 5
      %v1554 = vor.u32 %v1550, %v1553
      %v1555 = vrot.slane %v1554, 4
      %v1557 = vshll.u32 %v1377, 16
      %v1559 = vrot.slane %v1557, 5
      %v1560 = vsel %vm321, %v1555, %v1559
      %v1561 = vshrl.u32 %v1377, 16
      %v1563 = vrot.slane %v1561, 4
      %v1564 = vor.u32 %v1563, %v1559
      %v1565 = vrot.slane %v1564, 4
      %v1567 = vshll.u32 %v1378, 16
      %v1569 = vrot.slane %v1567, 5
      %v1570 = vsel %vm321, %v1565, %v1569
      %v1571 = vunpack.c.l.b16 %v1392
      %v1572 = vunpack.c.l.b16 %v1402
      %v1573 = vunpack.c.l.b16 %v1416
      %v1574 = vunpack.c.l.b16 %v1426
      %v1575 = vunpack.c.l.b16 %v1440
      %v1576 = vunpack.c.l.b16 %v1450
      %v1577 = vunpack.c.l.b16 %v1464
      %v1578 = vunpack.c.l.b16 %v1474
      %v1579 = vunpack.c.l.b16 %v1488
      %v1580 = vunpack.c.l.b16 %v1498
      %v1581 = vunpack.c.l.b16 %v1512
      %v1582 = vunpack.c.l.b16 %v1522
      %v1583 = vunpack.c.l.b16 %v1536
      %v1584 = vunpack.c.l.b16 %v1546
      %v1585 = vunpack.c.l.b16 %v1560
      %v1586 = vunpack.c.l.b16 %v1570
      %v1587 = vpack.c.b16 %v1572, %v1571
      %v1588 = vpack.c.b16 %v1574, %v1573
      %v1589 = vpack.c.b16 %v1576, %v1575
      %v1590 = vpack.c.b16 %v1578, %v1577
      %v1591 = vpack.c.b16 %v1580, %v1579
      %v1592 = vpack.c.b16 %v1582, %v1581
      %v1593 = vpack.c.b16 %v1584, %v1583
      %v1594 = vpack.c.b16 %v1586, %v1585
      %1595 = vrot.lane.b32.xlu0 %v1587, 28
      %v1596 = vpop.permute.xlu0 %1595
      %1597 = vrot.lane.b32.xlu0 %v1588, 28
      %v1598 = vpop.permute.xlu0 %1597
      %1599 = vrot.lane.b32.xlu0 %v1589, 28
      %v1600 = vpop.permute.xlu0 %1599
      %1601 = vrot.lane.b32.xlu0 %v1590, 28
      %v1602 = vpop.permute.xlu0 %1601
      %1603 = vrot.lane.b32.xlu0 %v1591, 28
      %v1604 = vpop.permute.xlu0 %1603
      %1605 = vrot.lane.b32.xlu0 %v1592, 28
      %v1606 = vpop.permute.xlu0 %1605
      %1607 = vrot.lane.b32.xlu0 %v1593, 28
      %v1608 = vpop.permute.xlu0 %1607
      %1609 = vrot.lane.b32.xlu0 %v1594, 28
      %v1610 = vpop.permute.xlu0 %1609
      %vm1619 = vcmask 261344
      %1620 = vst.msk [vmem:[#allocation2] sm:$0xff] %vm1619, %v1596
      %1621 = vst.msk [vmem:[#allocation2 + $0x8] sm:$0xff] %vm1619, %v1598
      %1622 = vst.msk [vmem:[#allocation2 + $0x10] sm:$0xff] %vm1619, %v1600
      %1623 = vst.msk [vmem:[#allocation2 + $0x18] sm:$0xff] %vm1619, %v1602
      %1624 = vst.msk [vmem:[#allocation2 + $0x20] sm:$0xff] %vm1619, %v1604
      %1625 = vst.msk [vmem:[#allocation2 + $0x28] sm:$0xff] %vm1619, %v1606
      %1626 = vst.msk [vmem:[#allocation2 + $0x30] sm:$0xff] %vm1619, %v1608
      %1627 = vst.msk [vmem:[#allocation2 + $0x38] sm:$0xff] %vm1619, %v1610
      %v1628 = vld [vmem:[%s1265] sm:$0xe]
      %v1629 = vld [vmem:[%s1265 + $0x4] sm:$0xf]
      %v1630 = vld [vmem:[%s1265 + $0x8] sm:$0x1]
      %v1631 = vld [vmem:[%s1265 + $0xc] sm:$0xe]
      %v1632 = vld [vmem:[%s1265 + $0x10] sm:$0xf]
      %v1633 = vld [vmem:[%s1265 + $0x14] sm:$0x1]
      %v1634 = vld [vmem:[%s1265 + $0x18] sm:$0xe]
      %v1635 = vld [vmem:[%s1265 + $0x1c] sm:$0xf]
      %v1636 = vld [vmem:[%s1265 + $0x20] sm:$0x1]
      %v1637 = vld [vmem:[%s1265 + $0x24] sm:$0xe]
      %v1638 = vld [vmem:[%s1265 + $0x28] sm:$0xf]
      %v1639 = vld [vmem:[%s1265 + $0x2c] sm:$0x1]
      %v1640 = vld [vmem:[%s1265 + $0x30] sm:$0xe]
      %v1641 = vld [vmem:[%s1265 + $0x34] sm:$0xf]
      %v1642 = vld [vmem:[%s1265 + $0x38] sm:$0x1]
      %v1643 = vld [vmem:[%s1265 + $0x3c] sm:$0xe]
      %v1644 = vld [vmem:[%s1265 + $0x40] sm:$0xf]
      %v1645 = vld [vmem:[%s1265 + $0x44] sm:$0x1]
      %v1646 = vld [vmem:[%s1265 + $0x48] sm:$0xe]
      %v1647 = vld [vmem:[%s1265 + $0x4c] sm:$0xf]
      %v1648 = vld [vmem:[%s1265 + $0x50] sm:$0x1]
      %v1649 = vld [vmem:[%s1265 + $0x54] sm:$0xe]
      %v1650 = vld [vmem:[%s1265 + $0x58] sm:$0xf]
      %v1651 = vld [vmem:[%s1265 + $0x5c] sm:$0x1]
      %v1676 = vrot.slane %v1628, 5
      %v1677 = vrot.slane %v1676, 4
      %v1678 = vrot.slane %v1629, 5
      %v1679 = vsel %vm621, %v1677, %v1678
      %v1680 = vrot.slane %v1678, 4
      %v1681 = vrot.slane %v1630, 5
      %v1682 = vsel %vm621, %v1680, %v1681
      %v1683 = vrot.slane %v1631, 5
      %v1684 = vrot.slane %v1683, 4
      %v1685 = vrot.slane %v1632, 5
      %v1686 = vsel %vm621, %v1684, %v1685
      %v1687 = vrot.slane %v1685, 4
      %v1688 = vrot.slane %v1633, 5
      %v1689 = vsel %vm621, %v1687, %v1688
      %v1690 = vrot.slane %v1634, 5
      %v1691 = vrot.slane %v1690, 4
      %v1692 = vrot.slane %v1635, 5
      %v1693 = vsel %vm621, %v1691, %v1692
      %v1694 = vrot.slane %v1692, 4
      %v1695 = vrot.slane %v1636, 5
      %v1696 = vsel %vm621, %v1694, %v1695
      %v1697 = vrot.slane %v1637, 5
      %v1698 = vrot.slane %v1697, 4
      %v1699 = vrot.slane %v1638, 5
      %v1700 = vsel %vm621, %v1698, %v1699
      %v1701 = vrot.slane %v1699, 4
      %v1702 = vrot.slane %v1639, 5
      %v1703 = vsel %vm621, %v1701, %v1702
      %v1704 = vrot.slane %v1640, 5
      %v1705 = vrot.slane %v1704, 4
      %v1706 = vrot.slane %v1641, 5
      %v1707 = vsel %vm621, %v1705, %v1706
      %v1708 = vrot.slane %v1706, 4
      %v1709 = vrot.slane %v1642, 5
      %v1710 = vsel %vm621, %v1708, %v1709
      %v1711 = vrot.slane %v1643, 5
      %v1712 = vrot.slane %v1711, 4
      %v1713 = vrot.slane %v1644, 5
      %v1714 = vsel %vm621, %v1712, %v1713
      %v1715 = vrot.slane %v1713, 4
      %v1716 = vrot.slane %v1645, 5
      %v1717 = vsel %vm621, %v1715, %v1716
      %v1718 = vrot.slane %v1646, 5
      %v1719 = vrot.slane %v1718, 4
      %v1720 = vrot.slane %v1647, 5
      %v1721 = vsel %vm621, %v1719, %v1720
      %v1722 = vrot.slane %v1720, 4
      %v1723 = vrot.slane %v1648, 5
      %v1724 = vsel %vm621, %v1722, %v1723
      %v1725 = vrot.slane %v1649, 5
      %v1726 = vrot.slane %v1725, 4
      %v1727 = vrot.slane %v1650, 5
      %v1728 = vsel %vm621, %v1726, %v1727
      %v1729 = vrot.slane %v1727, 4
      %v1730 = vrot.slane %v1651, 5
      %v1731 = vsel %vm621, %v1729, %v1730
      %v1732 = vunpack.c.l.b16 %v1679
      %v1733 = vunpack.c.l.b16 %v1682
      %v1734 = vunpack.c.l.b16 %v1686
      %v1735 = vunpack.c.l.b16 %v1689
      %v1736 = vunpack.c.l.b16 %v1693
      %v1737 = vunpack.c.l.b16 %v1696
      %v1738 = vunpack.c.l.b16 %v1700
      %v1739 = vunpack.c.l.b16 %v1703
      %v1740 = vunpack.c.l.b16 %v1707
      %v1741 = vunpack.c.l.b16 %v1710
      %v1742 = vunpack.c.l.b16 %v1714
      %v1743 = vunpack.c.l.b16 %v1717
      %v1744 = vunpack.c.l.b16 %v1721
      %v1745 = vunpack.c.l.b16 %v1724
      %v1746 = vunpack.c.l.b16 %v1728
      %v1747 = vunpack.c.l.b16 %v1731
      %v1748 = vpack.c.b16 %v1733, %v1732
      %v1749 = vpack.c.b16 %v1735, %v1734
      %v1750 = vpack.c.b16 %v1737, %v1736
      %v1751 = vpack.c.b16 %v1739, %v1738
      %v1752 = vpack.c.b16 %v1741, %v1740
      %v1753 = vpack.c.b16 %v1743, %v1742
      %v1754 = vpack.c.b16 %v1745, %v1744
      %v1755 = vpack.c.b16 %v1747, %v1746
      %1756 = vrot.lane.b32.xlu0 %v1748, 32
      %v1757 = vpop.permute.xlu0 %1756
      %1758 = vrot.lane.b32.xlu0 %v1749, 32
      %v1759 = vpop.permute.xlu0 %1758
      %1760 = vrot.lane.b32.xlu0 %v1750, 32
      %v1761 = vpop.permute.xlu0 %1760
      %1762 = vrot.lane.b32.xlu0 %v1751, 32
      %v1763 = vpop.permute.xlu0 %1762
      %1764 = vrot.lane.b32.xlu0 %v1752, 32
      %v1765 = vpop.permute.xlu0 %1764
      %1766 = vrot.lane.b32.xlu0 %v1753, 32
      %v1767 = vpop.permute.xlu0 %1766
      %1768 = vrot.lane.b32.xlu0 %v1754, 32
      %v1769 = vpop.permute.xlu0 %1768
      %1770 = vrot.lane.b32.xlu0 %v1755, 32
      %v1771 = vpop.permute.xlu0 %1770
      %vm1780 = vcmask 294144
      %1781 = vst.msk [vmem:[#allocation2] sm:$0xff] %vm1780, %v1757
      %1782 = vst.msk [vmem:[#allocation2 + $0x8] sm:$0xff] %vm1780, %v1759
      %1783 = vst.msk [vmem:[#allocation2 + $0x10] sm:$0xff] %vm1780, %v1761
      %1784 = vst.msk [vmem:[#allocation2 + $0x18] sm:$0xff] %vm1780, %v1763
      %1785 = vst.msk [vmem:[#allocation2 + $0x20] sm:$0xff] %vm1780, %v1765
      %1786 = vst.msk [vmem:[#allocation2 + $0x28] sm:$0xff] %vm1780, %v1767
      %1787 = vst.msk [vmem:[#allocation2 + $0x30] sm:$0xff] %vm1780, %v1769
      %1788 = vst.msk [vmem:[#allocation2 + $0x38] sm:$0xff] %vm1780, %v1771
      %v1789 = vld [vmem:[#allocation2] sm:$0xff]
      %v1790 = vld [vmem:[#allocation2 + $0x8] sm:$0xff]
      %v1791 = vld [vmem:[#allocation2 + $0x10] sm:$0xff]
      %v1792 = vld [vmem:[#allocation2 + $0x18] sm:$0xff]
      %v1793 = vld [vmem:[#allocation2 + $0x20] sm:$0xff]
      %v1794 = vld [vmem:[#allocation2 + $0x28] sm:$0xff]
      %v1795 = vld [vmem:[#allocation2 + $0x30] sm:$0xff]
      %v1796 = vld [vmem:[#allocation2 + $0x38] sm:$0xff]
      %v1797 = vld [vmem:[%s1] sm:$0xf]
      %v1798 = vld [vmem:[%s1 + $0x4] sm:$0xf]
      %v1799 = vld [vmem:[%s1 + $0x8] sm:$0xf]
      %v1800 = vld [vmem:[%s1 + $0xc] sm:$0xf]
      %v1801 = vld [vmem:[%s1 + $0x10] sm:$0x3]
      %v1807 = vunpack.c.l.b16 %v1797
      %v1808 = vunpack.c.l.b16 %v1798
      %v1809 = vunpack.c.l.b16 %v1799
      %v1810 = vunpack.c.l.b16 %v1800
      %v1811 = vunpack.c.l.b16 %v1801
      %v1812 = vpack.c.b16 %v1808, %v1807
      %v1813 = vpack.c.b16 %v1810, %v1809
      %v1814 = vpack.c.b16 %v1811, %v1811
      %vm1817 = vcmask 293888
      %v1819 = vsel %vm1817, %v1789, 0
      %v1822 = vsel %vm1817, %v1790, 0
      %v1825 = vsel %vm1817, %v1791, 0
      %v1828 = vsel %vm1817, %v1792, 0
      %v1831 = vsel %vm1817, %v1793, 0
      %v1834 = vsel %vm1817, %v1794, 0
      %v1837 = vsel %vm1817, %v1795, 0
      %v1840 = vsel %vm1817, %v1796, 0
      %vm1842 = vcmask 1041408
      %v1844 = vsel %vm1842, %v1814, 0
      %1846 = vmatprep.subr.bf16.mxu0 0
      %1847 = vmatpush1.bf16.msra.mxu0 %v1812
      %1848 = vmatprep.subr.bf16.mxu0 0
      %1849 = vmatpush1.bf16.msra.mxu0 %v1813
      %1850 = vmatprep.subr.bf16.mxu0 0
      %1851 = vmatpush1.bf16.msra.mxu0 %v1844
      %1852 = vmatprep.subr.bf16.mxu0 0
      %1853 = vmatpush1.bf16.msra.mxu0 0
      %1854 = vmatprep.subr.bf16.mxu0 0
      %1855 = vmatpush1.bf16.msra.mxu0 0
      %1856 = vmatprep.subr.bf16.mxu0 0
      %1857 = vmatpush1.bf16.msra.mxu0 0
      %1858 = vmatprep.subr.bf16.mxu0 0
      %1859 = vmatpush1.bf16.msra.mxu0 0
      %1860 = vmatprep.subr.bf16.mxu0 0
      %1861 = vmatpush1.bf16.msra.mxu0 0
      %1862 = vmatprep.subr.bf16.mxu0 0
      %1863 = vmatpush1.bf16.msra.mxu0 0
      %1864 = vmatprep.subr.bf16.mxu0 0
      %1865 = vmatpush1.bf16.msra.mxu0 0
      %1866 = vmatprep.subr.bf16.mxu0 0
      %1867 = vmatpush1.bf16.msra.mxu0 0
      %1868 = vmatprep.subr.bf16.mxu0 0
      %1869 = vmatpush1.bf16.msra.mxu0 0
      %1870 = vmatprep.subr.bf16.mxu0 0
      %1871 = vmatpush1.bf16.msra.mxu0 0
      %1872 = vmatprep.subr.bf16.mxu0 0
      %1873 = vmatpush1.bf16.msra.mxu0 0
      %1874 = vmatprep.subr.bf16.mxu0 0
      %1875 = vmatpush1.bf16.msra.mxu0 0
      %1876 = vmatprep.subr.bf16.mxu0 0
      %1877 = vmatpush1.bf16.msra.mxu0 0
      %1878 = vmatprep.mubr.bf16.mxu0 0
      %1879 = vmatmul.mubr.bf16.gmra.mrb[0].mxu0 %v1819
      %v1880 = vpop.f32.mrb[0].mxu0
      %v1881 = vadd.f32 0.0, %v1880
      %v1882 = vpop.f32.mrb[0].mxu0
      %v1883 = vpop.f32.mrb[0].mxu0
      %v1884 = vadd.f32 0.0, %v1883
      %v1885 = vpop.f32.mrb[0].mxu0
      %1886 = vmatprep.mubr.bf16.mxu0 0
      %1887 = vmatmul.mubr.bf16.gmra.mrb[0].mxu0 %v1822
      %v1888 = vpop.f32.mrb[0].mxu0
      %v1889 = vadd.f32 0.0, %v1888
      %v1890 = vpop.f32.mrb[0].mxu0
      %v1891 = vpop.f32.mrb[0].mxu0
      %v1892 = vadd.f32 0.0, %v1891
      %v1893 = vpop.f32.mrb[0].mxu0
      %1894 = vmatprep.mubr.bf16.mxu0 0
      %1895 = vmatmul.mubr.bf16.gmra.mrb[0].mxu0 %v1825
      %v1896 = vpop.f32.mrb[0].mxu0
      %v1897 = vadd.f32 0.0, %v1896
      %v1898 = vpop.f32.mrb[0].mxu0
      %v1899 = vpop.f32.mrb[0].mxu0
      %v1900 = vadd.f32 0.0, %v1899
      %v1901 = vpop.f32.mrb[0].mxu0
      %1902 = vmatprep.mubr.bf16.mxu0 0
      %1903 = vmatmul.mubr.bf16.gmra.mrb[0].mxu0 %v1828
      %v1904 = vpop.f32.mrb[0].mxu0
      %v1905 = vadd.f32 0.0, %v1904
      %v1906 = vpop.f32.mrb[0].mxu0
      %v1907 = vpop.f32.mrb[0].mxu0
      %v1908 = vadd.f32 0.0, %v1907
      %v1909 = vpop.f32.mrb[0].mxu0
      %1910 = vmatprep.mubr.bf16.mxu0 0
      %1911 = vmatmul.mubr.bf16.gmra.mrb[0].mxu0 %v1831
      %v1912 = vpop.f32.mrb[0].mxu0
      %v1913 = vadd.f32 0.0, %v1912
      %v1914 = vpop.f32.mrb[0].mxu0
      %v1915 = vpop.f32.mrb[0].mxu0
      %v1916 = vadd.f32 0.0, %v1915
      %v1917 = vpop.f32.mrb[0].mxu0
      %1918 = vmatprep.mubr.bf16.mxu0 0
      %1919 = vmatmul.mubr.bf16.gmra.mrb[0].mxu0 %v1834
      %v1920 = vpop.f32.mrb[0].mxu0
      %v1921 = vadd.f32 0.0, %v1920
      %v1922 = vpop.f32.mrb[0].mxu0
      %v1923 = vpop.f32.mrb[0].mxu0
      %v1924 = vadd.f32 0.0, %v1923
      %v1925 = vpop.f32.mrb[0].mxu0
      %1926 = vmatprep.mubr.bf16.mxu0 0
      %1927 = vmatmul.mubr.bf16.gmra.mrb[0].mxu0 %v1837
      %v1928 = vpop.f32.mrb[0].mxu0
      %v1929 = vadd.f32 0.0, %v1928
      %v1930 = vpop.f32.mrb[0].mxu0
      %v1931 = vpop.f32.mrb[0].mxu0
      %v1932 = vadd.f32 0.0, %v1931
      %v1933 = vpop.f32.mrb[0].mxu0
      %1934 = vmatprep.mubr.bf16.mxu0 0
      %1935 = vmatmul.mubr.bf16.gmra.mrb[0].mxu0 %v1840
      %v1936 = vpop.f32.mrb[0].mxu0
      %v1937 = vadd.f32 0.0, %v1936
      %v1938 = vpop.f32.mrb[0].mxu0
      %v1939 = vpop.f32.mrb[0].mxu0
      %v1940 = vadd.f32 0.0, %v1939
      %v1941 = vpop.f32.mrb[0].mxu0
      %1942 = vdwg.mxu0
      %1943 = vst.msk [vmem:[%s207] sm:$0xff] %vm286, %v1881
      %1944 = vst.msk [vmem:[%s207 + $0x8] sm:$0xff] %vm286, %v1884
      %1945 = vst.msk [vmem:[%s207 + $0x10] sm:$0xff] %vm286, %v1889
      %1946 = vst.msk [vmem:[%s207 + $0x18] sm:$0xff] %vm286, %v1892
      %1947 = vst.msk [vmem:[%s207 + $0x20] sm:$0xff] %vm286, %v1897
      %1948 = vst.msk [vmem:[%s207 + $0x28] sm:$0xff] %vm286, %v1900
      %1949 = vst.msk [vmem:[%s207 + $0x30] sm:$0xff] %vm286, %v1905
      %1950 = vst.msk [vmem:[%s207 + $0x38] sm:$0xff] %vm286, %v1908
      %1951 = vst.msk [vmem:[%s207 + $0x40] sm:$0xff] %vm286, %v1913
      %1952 = vst.msk [vmem:[%s207 + $0x48] sm:$0xff] %vm286, %v1916
      %1953 = vst.msk [vmem:[%s207 + $0x50] sm:$0xff] %vm286, %v1921
      %1954 = vst.msk [vmem:[%s207 + $0x58] sm:$0xff] %vm286, %v1924
      %1955 = vst.msk [vmem:[%s207 + $0x60] sm:$0xff] %vm286, %v1929
      %1956 = vst.msk [vmem:[%s207 + $0x68] sm:$0xff] %vm286, %v1932
      %1957 = vst.msk [vmem:[%s207 + $0x70] sm:$0xff] %vm286, %v1937
      %1958 = vst.msk [vmem:[%s207 + $0x78] sm:$0xff] %vm286, %v1940
      %v1959 = vsel %vm286, %v1881, 0.0
      %v1960 = vsel %vm286, %v1884, 0.0
      %v1961 = vadd.f32 %v1959, %v1960
      %v1962 = vsel %vm286, %v1889, 0.0
      %v1963 = vadd.f32 %v1961, %v1962
      %v1964 = vsel %vm286, %v1892, 0.0
      %v1965 = vadd.f32 %v1963, %v1964
      %v1966 = vsel %vm286, %v1897, 0.0
      %v1967 = vadd.f32 %v1965, %v1966
      %v1968 = vsel %vm286, %v1900, 0.0
      %v1969 = vadd.f32 %v1967, %v1968
      %v1970 = vsel %vm286, %v1905, 0.0
      %v1971 = vadd.f32 %v1969, %v1970
      %v1972 = vsel %vm286, %v1908, 0.0
      %v1973 = vadd.f32 %v1971, %v1972
      %v1974 = vsel %vm286, %v1913, 0.0
      %v1975 = vadd.f32 %v1973, %v1974
      %v1976 = vsel %vm286, %v1916, 0.0
      %v1977 = vadd.f32 %v1975, %v1976
      %v1978 = vsel %vm286, %v1921, 0.0
      %v1979 = vadd.f32 %v1977, %v1978
      %v1980 = vsel %vm286, %v1924, 0.0
      %v1981 = vadd.f32 %v1979, %v1980
      %v1982 = vsel %vm286, %v1929, 0.0
      %v1983 = vadd.f32 %v1981, %v1982
      %v1984 = vsel %vm286, %v1932, 0.0
      %v1985 = vadd.f32 %v1983, %v1984
      %v1986 = vsel %vm286, %v1937, 0.0
      %v1987 = vadd.f32 %v1985, %v1986
      %v1988 = vsel %vm286, %v1940, 0.0
      %v1989 = vadd.f32 %v1987, %v1988
      %v1990 = vrot.slane %v1989, 4
      %v1991 = vadd.f32 %v1989, %v1990
      %v1992 = vrot.slane %v1991, 2
      %v1993 = vadd.f32 %v1991, %v1992
      %v1994 = vrot.slane %v1993, 1
      %v1995 = vadd.f32 %v1993, %v1994
      %vm1996 = vcmask 24576
      %1997 = vst.msk [vmem:[%s216] sm:$0x1] %vm1996, %v1995
      %v1998 = vmul.f32 %v1881, %v1881
      %v1999 = vmul.f32 %v1884, %v1884
      %v2000 = vmul.f32 %v1889, %v1889
      %v2001 = vmul.f32 %v1892, %v1892
      %v2002 = vmul.f32 %v1897, %v1897
      %v2003 = vmul.f32 %v1900, %v1900
      %v2004 = vmul.f32 %v1905, %v1905
      %v2005 = vmul.f32 %v1908, %v1908
      %v2006 = vmul.f32 %v1913, %v1913
      %v2007 = vmul.f32 %v1916, %v1916
      %v2008 = vmul.f32 %v1921, %v1921
      %v2009 = vmul.f32 %v1924, %v1924
      %v2010 = vmul.f32 %v1929, %v1929
      %v2011 = vmul.f32 %v1932, %v1932
      %v2012 = vmul.f32 %v1937, %v1937
      %v2013 = vmul.f32 %v1940, %v1940
      %v2014 = vsel %vm286, %v1998, 0.0
      %v2015 = vsel %vm286, %v1999, 0.0
      %v2016 = vadd.f32 %v2014, %v2015
      %v2017 = vsel %vm286, %v2000, 0.0
      %v2018 = vadd.f32 %v2016, %v2017
      %v2019 = vsel %vm286, %v2001, 0.0
      %v2020 = vadd.f32 %v2018, %v2019
      %v2021 = vsel %vm286, %v2002, 0.0
      %v2022 = vadd.f32 %v2020, %v2021
      %v2023 = vsel %vm286, %v2003, 0.0
      %v2024 = vadd.f32 %v2022, %v2023
      %v2025 = vsel %vm286, %v2004, 0.0
      %v2026 = vadd.f32 %v2024, %v2025
      %v2027 = vsel %vm286, %v2005, 0.0
      %v2028 = vadd.f32 %v2026, %v2027
      %v2029 = vsel %vm286, %v2006, 0.0
      %v2030 = vadd.f32 %v2028, %v2029
      %v2031 = vsel %vm286, %v2007, 0.0
      %v2032 = vadd.f32 %v2030, %v2031
      %v2033 = vsel %vm286, %v2008, 0.0
      %v2034 = vadd.f32 %v2032, %v2033
      %v2035 = vsel %vm286, %v2009, 0.0
      %v2036 = vadd.f32 %v2034, %v2035
      %v2037 = vsel %vm286, %v2010, 0.0
      %v2038 = vadd.f32 %v2036, %v2037
      %v2039 = vsel %vm286, %v2011, 0.0
      %v2040 = vadd.f32 %v2038, %v2039
      %v2041 = vsel %vm286, %v2012, 0.0
      %v2042 = vadd.f32 %v2040, %v2041
      %v2043 = vsel %vm286, %v2013, 0.0
      %v2044 = vadd.f32 %v2042, %v2043
      %v2045 = vrot.slane %v2044, 4
      %v2046 = vadd.f32 %v2044, %v2045
      %v2047 = vrot.slane %v2046, 2
      %v2048 = vadd.f32 %v2046, %v2047
      %v2049 = vrot.slane %v2048, 1
      %v2050 = vadd.f32 %v2048, %v2049
      %2051 = vst.msk [vmem:[%s216 + $0x1] sm:$0x1] %vm1996, %v2050
      %s2052 = smul.u32 8, %s20
      %p2053 = scmp.lt.s32.totalorder %s19, 1
      %s2054 = scalar_select %p2053, %s19, 1
      %p2055 = scmp.lt.s32.totalorder %s2052, 15
      %s2056 = scalar_select %p2055, %s2052, 15
      %s2057 = smul.addr %s2056, 2
      %s2058 = smul.addr %s2054, 32
      %s2059 = sadd.s32 %s2057, %s2058
      %s2060 = smul.addr %s2059, 8
      %s2061 = scalar_lea.vmem %s2, %s2060
      %p2062 = scmp.lt.s32.totalorder %s19, 1
      %s2063 = scalar_select %p2062, %s19, 1
      %p2064 = scmp.lt.s32.totalorder %s20, 1
      %s2065 = scalar_select %p2064, %s20, 1
      %s2066 = smul.addr %s2063, 2
      %s2067 = sadd.s32 %s2065, %s2066
      %s2068 = smul.addr %s2067, 2
      %s2069 = scalar_lea.vmem %s3, %s2068
      // Predicated region
      $region29: #{basic_block.3} parent=27 // pred_check
        %p2070 = pneg %p94
      $region30: #{basic_block.3} parent=27 // pred_check_branch
        %2072 = sbr.rel (%p2070) target = $region32
      $region31: #{basic_block.3} parent=27 // pred_region
        %s2073 = smul.u32 8, %s20
      $region32: #{basic_block.3} parent=27 // pred_fallthru
        _
      // Predicated region
      $region33: #{basic_block.3} parent=27 // pred_check
        %p2074 = pneg %p122
      $region34: #{basic_block.3} parent=27 // pred_check_branch
        %2076 = sbr.rel (%p2074) target = $region36
      $region35: #{basic_block.3} parent=27 // pred_region
        _
      $region36: #{basic_block.3} parent=27 // pred_fallthru
        _
    $region28: #{basic_block.3} parent=5 // pred_fallthru
      _
    %p2077 = scmp.le.s32.totalorder 2, %s10
    // Predicated region
    $region37: #{basic_block.3} parent=5 // pred_check
      %p2078 = pneg %p2077
    $region38: #{basic_block.3} parent=5 // pred_check_branch
      %2080 = sbr.rel (%p2078) target = $region40
    $region39: #{basic_block.3} parent=5 // pred_region
      %s2081 = ssub.s32 %s10, 2
      // Predicated region
      $region41: #{basic_block.3} parent=39 // pred_check
        %p2082 = pneg %p100
      $region42: #{basic_block.3} parent=39 // pred_check_branch
        %2084 = sbr.rel (%p2082) target = $region44
      $region43: #{basic_block.3} parent=39 // pred_region
        %s2085 = smul.u32 8, %s22
        %p2086 = scmp.lt.s32.totalorder %s21, 1
        %s2087 = scalar_select %p2086, %s21, 1
        %p2088 = scmp.lt.s32.totalorder %s2085, 15
        %s2089 = scalar_select %p2088, %s2085, 15
        %s2090 = smul.addr %s2089, 2
        %s2091 = smul.addr %s2087, 32
        %s2092 = sadd.s32 %s2090, %s2091
        %s2093 = smul.addr %s2092, 8
        %s2094 = scalar_lea.vmem %s2, %s2093
      $region44: #{basic_block.3} parent=39 // pred_fallthru
        _
      // Predicated region
      $region45: #{basic_block.3} parent=39 // pred_check
        %p2095 = pneg %p128
      $region46: #{basic_block.3} parent=39 // pred_check_branch
        %2097 = sbr.rel (%p2095) target = $region48
      $region47: #{basic_block.3} parent=39 // pred_region
        %p2098 = scmp.lt.s32.totalorder %s21, 1
        %s2099 = scalar_select %p2098, %s21, 1
        %p2100 = scmp.lt.s32.totalorder %s22, 1
        %s2101 = scalar_select %p2100, %s22, 1
        %s2102 = smul.addr %s2099, 2
        %s2103 = sadd.s32 %s2101, %s2102
        %s2104 = smul.addr %s2103, 2
        %s2105 = scalar_lea.vmem %s3, %s2104
      $region48: #{basic_block.3} parent=39 // pred_fallthru
        _
    $region40: #{basic_block.3} parent=5 // pred_fallthru
      _
  $region6: #{basic_block.3} parent=0 // loop_footer
    %s14 = sadd.s32 1, %s10
  $region7: #{basic_block.3} parent=0 // loop_footer_branch
    %9 = sbr.rel target = $region3
  $region8: #{basic_block.3} parent=0 // loop_exit
    _

// kernel: basic_block.4
$region0: #{basic_block.4}
  #allocation0 [shape = 'u32[]', space=smem, size = 0x4, offset = 0x4, fixed_abs, tag = 'smem constant byte address 0x4 - core index']
  #allocation1 [shape = 'u32[144,128]{1,0:T(1,128)}', space=vmem, size = 0x12000, scoped, tag = 'internal scratch']
  #allocation2 [shape = 'bf16[10,18,4]{2,1,0:T(8,128)(2,1)}', space=vmem, size = 0xf000, scoped, tag = 'scratch operand']
  #allocation3 [shape = 'bf16[128,36]{1,0:T(16,128)(2,1)}', space=vmem, size = 0x8000, scoped, tag = 'scratch operand']
  %s0 = inlined_call_operand.vmem [shape: f32[2,16,16,4], index: 0, kind: input, shape index: {}]
  %s1 = inlined_call_operand.vmem [shape: f32[1,1,4], index: 1, kind: input, shape index: {}]
  %s2 = inlined_call_operand.vmem [shape: f32[1,1,4], index: 2, kind: input, shape index: {}]
  %s3 = inlined_call_operand.vmem [shape: bf16[36,4], index: 3, kind: input, shape index: {}]
  %s4 = inlined_call_operand.vmem [shape: f32[2,16,16,4], index: 4, kind: output, shape index: {0}]
  %s5 = inlined_call_operand.vmem [shape: f32[2,2,2,4], index: 5, kind: output, shape index: {1}]
  %6 = xla_tuple %s4, %s5
  %s7 = sld [smem:[#allocation0]]
  $region57: #{basic_block.4} parent=0
    _
  %s9 = ssub.s32 1, %s7
  %s10 = scalar_select 0, %s9, %s7
  loop: start=0, step=1, limit=6
  $region2: #{basic_block.4} parent=0 // loop_pre_header
    _
  $region3: #{basic_block.4} parent=0 // loop_header
    %s12 = sphi 0, %s16
    %p13 = scmp.ge.s32.totalorder %s12, 6
    %s19 = sphi 0, %s31
    %s20 = sphi 0, %s27
    %s21 = sphi 0, %s19
    %s22 = sphi 0, %s20
    %s23 = sphi 0, %s21
    %s24 = sphi 0, %s22
    %s34 = sphi 0, %s36
    %s37 = sphi 0, %s34
    %s38 = sphi 0, %s37
    %s54 = sphi 0, %s38
    %s58 = sphi 0, %s58
    %s60 = sphi 0, %s58
    %s61 = sphi 0, %s60
    %s75 = sphi 0, %s61
    %s79 = sphi 0, %s79
    %s81 = sphi 0, %s79
    %s82 = sphi 0, %s81
    %s96 = sphi 0, %s82
    %s100 = sphi 0, %s100
    %s102 = sphi 0, %s100
    %s103 = sphi 0, %s102
    %s117 = sphi 0, %s103
    %s125 = sphi 0, %s127
    %s128 = sphi 0, %s125
    %s129 = sphi 0, %s128
    %s145 = sphi 0, %s129
    %s153 = sphi 0, %s155
    %s156 = sphi 0, %s153
    %s157 = sphi 0, %s156
    %s173 = sphi 0, %s157
  $region4: #{basic_block.4} parent=0 // loop_header_branch
    %15 = sbr.rel (%p13) target = $region8
  $region5: #{basic_block.4} parent=0 // loop_body
    %s17 = ssub.s32 %s12, 1
    %s18 = ssub.s32 %s12, 2
    %s25 = sadd.s32 1, %s20
    %p26 = scmp.ge.s32.totalorder %s25, 2
    %s27 = scalar_select %p26, 0, %s25
    %s28 = sadd.s32 1, %s19
    %s29 = scalar_select %p26, %s28, %s19
    %p30 = scmp.ge.s32.totalorder %s29, 2
    %s31 = scalar_select %p30, 0, %s29
    %s32 = ssub.s32 %s19, %s31
    %p33 = scmp.eq.s32.totalorder %s32, 0
    %s35 = sadd.s32 %s34, 1
    %s36 = scalar_select %p33, %s34, %s35
    %p39 = pneg %p33
    %p40 = scmp.eq.s32.totalorder %s12, 3
    %p41 = por %p39, %p40
    %p42 = scmp.ne.s32.totalorder %s34, %s37
    %p43 = scmp.eq.s32.totalorder %s12, 0
    %p44 = por %p42, %p43
    %p45 = scmp.ne.s32.totalorder %s34, %s37
    %p46 = scmp.eq.s32.totalorder %s17, 3
    %p47 = por %p45, %p46
    %p48 = scmp.ne.s32.totalorder %s37, %s38
    %p49 = scmp.eq.s32.totalorder %s17, 0
    %p50 = por %p48, %p49
    %p51 = scmp.ne.s32.totalorder %s37, %s38
    %p52 = scmp.eq.s32.totalorder %s18, 3
    %p53 = por %p51, %p52
    %p55 = scmp.ne.s32.totalorder %s38, %s54
    %p56 = scmp.eq.s32.totalorder %s18, 0
    %p57 = por %p55, %p56
    %s59 = sadd.s32 %s58, 1
    %p62 = scmp.eq.s32.totalorder %s12, 3
    %p63 = scmp.ne.s32.totalorder %s58, %s60
    %p64 = scmp.eq.s32.totalorder %s12, 0
    %p65 = por %p63, %p64
    %p66 = scmp.ne.s32.totalorder %s58, %s60
    %p67 = scmp.eq.s32.totalorder %s17, 3
    %p68 = por %p66, %p67
    %p69 = scmp.ne.s32.totalorder %s60, %s61
    %p70 = scmp.eq.s32.totalorder %s17, 0
    %p71 = por %p69, %p70
    %p72 = scmp.ne.s32.totalorder %s60, %s61
    %p73 = scmp.eq.s32.totalorder %s18, 3
    %p74 = por %p72, %p73
    %p76 = scmp.ne.s32.totalorder %s61, %s75
    %p77 = scmp.eq.s32.totalorder %s18, 0
    %p78 = por %p76, %p77
    %s80 = sadd.s32 %s79, 1
    %p83 = scmp.eq.s32.totalorder %s12, 3
    %p84 = scmp.ne.s32.totalorder %s79, %s81
    %p85 = scmp.eq.s32.totalorder %s12, 0
    %p86 = por %p84, %p85
    %p87 = scmp.ne.s32.totalorder %s79, %s81
    %p88 = scmp.eq.s32.totalorder %s17, 3
    %p89 = por %p87, %p88
    %p90 = scmp.ne.s32.totalorder %s81, %s82
    %p91 = scmp.eq.s32.totalorder %s17, 0
    %p92 = por %p90, %p91
    %p93 = scmp.ne.s32.totalorder %s81, %s82
    %p94 = scmp.eq.s32.totalorder %s18, 3
    %p95 = por %p93, %p94
    %p97 = scmp.ne.s32.totalorder %s82, %s96
    %p98 = scmp.eq.s32.totalorder %s18, 0
    %p99 = por %p97, %p98
    %s101 = sadd.s32 %s100, 1
    %p104 = scmp.eq.s32.totalorder %s12, 3
    %p105 = scmp.ne.s32.totalorder %s100, %s102
    %p106 = scmp.eq.s32.totalorder %s12, 0
    %p107 = por %p105, %p106
    %p108 = scmp.ne.s32.totalorder %s100, %s102
    %p109 = scmp.eq.s32.totalorder %s17, 3
    %p110 = por %p108, %p109
    %p111 = scmp.ne.s32.totalorder %s102, %s103
    %p112 = scmp.eq.s32.totalorder %s17, 0
    %p113 = por %p111, %p112
    %p114 = scmp.ne.s32.totalorder %s102, %s103
    %p115 = scmp.eq.s32.totalorder %s18, 3
    %p116 = por %p114, %p115
    %p118 = scmp.ne.s32.totalorder %s103, %s117
    %p119 = scmp.eq.s32.totalorder %s18, 0
    %p120 = por %p118, %p119
    %s121 = ssub.s32 %s19, %s31
    %s122 = ssub.s32 %s20, %s27
    %s123 = sor.u32 %s121, %s122
    %p124 = scmp.eq.s32.totalorder %s123, 0
    %s126 = sadd.s32 %s125, 1
    %s127 = scalar_select %p124, %s125, %s126
    %p130 = pneg %p124
    %p131 = scmp.eq.s32.totalorder %s12, 3
    %p132 = por %p130, %p131
    %p133 = scmp.ne.s32.totalorder %s125, %s128
    %p134 = scmp.eq.s32.totalorder %s12, 0
    %p135 = por %p133, %p134
    %p136 = scmp.ne.s32.totalorder %s125, %s128
    %p137 = scmp.eq.s32.totalorder %s17, 3
    %p138 = por %p136, %p137
    %p139 = scmp.ne.s32.totalorder %s128, %s129
    %p140 = scmp.eq.s32.totalorder %s17, 0
    %p141 = por %p139, %p140
    %p142 = scmp.ne.s32.totalorder %s128, %s129
    %p143 = scmp.eq.s32.totalorder %s18, 3
    %p144 = por %p142, %p143
    %p146 = scmp.ne.s32.totalorder %s129, %s145
    %p147 = scmp.eq.s32.totalorder %s18, 0
    %p148 = por %p146, %p147
    %s149 = ssub.s32 %s19, %s31
    %s150 = ssub.s32 %s20, %s27
    %s151 = sor.u32 %s149, %s150
    %p152 = scmp.eq.s32.totalorder %s151, 0
    %s154 = sadd.s32 %s153, 1
    %s155 = scalar_select %p152, %s153, %s154
    %p158 = pneg %p152
    %p159 = scmp.eq.s32.totalorder %s12, 3
    %p160 = por %p158, %p159
    %p161 = scmp.ne.s32.totalorder %s153, %s156
    %p162 = scmp.eq.s32.totalorder %s12, 0
    %p163 = por %p161, %p162
    %p164 = scmp.ne.s32.totalorder %s153, %s156
    %p165 = scmp.eq.s32.totalorder %s17, 3
    %p166 = por %p164, %p165
    %p167 = scmp.ne.s32.totalorder %s156, %s157
    %p168 = scmp.eq.s32.totalorder %s17, 0
    %p169 = por %p167, %p168
    %p170 = scmp.ne.s32.totalorder %s156, %s157
    %p171 = scmp.eq.s32.totalorder %s18, 3
    %p172 = por %p170, %p171
    %p174 = scmp.ne.s32.totalorder %s157, %s173
    %p175 = scmp.eq.s32.totalorder %s18, 0
    %p176 = por %p174, %p175
    %p177 = scmp.le.s32.totalorder 1, %s12
    %p178 = scmp.lt.s32.totalorder %s12, 5
    %p179 = pnand %p177, %p178
    %p180 = pneg %p179
    // Predicated region
    $region9: #{basic_block.4} parent=5 // pred_check
      _
    $region10: #{basic_block.4} parent=5 // pred_check_branch
      %182 = sbr.rel (%p179) target = $region12
    $region11: #{basic_block.4} parent=5 // pred_region
      %s183 = ssub.s32 %s12, 1
      // Predicated region
      $region13: #{basic_block.4} parent=11 // pred_check
        %p184 = pneg %p71
      $region14: #{basic_block.4} parent=11 // pred_check_branch
        %186 = sbr.rel (%p184) target = $region16
      $region15: #{basic_block.4} parent=11 // pred_region
        _
      $region16: #{basic_block.4} parent=11 // pred_fallthru
        _
      // Predicated region
      $region17: #{basic_block.4} parent=11 // pred_check
        %p187 = pneg %p92
      $region18: #{basic_block.4} parent=11 // pred_check_branch
        %189 = sbr.rel (%p187) target = $region20
      $region19: #{basic_block.4} parent=11 // pred_region
        _
      $region20: #{basic_block.4} parent=11 // pred_fallthru
        _
      // Predicated region
      $region21: #{basic_block.4} parent=11 // pred_check
        %p190 = pneg %p113
      $region22: #{basic_block.4} parent=11 // pred_check_branch
        %192 = sbr.rel (%p190) target = $region24
      $region23: #{basic_block.4} parent=11 // pred_region
        _
      $region24: #{basic_block.4} parent=11 // pred_fallthru
        _
    $region12: #{basic_block.4} parent=5 // pred_fallthru
      _
    %p193 = scmp.lt.s32.totalorder %s12, 4
    // Predicated region
    $region25: #{basic_block.4} parent=5 // pred_check
      %p194 = pneg %p193
    $region26: #{basic_block.4} parent=5 // pred_check_branch
      %196 = sbr.rel (%p194) target = $region28
    $region27: #{basic_block.4} parent=5 // pred_region
      // Predicated region
      $region29: #{basic_block.4} parent=27 // pred_check
        %p197 = pneg %p44
      $region30: #{basic_block.4} parent=27 // pred_check_branch
        %199 = sbr.rel (%p197) target = $region32
      $region31: #{basic_block.4} parent=27 // pred_region
        %p200 = scmp.lt.s32.totalorder %s19, 1
        %s201 = scalar_select %p200, %s19, 1
        %s202 = smul.addr %s201, 32
        %s203 = smul.addr %s202, 8
        %s204 = scalar_lea.vmem %s0, %s203
      $region32: #{basic_block.4} parent=27 // pred_fallthru
        _
    $region28: #{basic_block.4} parent=5 // pred_fallthru
      _
    %p205 = scmp.le.s32.totalorder 1, %s12
    %p206 = scmp.lt.s32.totalorder %s12, 5
    %p207 = pnand %p205, %p206
    %p208 = pneg %p207
    // Predicated region
    $region33: #{basic_block.4} parent=5 // pred_check
      _
    $region34: #{basic_block.4} parent=5 // pred_check_branch
      %210 = sbr.rel (%p207) target = $region36
    $region35: #{basic_block.4} parent=5 // pred_region
      %s211 = ssub.s32 %s12, 1
      %p212 = scmp.lt.s32.totalorder %s21, 1
      %s213 = scalar_select %p212, %s21, 1
      %s214 = smul.addr %s213, 32
      %s215 = smul.addr %s214, 8
      %s216 = scalar_lea.vmem %s0, %s215
      %p217 = pneg %p50
      %p218 = pneg %p47
      %p219 = pneg %p71
      %p220 = pneg %p68
      %p221 = pneg %p92
      %p222 = pneg %p89
      %p223 = pneg %p113
      %p224 = pneg %p110
      %p225 = pneg %p141
      %p226 = pneg %p138
      %s227 = smul.u32 8, %s22
      %p228 = scmp.lt.s32.totalorder %s21, 1
      %s229 = scalar_select %p228, %s21, 1
      %p230 = scmp.lt.s32.totalorder %s227, 15
      %s231 = scalar_select %p230, %s227, 15
      %s232 = smul.addr %s231, 2
      %s233 = smul.addr %s229, 32
      %s234 = sadd.s32 %s232, %s233
      %s235 = smul.addr %s234, 8
      %s236 = scalar_lea.vmem %s4, %s235
      %p237 = pneg %p169
      %p238 = pneg %p166
      %p239 = scmp.lt.s32.totalorder %s21, 1
      %s240 = scalar_select %p239, %s21, 1
      %p241 = scmp.lt.s32.totalorder %s22, 1
      %s242 = scalar_select %p241, %s22, 1
      %s243 = smul.addr %s240, 2
      %s244 = sadd.s32 %s242, %s243
      %s245 = smul.addr %s244, 2
      %s246 = scalar_lea.vmem %s5, %s245
      %p247 = scmp.lt.s32.totalorder %s21, 1
      %s248 = scalar_select %p247, %s21, 1
      %s249 = smul.addr %s248, 32
      %s250 = smul.addr %s249, 8
      %s251 = scalar_lea.vmem %s0, %s250
      %s252 = smul.u32 8, %s22
      %p253 = scmp.lt.s32.totalorder %s21, 1
      %s254 = scalar_select %p253, %s21, 1
      %p255 = scmp.lt.s32.totalorder %s252, 15
      %s256 = scalar_select %p255, %s252, 15
      %s257 = smul.addr %s256, 2
      %s258 = smul.addr %s254, 32
      %s259 = sadd.s32 %s257, %s258
      %s260 = smul.addr %s259, 8
      %s261 = scalar_lea.vmem %s4, %s260
      %s262 = smul.u32 8, %s22
      %p263 = scmp.lt.s32.totalorder %s21, 1
      %s264 = scalar_select %p263, %s21, 1
      %p265 = scmp.lt.s32.totalorder %s22, 1
      %s266 = scalar_select %p265, %s22, 1
      %s267 = smul.addr %s264, 2
      %s268 = sadd.s32 %s266, %s267
      %s269 = smul.addr %s268, 2
      %s270 = scalar_lea.vmem %s5, %s269
      %s272 = smul.u32 %s22, 8
      %v273 = vld [vmem:[%s1] sm:$0x1]
      %v274 = vld [vmem:[%s2] sm:$0x1]
      %s275 = smul.u32 %s272, 16
      %s276 = scalar_lea.vmem %s251, %s275
      %v277 = vld [vmem:[%s276] sm:$0xff]
      %v278 = vld [vmem:[%s276 + $0x8] sm:$0xff]
      %v279 = vld [vmem:[%s276 + $0x10] sm:$0xff]
      %v280 = vld [vmem:[%s276 + $0x18] sm:$0xff]
      %v281 = vld [vmem:[%s276 + $0x20] sm:$0xff]
      %v282 = vld [vmem:[%s276 + $0x28] sm:$0xff]
      %v283 = vld [vmem:[%s276 + $0x30] sm:$0xff]
      %v284 = vld [vmem:[%s276 + $0x38] sm:$0xff]
      %v285 = vld [vmem:[%s276 + $0x40] sm:$0xff]
      %v286 = vld [vmem:[%s276 + $0x48] sm:$0xff]
      %v287 = vld [vmem:[%s276 + $0x50] sm:$0xff]
      %v288 = vld [vmem:[%s276 + $0x58] sm:$0xff]
      %v289 = vld [vmem:[%s276 + $0x60] sm:$0xff]
      %v290 = vld [vmem:[%s276 + $0x68] sm:$0xff]
      %v291 = vld [vmem:[%s276 + $0x70] sm:$0xff]
      %v292 = vld [vmem:[%s276 + $0x78] sm:$0xff]
      %v294 = vlaneseq
      %v295 = vshrl.u32 %v294, 7
      %v296 = vsub.s32 0, %v295
      %v297 = vrot.slane %v273, %v296
      %v299 = vmul.f32 %v277, %v297
      %v300 = vmul.f32 %v278, %v297
      %v301 = vmul.f32 %v279, %v297
      %v302 = vmul.f32 %v280, %v297
      %v303 = vmul.f32 %v281, %v297
      %v304 = vmul.f32 %v282, %v297
      %v305 = vmul.f32 %v283, %v297
      %v306 = vmul.f32 %v284, %v297
      %v307 = vmul.f32 %v285, %v297
      %v308 = vmul.f32 %v286, %v297
      %v309 = vmul.f32 %v287, %v297
      %v310 = vmul.f32 %v288, %v297
      %v311 = vmul.f32 %v289, %v297
      %v312 = vmul.f32 %v290, %v297
      %v313 = vmul.f32 %v291, %v297
      %v314 = vmul.f32 %v292, %v297
      %v316 = vlaneseq
      %v317 = vshrl.u32 %v316, 7
      %v318 = vsub.s32 0, %v317
      %v319 = vrot.slane %v274, %v318
      %v321 = vadd.f32 %v299, %v319
      %v322 = vadd.f32 %v300, %v319
      %v323 = vadd.f32 %v301, %v319
      %v324 = vadd.f32 %v302, %v319
      %v325 = vadd.f32 %v303, %v319
      %v326 = vadd.f32 %v304, %v319
      %v327 = vadd.f32 %v305, %v319
      %v328 = vadd.f32 %v306, %v319
      %v329 = vadd.f32 %v307, %v319
      %v330 = vadd.f32 %v308, %v319
      %v331 = vadd.f32 %v309, %v319
      %v332 = vadd.f32 %v310, %v319
      %v333 = vadd.f32 %v311, %v319
      %v334 = vadd.f32 %v312, %v319
      %v335 = vadd.f32 %v313, %v319
      %v336 = vadd.f32 %v314, %v319
      %v337 = vmax.f32 %v321, 0.0
      %v338 = vmax.f32 %v322, 0.0
      %v339 = vmax.f32 %v323, 0.0
      %v340 = vmax.f32 %v324, 0.0
      %v341 = vmax.f32 %v325, 0.0
      %v342 = vmax.f32 %v326, 0.0
      %v343 = vmax.f32 %v327, 0.0
      %v344 = vmax.f32 %v328, 0.0
      %v345 = vmax.f32 %v329, 0.0
      %v346 = vmax.f32 %v330, 0.0
      %v347 = vmax.f32 %v331, 0.0
      %v348 = vmax.f32 %v332, 0.0
      %v349 = vmax.f32 %v333, 0.0
      %v350 = vmax.f32 %v334, 0.0
      %v351 = vmax.f32 %v335, 0.0
      %v352 = vmax.f32 %v336, 0.0
      %s353 = ssub.s32 %s272, 1
      %p354 = scmp.gt.s32.totalorder %s353, 0
      %s355 = scalar_select %p354, %s353, 0
      %s356 = sadd.s32 %s272, 8
      %p357 = scmp.lt.s32.totalorder %s356, 15
      %s358 = scalar_select %p357, %s356, 15
      %p359 = scmp.gt.s32.totalorder %s22, 0
      %s360 = scalar_select %p359, 1.0, 0.0
      %p361 = scmp.lt.s32.totalorder %s22, 1
      %s362 = scalar_select %p361, 1.0, 0.0
      %s363 = smul.u32 %s355, 16
      %s364 = scalar_lea.vmem %s251, %s363
      %v365 = vld [vmem:[%s364] sm:$0xff]
      %v366 = vld [vmem:[%s364 + $0x8] sm:$0xff]
      %v367 = vmul.f32 %v365, %v297
      %v368 = vmul.f32 %v366, %v297
      %v369 = vadd.f32 %v367, %v319
      %v370 = vadd.f32 %v368, %v319
      %v371 = vmax.f32 %v369, 0.0
      %v372 = vmax.f32 %v370, 0.0
      %v373 = vstv %s360
      %v374 = vmul.f32 %v371, %v373
      %v375 = vmul.f32 %v372, %v373
      %s376 = smul.u32 %s358, 16
      %s377 = scalar_lea.vmem %s251, %s376
      %v378 = vld [vmem:[%s377] sm:$0xff]
      %v379 = vld [vmem:[%s377 + $0x8] sm:$0xff]
      %v380 = vmul.f32 %v378, %v297
      %v381 = vmul.f32 %v379, %v297
      %v382 = vadd.f32 %v380, %v319
      %v383 = vadd.f32 %v381, %v319
      %v384 = vmax.f32 %v382, 0.0
      %v385 = vmax.f32 %v383, 0.0
      %v386 = vstv %s362
      %v387 = vmul.f32 %v384, %v386
      %v388 = vmul.f32 %v385, %v386
      %vm389 = vcmask 24576
      %vm390 = vsmask.f32 256
      %vm391 = vmand %vm389, %vm390
      %v392 = vld [vmem:[#allocation2] sm:$0x1]
      %v393 = vsel %vm391, 0, %v392
      %394 = vst [vmem:[#allocation2] sm:$0x1] %v393
      %v395 = vld [vmem:[#allocation2 + $0xc] sm:$0x1]
      %v396 = vsel %vm391, 0, %v395
      %397 = vst [vmem:[#allocation2 + $0xc] sm:$0x1] %v396
      %v398 = vld [vmem:[#allocation2 + $0x18] sm:$0x1]
      %v399 = vsel %vm391, 0, %v398
      %400 = vst [vmem:[#allocation2 + $0x18] sm:$0x1] %v399
      %v401 = vld [vmem:[#allocation2 + $0x24] sm:$0x1]
      %v402 = vsel %vm391, 0, %v401
      %403 = vst [vmem:[#allocation2 + $0x24] sm:$0x1] %v402
      %v404 = vld [vmem:[#allocation2 + $0x30] sm:$0x1]
      %v405 = vsel %vm391, 0, %v404
      %406 = vst [vmem:[#allocation2 + $0x30] sm:$0x1] %v405
      %v407 = vld [vmem:[#allocation2 + $0x3c] sm:$0x1]
      %v408 = vsel %vm391, 0, %v407
      %409 = vst [vmem:[#allocation2 + $0x3c] sm:$0x1] %v408
      %v410 = vld [vmem:[#allocation2 + $0x48] sm:$0x1]
      %v411 = vsel %vm391, 0, %v410
      %412 = vst [vmem:[#allocation2 + $0x48] sm:$0x1] %v411
      %v413 = vld [vmem:[#allocation2 + $0x54] sm:$0x1]
      %v414 = vsel %vm391, 0, %v413
      %415 = vst [vmem:[#allocation2 + $0x54] sm:$0x1] %v414
      %v416 = vld [vmem:[#allocation2 + $0x60] sm:$0x1]
      %v417 = vsel %vm391, 0, %v416
      %418 = vst [vmem:[#allocation2 + $0x60] sm:$0x1] %v417
      %v419 = vld [vmem:[#allocation2 + $0x6c] sm:$0x1]
      %v420 = vsel %vm391, 0, %v419
      %421 = vst [vmem:[#allocation2 + $0x6c] sm:$0x1] %v420
      %vm422 = vsmask.f32 7938
      %vm423 = vmand %vm389, %vm422
      %v424 = vld [vmem:[#allocation2 + $0x8] sm:$0x1]
      %v425 = vsel %vm423, 0, %v424
      %426 = vst [vmem:[#allocation2 + $0x8] sm:$0x1] %v425
      %v427 = vld [vmem:[#allocation2 + $0x14] sm:$0x1]
      %v428 = vsel %vm423, 0, %v427
      %429 = vst [vmem:[#allocation2 + $0x14] sm:$0x1] %v428
      %v430 = vld [vmem:[#allocation2 + $0x20] sm:$0x1]
      %v431 = vsel %vm423, 0, %v430
      %432 = vst [vmem:[#allocation2 + $0x20] sm:$0x1] %v431
      %v433 = vld [vmem:[#allocation2 + $0x2c] sm:$0x1]
      %v434 = vsel %vm423, 0, %v433
      %435 = vst [vmem:[#allocation2 + $0x2c] sm:$0x1] %v434
      %v436 = vld [vmem:[#allocation2 + $0x38] sm:$0x1]
      %v437 = vsel %vm423, 0, %v436
      %438 = vst [vmem:[#allocation2 + $0x38] sm:$0x1] %v437
      %v439 = vld [vmem:[#allocation2 + $0x44] sm:$0x1]
      %v440 = vsel %vm423, 0, %v439
      %441 = vst [vmem:[#allocation2 + $0x44] sm:$0x1] %v440
      %v442 = vld [vmem:[#allocation2 + $0x50] sm:$0x1]
      %v443 = vsel %vm423, 0, %v442
      %444 = vst [vmem:[#allocation2 + $0x50] sm:$0x1] %v443
      %v445 = vld [vmem:[#allocation2 + $0x5c] sm:$0x1]
      %v446 = vsel %vm423, 0, %v445
      %447 = vst [vmem:[#allocation2 + $0x5c] sm:$0x1] %v446
      %v448 = vld [vmem:[#allocation2 + $0x68] sm:$0x1]
      %v449 = vsel %vm423, 0, %v448
      %450 = vst [vmem:[#allocation2 + $0x68] sm:$0x1] %v449
      %v451 = vld [vmem:[#allocation2 + $0x74] sm:$0x1]
      %v452 = vsel %vm423, 0, %v451
      %453 = vst [vmem:[#allocation2 + $0x74] sm:$0x1] %v452
      %v454 = vpack.c.bf16 %v375, %v374
      %v456 = vunpack.c.l.b16 %v454
      %v457 = vunpack.c.h.b16 %v454
      %v458 = vpack.c.b16 %v456, %v456
      %v459 = vpack.c.b16 %v457, %v457
      %vm460 = vsmask.f32 4368
      %vm461 = vmor %vm390, %vm460
      %v463 = vshrl.u32 %v458, 16
      %v465 = vrot.slane %v463, 7
      %v466 = vshll.u32 %v458, 16
      %v468 = vor.u32 %v465, %v466
      %v469 = vrot.slane %v465, 4
      %v471 = vshrl.u32 %v459, 16
      %v473 = vrot.slane %v471, 7
      %v474 = vshll.u32 %v459, 16
      %v476 = vor.u32 %v473, %v474
      %v477 = vsel %vm461, %v469, %v476
      %v478 = vrot.slane %v473, 4
      %vm482 = vcmask 27648
      %vm483 = vmand %vm482, %vm422
      %v484 = vld [vmem:[#allocation2] sm:$0xf]
      %v485 = vsel %vm483, %v468, %v484
      %486 = vst [vmem:[#allocation2] sm:$0xf] %v485
      %vm487 = vcmask 27648
      %488 = vst.msk [vmem:[#allocation2 + $0x4] sm:$0xf] %vm487, %v477
      %v489 = vld [vmem:[#allocation2 + $0x8] sm:$0x1]
      %v490 = vsel %vm391, %v478, %v489
      %491 = vst [vmem:[#allocation2 + $0x8] sm:$0x1] %v490
      %v492 = vpack.c.bf16 %v338, %v337
      %v493 = vpack.c.bf16 %v340, %v339
      %v494 = vpack.c.bf16 %v342, %v341
      %v495 = vpack.c.bf16 %v344, %v343
      %v496 = vpack.c.bf16 %v346, %v345
      %v497 = vpack.c.bf16 %v348, %v347
      %v498 = vpack.c.bf16 %v350, %v349
      %v499 = vpack.c.bf16 %v352, %v351
      %v508 = vunpack.c.l.b16 %v492
      %v509 = vunpack.c.h.b16 %v492
      %v510 = vunpack.c.l.b16 %v493
      %v511 = vunpack.c.h.b16 %v493
      %v512 = vunpack.c.l.b16 %v494
      %v513 = vunpack.c.h.b16 %v494
      %v514 = vunpack.c.l.b16 %v495
      %v515 = vunpack.c.h.b16 %v495
      %v516 = vunpack.c.l.b16 %v496
      %v517 = vunpack.c.h.b16 %v496
      %v518 = vunpack.c.l.b16 %v497
      %v519 = vunpack.c.h.b16 %v497
      %v520 = vunpack.c.l.b16 %v498
      %v521 = vunpack.c.h.b16 %v498
      %v522 = vunpack.c.l.b16 %v499
      %v523 = vunpack.c.h.b16 %v499
      %v524 = vpack.c.b16 %v508, %v508
      %v525 = vpack.c.b16 %v509, %v509
      %v526 = vpack.c.b16 %v510, %v510
      %v527 = vpack.c.b16 %v511, %v511
      %v528 = vpack.c.b16 %v512, %v512
      %v529 = vpack.c.b16 %v513, %v513
      %v530 = vpack.c.b16 %v514, %v514
      %v531 = vpack.c.b16 %v515, %v515
      %v532 = vpack.c.b16 %v516, %v516
      %v533 = vpack.c.b16 %v517, %v517
      %v534 = vpack.c.b16 %v518, %v518
      %v535 = vpack.c.b16 %v519, %v519
      %v536 = vpack.c.b16 %v520, %v520
      %v537 = vpack.c.b16 %v521, %v521
      %v538 = vpack.c.b16 %v522, %v522
      %v539 = vpack.c.b16 %v523, %v523
      %v541 = vshrl.u32 %v524, 16
      %v543 = vrot.slane %v541, 7
      %v544 = vshll.u32 %v524, 16
      %v546 = vor.u32 %v543, %v544
      %v547 = vrot.slane %v543, 4
      %v549 = vshrl.u32 %v525, 16
      %v551 = vrot.slane %v549, 7
      %v552 = vshll.u32 %v525, 16
      %v554 = vor.u32 %v551, %v552
      %v555 = vsel %vm461, %v547, %v554
      %v556 = vrot.slane %v551, 4
      %v558 = vshrl.u32 %v526, 16
      %v560 = vrot.slane %v558, 7
      %v561 = vshll.u32 %v526, 16
      %v563 = vor.u32 %v560, %v561
      %v564 = vrot.slane %v560, 4
      %v566 = vshrl.u32 %v527, 16
      %v568 = vrot.slane %v566, 7
      %v569 = vshll.u32 %v527, 16
      %v571 = vor.u32 %v568, %v569
      %v572 = vsel %vm461, %v564, %v571
      %v573 = vrot.slane %v568, 4
      %v575 = vshrl.u32 %v528, 16
      %v577 = vrot.slane %v575, 7
      %v578 = vshll.u32 %v528, 16
      %v580 = vor.u32 %v577, %v578
      %v581 = vrot.slane %v577, 4
      %v583 = vshrl.u32 %v529, 16
      %v585 = vrot.slane %v583, 7
      %v586 = vshll.u32 %v529, 16
      %v588 = vor.u32 %v585, %v586
      %v589 = vsel %vm461, %v581, %v588
      %v590 = vrot.slane %v585, 4
      %v592 = vshrl.u32 %v530, 16
      %v594 = vrot.slane %v592, 7
      %v595 = vshll.u32 %v530, 16
      %v597 = vor.u32 %v594, %v595
      %v598 = vrot.slane %v594, 4
      %v600 = vshrl.u32 %v531, 16
      %v602 = vrot.slane %v600, 7
      %v603 = vshll.u32 %v531, 16
      %v605 = vor.u32 %v602, %v603
      %v606 = vsel %vm461, %v598, %v605
      %v607 = vrot.slane %v602, 4
      %v609 = vshrl.u32 %v532, 16
      %v611 = vrot.slane %v609, 7
      %v612 = vshll.u32 %v532, 16
      %v614 = vor.u32 %v611, %v612
      %v615 = vrot.slane %v611, 4
      %v617 = vshrl.u32 %v533, 16
      %v619 = vrot.slane %v617, 7
      %v620 = vshll.u32 %v533, 16
      %v622 = vor.u32 %v619, %v620
      %v623 = vsel %vm461, %v615, %v622
      %v624 = vrot.slane %v619, 4
      %v626 = vshrl.u32 %v534, 16
      %v628 = vrot.slane %v626, 7
      %v629 = vshll.u32 %v534, 16
      %v631 = vor.u32 %v628, %v629
      %v632 = vrot.slane %v628, 4
      %v634 = vshrl.u32 %v535, 16
      %v636 = vrot.slane %v634, 7
      %v637 = vshll.u32 %v535, 16
      %v639 = vor.u32 %v636, %v637
      %v640 = vsel %vm461, %v632, %v639
      %v641 = vrot.slane %v636, 4
      %v643 = vshrl.u32 %v536, 16
      %v645 = vrot.slane %v643, 7
      %v646 = vshll.u32 %v536, 16
      %v648 = vor.u32 %v645, %v646
      %v649 = vrot.slane %v645, 4
      %v651 = vshrl.u32 %v537, 16
      %v653 = vrot.slane %v651, 7
      %v654 = vshll.u32 %v537, 16
      %v656 = vor.u32 %v653, %v654
      %v657 = vsel %vm461, %v649, %v656
      %v658 = vrot.slane %v653, 4
      %v660 = vshrl.u32 %v538, 16
      %v662 = vrot.slane %v660, 7
      %v663 = vshll.u32 %v538, 16
      %v665 = vor.u32 %v662, %v663
      %v666 = vrot.slane %v662, 4
      %v668 = vshrl.u32 %v539, 16
      %v670 = vrot.slane %v668, 7
      %v671 = vshll.u32 %v539, 16
      %v673 = vor.u32 %v670, %v671
      %v674 = vsel %vm461, %v666, %v673
      %v675 = vrot.slane %v670, 4
      %s700 = scalar_lea.vmem [#allocation2], 12
      %v701 = vld [vmem:[%s700] sm:$0xf]
      %v702 = vsel %vm483, %v546, %v701
      %703 = vst [vmem:[%s700] sm:$0xf] %v702
      %704 = vst.msk [vmem:[%s700 + $0x4] sm:$0xf] %vm487, %v555
      %v705 = vld [vmem:[%s700 + $0x8] sm:$0x1]
      %v706 = vsel %vm391, %v556, %v705
      %707 = vst [vmem:[%s700 + $0x8] sm:$0x1] %v706
      %v708 = vld [vmem:[%s700 + $0xc] sm:$0xf]
      %v709 = vsel %vm483, %v563, %v708
      %710 = vst [vmem:[%s700 + $0xc] sm:$0xf] %v709
      %711 = vst.msk [vmem:[%s700 + $0x10] sm:$0xf] %vm487, %v572
      %v712 = vld [vmem:[%s700 + $0x14] sm:$0x1]
      %v713 = vsel %vm391, %v573, %v712
      %714 = vst [vmem:[%s700 + $0x14] sm:$0x1] %v713
      %v715 = vld [vmem:[%s700 + $0x18] sm:$0xf]
      %v716 = vsel %vm483, %v580, %v715
      %717 = vst [vmem:[%s700 + $0x18] sm:$0xf] %v716
      %718 = vst.msk [vmem:[%s700 + $0x1c] sm:$0xf] %vm487, %v589
      %v719 = vld [vmem:[%s700 + $0x20] sm:$0x1]
      %v720 = vsel %vm391, %v590, %v719
      %721 = vst [vmem:[%s700 + $0x20] sm:$0x1] %v720
      %v722 = vld [vmem:[%s700 + $0x24] sm:$0xf]
      %v723 = vsel %vm483, %v597, %v722
      %724 = vst [vmem:[%s700 + $0x24] sm:$0xf] %v723
      %725 = vst.msk [vmem:[%s700 + $0x28] sm:$0xf] %vm487, %v606
      %v726 = vld [vmem:[%s700 + $0x2c] sm:$0x1]
      %v727 = vsel %vm391, %v607, %v726
      %728 = vst [vmem:[%s700 + $0x2c] sm:$0x1] %v727
      %v729 = vld [vmem:[%s700 + $0x30] sm:$0xf]
      %v730 = vsel %vm483, %v614, %v729
      %731 = vst [vmem:[%s700 + $0x30] sm:$0xf] %v730
      %732 = vst.msk [vmem:[%s700 + $0x34] sm:$0xf] %vm487, %v623
      %v733 = vld [vmem:[%s700 + $0x38] sm:$0x1]
      %v734 = vsel %vm391, %v624, %v733
      %735 = vst [vmem:[%s700 + $0x38] sm:$0x1] %v734
      %v736 = vld [vmem:[%s700 + $0x3c] sm:$0xf]
      %v737 = vsel %vm483, %v631, %v736
      %738 = vst [vmem:[%s700 + $0x3c] sm:$0xf] %v737
      %739 = vst.msk [vmem:[%s700 + $0x40] sm:$0xf] %vm487, %v640
      %v740 = vld [vmem:[%s700 + $0x44] sm:$0x1]
      %v741 = vsel %vm391, %v641, %v740
      %742 = vst [vmem:[%s700 + $0x44] sm:$0x1] %v741
      %v743 = vld [vmem:[%s700 + $0x48] sm:$0xf]
      %v744 = vsel %vm483, %v648, %v743
      %745 = vst [vmem:[%s700 + $0x48] sm:$0xf] %v744
      %746 = vst.msk [vmem:[%s700 + $0x4c] sm:$0xf] %vm487, %v657
      %v747 = vld [vmem:[%s700 + $0x50] sm:$0x1]
      %v748 = vsel %vm391, %v658, %v747
      %749 = vst [vmem:[%s700 + $0x50] sm:$0x1] %v748
      %v750 = vld [vmem:[%s700 + $0x54] sm:$0xf]
      %v751 = vsel %vm483, %v665, %v750
      %752 = vst [vmem:[%s700 + $0x54] sm:$0xf] %v751
      %753 = vst.msk [vmem:[%s700 + $0x58] sm:$0xf] %vm487, %v674
      %v754 = vld [vmem:[%s700 + $0x5c] sm:$0x1]
      %v755 = vsel %vm391, %v675, %v754
      %756 = vst [vmem:[%s700 + $0x5c] sm:$0x1] %v755
      %v757 = vpack.c.bf16 %v388, %v387
      %v759 = vunpack.c.l.b16 %v757
      %v760 = vunpack.c.h.b16 %v757
      %v761 = vpack.c.b16 %v759, %v759
      %v762 = vpack.c.b16 %v760, %v760
      %v764 = vshrl.u32 %v761, 16
      %v766 = vrot.slane %v764, 7
      %v767 = vshll.u32 %v761, 16
      %v769 = vor.u32 %v766, %v767
      %v770 = vrot.slane %v766, 4
      %v772 = vshrl.u32 %v762, 16
      %v774 = vrot.slane %v772, 7
      %v775 = vshll.u32 %v762, 16
      %v777 = vor.u32 %v774, %v775
      %v778 = vsel %vm461, %v770, %v777
      %v779 = vrot.slane %v774, 4
      %s783 = scalar_lea.vmem [#allocation2], 108
      %v784 = vld [vmem:[%s783] sm:$0xf]
      %v785 = vsel %vm483, %v769, %v784
      %786 = vst [vmem:[%s783] sm:$0xf] %v785
      %787 = vst.msk [vmem:[%s783 + $0x4] sm:$0xf] %vm487, %v778
      %v788 = vld [vmem:[%s783 + $0x8] sm:$0x1]
      %v789 = vsel %vm391, %v779, %v788
      %790 = vst [vmem:[%s783 + $0x8] sm:$0x1] %v789
      %v791 = vld [vmem:[#allocation2] sm:$0xf]
      %v792 = vld [vmem:[#allocation2 + $0x4] sm:$0xf]
      %v793 = vld [vmem:[#allocation2 + $0xc] sm:$0xf]
      %v794 = vld [vmem:[#allocation2 + $0x10] sm:$0xf]
      %v795 = vld [vmem:[#allocation2 + $0x18] sm:$0xf]
      %v796 = vld [vmem:[#allocation2 + $0x1c] sm:$0xf]
      %v797 = vld [vmem:[#allocation2 + $0x24] sm:$0xf]
      %v798 = vld [vmem:[#allocation2 + $0x28] sm:$0xf]
      %v799 = vld [vmem:[#allocation2 + $0x30] sm:$0xf]
      %v800 = vld [vmem:[#allocation2 + $0x34] sm:$0xf]
      %v801 = vld [vmem:[#allocation2 + $0x3c] sm:$0xf]
      %v802 = vld [vmem:[#allocation2 + $0x40] sm:$0xf]
      %v803 = vld [vmem:[#allocation2 + $0x48] sm:$0xf]
      %v804 = vld [vmem:[#allocation2 + $0x4c] sm:$0xf]
      %v805 = vld [vmem:[#allocation2 + $0x54] sm:$0xf]
      %v806 = vld [vmem:[#allocation2 + $0x58] sm:$0xf]
      %v823 = vunpack.c.l.b16 %v791
      %v824 = vunpack.c.l.b16 %v792
      %v825 = vunpack.c.l.b16 %v793
      %v826 = vunpack.c.l.b16 %v794
      %v827 = vunpack.c.l.b16 %v795
      %v828 = vunpack.c.l.b16 %v796
      %v829 = vunpack.c.l.b16 %v797
      %v830 = vunpack.c.l.b16 %v798
      %v831 = vunpack.c.l.b16 %v799
      %v832 = vunpack.c.l.b16 %v800
      %v833 = vunpack.c.l.b16 %v801
      %v834 = vunpack.c.l.b16 %v802
      %v835 = vunpack.c.l.b16 %v803
      %v836 = vunpack.c.l.b16 %v804
      %v837 = vunpack.c.l.b16 %v805
      %v838 = vunpack.c.l.b16 %v806
      %v839 = vpack.c.b16 %v824, %v823
      %v840 = vpack.c.b16 %v826, %v825
      %v841 = vpack.c.b16 %v828, %v827
      %v842 = vpack.c.b16 %v830, %v829
      %v843 = vpack.c.b16 %v832, %v831
      %v844 = vpack.c.b16 %v834, %v833
      %v845 = vpack.c.b16 %v836, %v835
      %v846 = vpack.c.b16 %v838, %v837
      %vm855 = vcmask 31744
      %856 = vst.msk [vmem:[#allocation3] sm:$0xff] %vm855, %v839
      %857 = vst.msk [vmem:[#allocation3 + $0x8] sm:$0xff] %vm855, %v840
      %858 = vst.msk [vmem:[#allocation3 + $0x10] sm:$0xff] %vm855, %v841
      %859 = vst.msk [vmem:[#allocation3 + $0x18] sm:$0xff] %vm855, %v842
      %860 = vst.msk [vmem:[#allocation3 + $0x20] sm:$0xff] %vm855, %v843
      %861 = vst.msk [vmem:[#allocation3 + $0x28] sm:$0xff] %vm855, %v844
      %862 = vst.msk [vmem:[#allocation3 + $0x30] sm:$0xff] %vm855, %v845
      %863 = vst.msk [vmem:[#allocation3 + $0x38] sm:$0xff] %vm855, %v846
      %v864 = vld [vmem:[#allocation2] sm:$0xf]
      %v865 = vld [vmem:[#allocation2 + $0x4] sm:$0xf]
      %v866 = vld [vmem:[#allocation2 + $0x8] sm:$0x1]
      %v867 = vld [vmem:[#allocation2 + $0xc] sm:$0xf]
      %v868 = vld [vmem:[#allocation2 + $0x10] sm:$0xf]
      %v869 = vld [vmem:[#allocation2 + $0x14] sm:$0x1]
      %v870 = vld [vmem:[#allocation2 + $0x18] sm:$0xf]
      %v871 = vld [vmem:[#allocation2 + $0x1c] sm:$0xf]
      %v872 = vld [vmem:[#allocation2 + $0x20] sm:$0x1]
      %v873 = vld [vmem:[#allocation2 + $0x24] sm:$0xf]
      %v874 = vld [vmem:[#allocation2 + $0x28] sm:$0xf]
      %v875 = vld [vmem:[#allocation2 + $0x2c] sm:$0x1]
      %v876 = vld [vmem:[#allocation2 + $0x30] sm:$0xf]
      %v877 = vld [vmem:[#allocation2 + $0x34] sm:$0xf]
      %v878 = vld [vmem:[#allocation2 + $0x38] sm:$0x1]
      %v879 = vld [vmem:[#allocation2 + $0x3c] sm:$0xf]
      %v880 = vld [vmem:[#allocation2 + $0x40] sm:$0xf]
      %v881 = vld [vmem:[#allocation2 + $0x44] sm:$0x1]
      %v882 = vld [vmem:[#allocation2 + $0x48] sm:$0xf]
      %v883 = vld [vmem:[#allocation2 + $0x4c] sm:$0xf]
      %v884 = vld [vmem:[#allocation2 + $0x50] sm:$0x1]
      %v885 = vld [vmem:[#allocation2 + $0x54] sm:$0xf]
      %v886 = vld [vmem:[#allocation2 + $0x58] sm:$0xf]
      %v887 = vld [vmem:[#allocation2 + $0x5c] sm:$0x1]
      %vm888 = vsmask.f32 3328
      %vm889 = vsmask.f32 7440
      %vm890 = vmor %vm888, %vm889
      %v892 = vshrl.u32 %v864, 16
      %v894 = vrot.slane %v892, 4
      %v895 = vshll.u32 %v864, 16
      %v897 = vrot.slane %v895, 5
      %v898 = vor.u32 %v894, %v897
      %v899 = vrot.slane %v898, 4
      %v901 = vshll.u32 %v865, 16
      %v903 = vrot.slane %v901, 5
      %v904 = vsel %vm890, %v899, %v903
      %v905 = vshrl.u32 %v865, 16
      %v907 = vrot.slane %v905, 4
      %v908 = vor.u32 %v907, %v903
      %v909 = vrot.slane %v908, 4
      %v911 = vshll.u32 %v866, 16
      %v913 = vrot.slane %v911, 5
      %v914 = vsel %vm890, %v909, %v913
      %v916 = vshrl.u32 %v867, 16
      %v918 = vrot.slane %v916, 4
      %v919 = vshll.u32 %v867, 16
      %v921 = vrot.slane %v919, 5
      %v922 = vor.u32 %v918, %v921
      %v923 = vrot.slane %v922, 4
      %v925 = vshll.u32 %v868, 16
      %v927 = vrot.slane %v925, 5
      %v928 = vsel %vm890, %v923, %v927
      %v929 = vshrl.u32 %v868, 16
      %v931 = vrot.slane %v929, 4
      %v932 = vor.u32 %v931, %v927
      %v933 = vrot.slane %v932, 4
      %v935 = vshll.u32 %v869, 16
      %v937 = vrot.slane %v935, 5
      %v938 = vsel %vm890, %v933, %v937
      %v940 = vshrl.u32 %v870, 16
      %v942 = vrot.slane %v940, 4
      %v943 = vshll.u32 %v870, 16
      %v945 = vrot.slane %v943, 5
      %v946 = vor.u32 %v942, %v945
      %v947 = vrot.slane %v946, 4
      %v949 = vshll.u32 %v871, 16
      %v951 = vrot.slane %v949, 5
      %v952 = vsel %vm890, %v947, %v951
      %v953 = vshrl.u32 %v871, 16
      %v955 = vrot.slane %v953, 4
      %v956 = vor.u32 %v955, %v951
      %v957 = vrot.slane %v956, 4
      %v959 = vshll.u32 %v872, 16
      %v961 = vrot.slane %v959, 5
      %v962 = vsel %vm890, %v957, %v961
      %v964 = vshrl.u32 %v873, 16
      %v966 = vrot.slane %v964, 4
      %v967 = vshll.u32 %v873, 16
      %v969 = vrot.slane %v967, 5
      %v970 = vor.u32 %v966, %v969
      %v971 = vrot.slane %v970, 4
      %v973 = vshll.u32 %v874, 16
      %v975 = vrot.slane %v973, 5
      %v976 = vsel %vm890, %v971, %v975
      %v977 = vshrl.u32 %v874, 16
      %v979 = vrot.slane %v977, 4
      %v980 = vor.u32 %v979, %v975
      %v981 = vrot.slane %v980, 4
      %v983 = vshll.u32 %v875, 16
      %v985 = vrot.slane %v983, 5
      %v986 = vsel %vm890, %v981, %v985
      %v988 = vshrl.u32 %v876, 16
      %v990 = vrot.slane %v988, 4
      %v991 = vshll.u32 %v876, 16
      %v993 = vrot.slane %v991, 5
      %v994 = vor.u32 %v990, %v993
      %v995 = vrot.slane %v994, 4
      %v997 = vshll.u32 %v877, 16
      %v999 = vrot.slane %v997, 5
      %v1000 = vsel %vm890, %v995, %v999
      %v1001 = vshrl.u32 %v877, 16
      %v1003 = vrot.slane %v1001, 4
      %v1004 = vor.u32 %v1003, %v999
      %v1005 = vrot.slane %v1004, 4
      %v1007 = vshll.u32 %v878, 16
      %v1009 = vrot.slane %v1007, 5
      %v1010 = vsel %vm890, %v1005, %v1009
      %v1012 = vshrl.u32 %v879, 16
      %v1014 = vrot.slane %v1012, 4
      %v1015 = vshll.u32 %v879, 16
      %v1017 = vrot.slane %v1015, 5
      %v1018 = vor.u32 %v1014, %v1017
      %v1019 = vrot.slane %v1018, 4
      %v1021 = vshll.u32 %v880, 16
      %v1023 = vrot.slane %v1021, 5
      %v1024 = vsel %vm890, %v1019, %v1023
      %v1025 = vshrl.u32 %v880, 16
      %v1027 = vrot.slane %v1025, 4
      %v1028 = vor.u32 %v1027, %v1023
      %v1029 = vrot.slane %v1028, 4
      %v1031 = vshll.u32 %v881, 16
      %v1033 = vrot.slane %v1031, 5
      %v1034 = vsel %vm890, %v1029, %v1033
      %v1036 = vshrl.u32 %v882, 16
      %v1038 = vrot.slane %v1036, 4
      %v1039 = vshll.u32 %v882, 16
      %v1041 = vrot.slane %v1039, 5
      %v1042 = vor.u32 %v1038, %v1041
      %v1043 = vrot.slane %v1042, 4
      %v1045 = vshll.u32 %v883, 16
      %v1047 = vrot.slane %v1045, 5
      %v1048 = vsel %vm890, %v1043, %v1047
      %v1049 = vshrl.u32 %v883, 16
      %v1051 = vrot.slane %v1049, 4
      %v1052 = vor.u32 %v1051, %v1047
      %v1053 = vrot.slane %v1052, 4
      %v1055 = vshll.u32 %v884, 16
      %v1057 = vrot.slane %v1055, 5
      %v1058 = vsel %vm890, %v1053, %v1057
      %v1060 = vshrl.u32 %v885, 16
      %v1062 = vrot.slane %v1060, 4
      %v1063 = vshll.u32 %v885, 16
      %v1065 = vrot.slane %v1063, 5
      %v1066 = vor.u32 %v1062, %v1065
      %v1067 = vrot.slane %v1066, 4
      %v1069 = vshll.u32 %v886, 16
      %v1071 = vrot.slane %v1069, 5
      %v1072 = vsel %vm890, %v1067, %v1071
      %v1073 = vshrl.u32 %v886, 16
      %v1075 = vrot.slane %v1073, 4
      %v1076 = vor.u32 %v1075, %v1071
      %v1077 = vrot.slane %v1076, 4
      %v1079 = vshll.u32 %v887, 16
      %v1081 = vrot.slane %v1079, 5
      %v1082 = vsel %vm890, %v1077, %v1081
      %v1083 = vunpack.c.l.b16 %v904
      %v1084 = vunpack.c.l.b16 %v914
      %v1085 = vunpack.c.l.b16 %v928
      %v1086 = vunpack.c.l.b16 %v938
      %v1087 = vunpack.c.l.b16 %v952
      %v1088 = vunpack.c.l.b16 %v962
      %v1089 = vunpack.c.l.b16 %v976
      %v1090 = vunpack.c.l.b16 %v986
      %v1091 = vunpack.c.l.b16 %v1000
      %v1092 = vunpack.c.l.b16 %v1010
      %v1093 = vunpack.c.l.b16 %v1024
      %v1094 = vunpack.c.l.b16 %v1034
      %v1095 = vunpack.c.l.b16 %v1048
      %v1096 = vunpack.c.l.b16 %v1058
      %v1097 = vunpack.c.l.b16 %v1072
      %v1098 = vunpack.c.l.b16 %v1082
      %v1099 = vpack.c.b16 %v1084, %v1083
      %v1100 = vpack.c.b16 %v1086, %v1085
      %v1101 = vpack.c.b16 %v1088, %v1087
      %v1102 = vpack.c.b16 %v1090, %v1089
      %v1103 = vpack.c.b16 %v1092, %v1091
      %v1104 = vpack.c.b16 %v1094, %v1093
      %v1105 = vpack.c.b16 %v1096, %v1095
      %v1106 = vpack.c.b16 %v1098, %v1097
      %1107 = vrot.lane.b32.xlu0 %v1099, 4
      %v1108 = vpop.permute.xlu0 %1107
      %1109 = vrot.lane.b32.xlu0 %v1100, 4
      %v1110 = vpop.permute.xlu0 %1109
      %1111 = vrot.lane.b32.xlu0 %v1101, 4
      %v1112 = vpop.permute.xlu0 %1111
      %1113 = vrot.lane.b32.xlu0 %v1102, 4
      %v1114 = vpop.permute.xlu0 %1113
      %1115 = vrot.lane.b32.xlu0 %v1103, 4
      %v1116 = vpop.permute.xlu0 %1115
      %1117 = vrot.lane.b32.xlu0 %v1104, 4
      %v1118 = vpop.permute.xlu0 %1117
      %1119 = vrot.lane.b32.xlu0 %v1105, 4
      %v1120 = vpop.permute.xlu0 %1119
      %1121 = vrot.lane.b32.xlu0 %v1106, 4
      %v1122 = vpop.permute.xlu0 %1121
      %vm1131 = vcmask 64544
      %1132 = vst.msk [vmem:[#allocation3] sm:$0xff] %vm1131, %v1108
      %1133 = vst.msk [vmem:[#allocation3 + $0x8] sm:$0xff] %vm1131, %v1110
      %1134 = vst.msk [vmem:[#allocation3 + $0x10] sm:$0xff] %vm1131, %v1112
      %1135 = vst.msk [vmem:[#allocation3 + $0x18] sm:$0xff] %vm1131, %v1114
      %1136 = vst.msk [vmem:[#allocation3 + $0x20] sm:$0xff] %vm1131, %v1116
      %1137 = vst.msk [vmem:[#allocation3 + $0x28] sm:$0xff] %vm1131, %v1118
      %1138 = vst.msk [vmem:[#allocation3 + $0x30] sm:$0xff] %vm1131, %v1120
      %1139 = vst.msk [vmem:[#allocation3 + $0x38] sm:$0xff] %vm1131, %v1122
      %v1140 = vld [vmem:[#allocation2] sm:$0xe]
      %v1141 = vld [vmem:[#allocation2 + $0x4] sm:$0xf]
      %v1142 = vld [vmem:[#allocation2 + $0x8] sm:$0x1]
      %v1143 = vld [vmem:[#allocation2 + $0xc] sm:$0xe]
      %v1144 = vld [vmem:[#allocation2 + $0x10] sm:$0xf]
      %v1145 = vld [vmem:[#allocation2 + $0x14] sm:$0x1]
      %v1146 = vld [vmem:[#allocation2 + $0x18] sm:$0xe]
      %v1147 = vld [vmem:[#allocation2 + $0x1c] sm:$0xf]
      %v1148 = vld [vmem:[#allocation2 + $0x20] sm:$0x1]
      %v1149 = vld [vmem:[#allocation2 + $0x24] sm:$0xe]
      %v1150 = vld [vmem:[#allocation2 + $0x28] sm:$0xf]
      %v1151 = vld [vmem:[#allocation2 + $0x2c] sm:$0x1]
      %v1152 = vld [vmem:[#allocation2 + $0x30] sm:$0xe]
      %v1153 = vld [vmem:[#allocation2 + $0x34] sm:$0xf]
      %v1154 = vld [vmem:[#allocation2 + $0x38] sm:$0x1]
      %v1155 = vld [vmem:[#allocation2 + $0x3c] sm:$0xe]
      %v1156 = vld [vmem:[#allocation2 + $0x40] sm:$0xf]
      %v1157 = vld [vmem:[#allocation2 + $0x44] sm:$0x1]
      %v1158 = vld [vmem:[#allocation2 + $0x48] sm:$0xe]
      %v1159 = vld [vmem:[#allocation2 + $0x4c] sm:$0xf]
      %v1160 = vld [vmem:[#allocation2 + $0x50] sm:$0x1]
      %v1161 = vld [vmem:[#allocation2 + $0x54] sm:$0xe]
      %v1162 = vld [vmem:[#allocation2 + $0x58] sm:$0xf]
      %v1163 = vld [vmem:[#allocation2 + $0x5c] sm:$0x1]
      %vm1188 = vcmask 1042432
      %vm1189 = vcmask 1046532
      %vm1190 = vmor %vm1188, %vm1189
      %v1191 = vrot.slane %v1140, 5
      %v1192 = vrot.slane %v1191, 4
      %v1193 = vrot.slane %v1141, 5
      %v1194 = vsel %vm1190, %v1192, %v1193
      %v1195 = vrot.slane %v1193, 4
      %v1196 = vrot.slane %v1142, 5
      %v1197 = vsel %vm1190, %v1195, %v1196
      %v1198 = vrot.slane %v1143, 5
      %v1199 = vrot.slane %v1198, 4
      %v1200 = vrot.slane %v1144, 5
      %v1201 = vsel %vm1190, %v1199, %v1200
      %v1202 = vrot.slane %v1200, 4
      %v1203 = vrot.slane %v1145, 5
      %v1204 = vsel %vm1190, %v1202, %v1203
      %v1205 = vrot.slane %v1146, 5
      %v1206 = vrot.slane %v1205, 4
      %v1207 = vrot.slane %v1147, 5
      %v1208 = vsel %vm1190, %v1206, %v1207
      %v1209 = vrot.slane %v1207, 4
      %v1210 = vrot.slane %v1148, 5
      %v1211 = vsel %vm1190, %v1209, %v1210
      %v1212 = vrot.slane %v1149, 5
      %v1213 = vrot.slane %v1212, 4
      %v1214 = vrot.slane %v1150, 5
      %v1215 = vsel %vm1190, %v1213, %v1214
      %v1216 = vrot.slane %v1214, 4
      %v1217 = vrot.slane %v1151, 5
      %v1218 = vsel %vm1190, %v1216, %v1217
      %v1219 = vrot.slane %v1152, 5
      %v1220 = vrot.slane %v1219, 4
      %v1221 = vrot.slane %v1153, 5
      %v1222 = vsel %vm1190, %v1220, %v1221
      %v1223 = vrot.slane %v1221, 4
      %v1224 = vrot.slane %v1154, 5
      %v1225 = vsel %vm1190, %v1223, %v1224
      %v1226 = vrot.slane %v1155, 5
      %v1227 = vrot.slane %v1226, 4
      %v1228 = vrot.slane %v1156, 5
      %v1229 = vsel %vm1190, %v1227, %v1228
      %v1230 = vrot.slane %v1228, 4
      %v1231 = vrot.slane %v1157, 5
      %v1232 = vsel %vm1190, %v1230, %v1231
      %v1233 = vrot.slane %v1158, 5
      %v1234 = vrot.slane %v1233, 4
      %v1235 = vrot.slane %v1159, 5
      %v1236 = vsel %vm1190, %v1234, %v1235
      %v1237 = vrot.slane %v1235, 4
      %v1238 = vrot.slane %v1160, 5
      %v1239 = vsel %vm1190, %v1237, %v1238
      %v1240 = vrot.slane %v1161, 5
      %v1241 = vrot.slane %v1240, 4
      %v1242 = vrot.slane %v1162, 5
      %v1243 = vsel %vm1190, %v1241, %v1242
      %v1244 = vrot.slane %v1242, 4
      %v1245 = vrot.slane %v1163, 5
      %v1246 = vsel %vm1190, %v1244, %v1245
      %v1247 = vunpack.c.l.b16 %v1194
      %v1248 = vunpack.c.l.b16 %v1197
      %v1249 = vunpack.c.l.b16 %v1201
      %v1250 = vunpack.c.l.b16 %v1204
      %v1251 = vunpack.c.l.b16 %v1208
      %v1252 = vunpack.c.l.b16 %v1211
      %v1253 = vunpack.c.l.b16 %v1215
      %v1254 = vunpack.c.l.b16 %v1218
      %v1255 = vunpack.c.l.b16 %v1222
      %v1256 = vunpack.c.l.b16 %v1225
      %v1257 = vunpack.c.l.b16 %v1229
      %v1258 = vunpack.c.l.b16 %v1232
      %v1259 = vunpack.c.l.b16 %v1236
      %v1260 = vunpack.c.l.b16 %v1239
      %v1261 = vunpack.c.l.b16 %v1243
      %v1262 = vunpack.c.l.b16 %v1246
      %v1263 = vpack.c.b16 %v1248, %v1247
      %v1264 = vpack.c.b16 %v1250, %v1249
      %v1265 = vpack.c.b16 %v1252, %v1251
      %v1266 = vpack.c.b16 %v1254, %v1253
      %v1267 = vpack.c.b16 %v1256, %v1255
      %v1268 = vpack.c.b16 %v1258, %v1257
      %v1269 = vpack.c.b16 %v1260, %v1259
      %v1270 = vpack.c.b16 %v1262, %v1261
      %1271 = vrot.lane.b32.xlu0 %v1263, 8
      %v1272 = vpop.permute.xlu0 %1271
      %1273 = vrot.lane.b32.xlu0 %v1264, 8
      %v1274 = vpop.permute.xlu0 %1273
      %1275 = vrot.lane.b32.xlu0 %v1265, 8
      %v1276 = vpop.permute.xlu0 %1275
      %1277 = vrot.lane.b32.xlu0 %v1266, 8
      %v1278 = vpop.permute.xlu0 %1277
      %1279 = vrot.lane.b32.xlu0 %v1267, 8
      %v1280 = vpop.permute.xlu0 %1279
      %1281 = vrot.lane.b32.xlu0 %v1268, 8
      %v1282 = vpop.permute.xlu0 %1281
      %1283 = vrot.lane.b32.xlu0 %v1269, 8
      %v1284 = vpop.permute.xlu0 %1283
      %1285 = vrot.lane.b32.xlu0 %v1270, 8
      %v1286 = vpop.permute.xlu0 %1285
      %vm1295 = vcmask 97344
      %1296 = vst.msk [vmem:[#allocation3] sm:$0xff] %vm1295, %v1272
      %1297 = vst.msk [vmem:[#allocation3 + $0x8] sm:$0xff] %vm1295, %v1274
      %1298 = vst.msk [vmem:[#allocation3 + $0x10] sm:$0xff] %vm1295, %v1276
      %1299 = vst.msk [vmem:[#allocation3 + $0x18] sm:$0xff] %vm1295, %v1278
      %1300 = vst.msk [vmem:[#allocation3 + $0x20] sm:$0xff] %vm1295, %v1280
      %1301 = vst.msk [vmem:[#allocation3 + $0x28] sm:$0xff] %vm1295, %v1282
      %1302 = vst.msk [vmem:[#allocation3 + $0x30] sm:$0xff] %vm1295, %v1284
      %1303 = vst.msk [vmem:[#allocation3 + $0x38] sm:$0xff] %vm1295, %v1286
      %v1304 = vld [vmem:[%s700] sm:$0xf]
      %v1305 = vld [vmem:[%s700 + $0x4] sm:$0xf]
      %v1306 = vld [vmem:[%s700 + $0xc] sm:$0xf]
      %v1307 = vld [vmem:[%s700 + $0x10] sm:$0xf]
      %v1308 = vld [vmem:[%s700 + $0x18] sm:$0xf]
      %v1309 = vld [vmem:[%s700 + $0x1c] sm:$0xf]
      %v1310 = vld [vmem:[%s700 + $0x24] sm:$0xf]
      %v1311 = vld [vmem:[%s700 + $0x28] sm:$0xf]
      %v1312 = vld [vmem:[%s700 + $0x30] sm:$0xf]
      %v1313 = vld [vmem:[%s700 + $0x34] sm:$0xf]
      %v1314 = vld [vmem:[%s700 + $0x3c] sm:$0xf]
      %v1315 = vld [vmem:[%s700 + $0x40] sm:$0xf]
      %v1316 = vld [vmem:[%s700 + $0x48] sm:$0xf]
      %v1317 = vld [vmem:[%s700 + $0x4c] sm:$0xf]
      %v1318 = vld [vmem:[%s700 + $0x54] sm:$0xf]
      %v1319 = vld [vmem:[%s700 + $0x58] sm:$0xf]
      %v1336 = vunpack.c.l.b16 %v1304
      %v1337 = vunpack.c.l.b16 %v1305
      %v1338 = vunpack.c.l.b16 %v1306
      %v1339 = vunpack.c.l.b16 %v1307
      %v1340 = vunpack.c.l.b16 %v1308
      %v1341 = vunpack.c.l.b16 %v1309
      %v1342 = vunpack.c.l.b16 %v1310
      %v1343 = vunpack.c.l.b16 %v1311
      %v1344 = vunpack.c.l.b16 %v1312
      %v1345 = vunpack.c.l.b16 %v1313
      %v1346 = vunpack.c.l.b16 %v1314
      %v1347 = vunpack.c.l.b16 %v1315
      %v1348 = vunpack.c.l.b16 %v1316
      %v1349 = vunpack.c.l.b16 %v1317
      %v1350 = vunpack.c.l.b16 %v1318
      %v1351 = vunpack.c.l.b16 %v1319
      %v1352 = vpack.c.b16 %v1337, %v1336
      %v1353 = vpack.c.b16 %v1339, %v1338
      %v1354 = vpack.c.b16 %v1341, %v1340
      %v1355 = vpack.c.b16 %v1343, %v1342
      %v1356 = vpack.c.b16 %v1345, %v1344
      %v1357 = vpack.c.b16 %v1347, %v1346
      %v1358 = vpack.c.b16 %v1349, %v1348
      %v1359 = vpack.c.b16 %v1351, %v1350
      %1360 = vrot.lane.b32.xlu0 %v1352, 12
      %v1361 = vpop.permute.xlu0 %1360
      %1362 = vrot.lane.b32.xlu0 %v1353, 12
      %v1363 = vpop.permute.xlu0 %1362
      %1364 = vrot.lane.b32.xlu0 %v1354, 12
      %v1365 = vpop.permute.xlu0 %1364
      %1366 = vrot.lane.b32.xlu0 %v1355, 12
      %v1367 = vpop.permute.xlu0 %1366
      %1368 = vrot.lane.b32.xlu0 %v1356, 12
      %v1369 = vpop.permute.xlu0 %1368
      %1370 = vrot.lane.b32.xlu0 %v1357, 12
      %v1371 = vpop.permute.xlu0 %1370
      %1372 = vrot.lane.b32.xlu0 %v1358, 12
      %v1373 = vpop.permute.xlu0 %1372
      %1374 = vrot.lane.b32.xlu0 %v1359, 12
      %v1375 = vpop.permute.xlu0 %1374
      %vm1384 = vcmask 130144
      %1385 = vst.msk [vmem:[#allocation3] sm:$0xff] %vm1384, %v1361
      %1386 = vst.msk [vmem:[#allocation3 + $0x8] sm:$0xff] %vm1384, %v1363
      %1387 = vst.msk [vmem:[#allocation3 + $0x10] sm:$0xff] %vm1384, %v1365
      %1388 = vst.msk [vmem:[#allocation3 + $0x18] sm:$0xff] %vm1384, %v1367
      %1389 = vst.msk [vmem:[#allocation3 + $0x20] sm:$0xff] %vm1384, %v1369
      %1390 = vst.msk [vmem:[#allocation3 + $0x28] sm:$0xff] %vm1384, %v1371
      %1391 = vst.msk [vmem:[#allocation3 + $0x30] sm:$0xff] %vm1384, %v1373
      %1392 = vst.msk [vmem:[#allocation3 + $0x38] sm:$0xff] %vm1384, %v1375
      %v1393 = vld [vmem:[%s700] sm:$0xf]
      %v1394 = vld [vmem:[%s700 + $0x4] sm:$0xf]
      %v1395 = vld [vmem:[%s700 + $0x8] sm:$0x1]
      %v1396 = vld [vmem:[%s700 + $0xc] sm:$0xf]
      %v1397 = vld [vmem:[%s700 + $0x10] sm:$0xf]
      %v1398 = vld [vmem:[%s700 + $0x14] sm:$0x1]
      %v1399 = vld [vmem:[%s700 + $0x18] sm:$0xf]
      %v1400 = vld [vmem:[%s700 + $0x1c] sm:$0xf]
      %v1401 = vld [vmem:[%s700 + $0x20] sm:$0x1]
      %v1402 = vld [vmem:[%s700 + $0x24] sm:$0xf]
      %v1403 = vld [vmem:[%s700 + $0x28] sm:$0xf]
      %v1404 = vld [vmem:[%s700 + $0x2c] sm:$0x1]
      %v1405 = vld [vmem:[%s700 + $0x30] sm:$0xf]
      %v1406 = vld [vmem:[%s700 + $0x34] sm:$0xf]
      %v1407 = vld [vmem:[%s700 + $0x38] sm:$0x1]
      %v1408 = vld [vmem:[%s700 + $0x3c] sm:$0xf]
      %v1409 = vld [vmem:[%s700 + $0x40] sm:$0xf]
      %v1410 = vld [vmem:[%s700 + $0x44] sm:$0x1]
      %v1411 = vld [vmem:[%s700 + $0x48] sm:$0xf]
      %v1412 = vld [vmem:[%s700 + $0x4c] sm:$0xf]
      %v1413 = vld [vmem:[%s700 + $0x50] sm:$0x1]
      %v1414 = vld [vmem:[%s700 + $0x54] sm:$0xf]
      %v1415 = vld [vmem:[%s700 + $0x58] sm:$0xf]
      %v1416 = vld [vmem:[%s700 + $0x5c] sm:$0x1]
      %v1418 = vshrl.u32 %v1393, 16
      %v1420 = vrot.slane %v1418, 4
      %v1421 = vshll.u32 %v1393, 16
      %v1423 = vrot.slane %v1421, 5
      %v1424 = vor.u32 %v1420, %v1423
      %v1425 = vrot.slane %v1424, 4
      %v1427 = vshll.u32 %v1394, 16
      %v1429 = vrot.slane %v1427, 5
      %v1430 = vsel %vm890, %v1425, %v1429
      %v1431 = vshrl.u32 %v1394, 16
      %v1433 = vrot.slane %v1431, 4
      %v1434 = vor.u32 %v1433, %v1429
      %v1435 = vrot.slane %v1434, 4
      %v1437 = vshll.u32 %v1395, 16
      %v1439 = vrot.slane %v1437, 5
      %v1440 = vsel %vm890, %v1435, %v1439
      %v1442 = vshrl.u32 %v1396, 16
      %v1444 = vrot.slane %v1442, 4
      %v1445 = vshll.u32 %v1396, 16
      %v1447 = vrot.slane %v1445, 5
      %v1448 = vor.u32 %v1444, %v1447
      %v1449 = vrot.slane %v1448, 4
      %v1451 = vshll.u32 %v1397, 16
      %v1453 = vrot.slane %v1451, 5
      %v1454 = vsel %vm890, %v1449, %v1453
      %v1455 = vshrl.u32 %v1397, 16
      %v1457 = vrot.slane %v1455, 4
      %v1458 = vor.u32 %v1457, %v1453
      %v1459 = vrot.slane %v1458, 4
      %v1461 = vshll.u32 %v1398, 16
      %v1463 = vrot.slane %v1461, 5
      %v1464 = vsel %vm890, %v1459, %v1463
      %v1466 = vshrl.u32 %v1399, 16
      %v1468 = vrot.slane %v1466, 4
      %v1469 = vshll.u32 %v1399, 16
      %v1471 = vrot.slane %v1469, 5
      %v1472 = vor.u32 %v1468, %v1471
      %v1473 = vrot.slane %v1472, 4
      %v1475 = vshll.u32 %v1400, 16
      %v1477 = vrot.slane %v1475, 5
      %v1478 = vsel %vm890, %v1473, %v1477
      %v1479 = vshrl.u32 %v1400, 16
      %v1481 = vrot.slane %v1479, 4
      %v1482 = vor.u32 %v1481, %v1477
      %v1483 = vrot.slane %v1482, 4
      %v1485 = vshll.u32 %v1401, 16
      %v1487 = vrot.slane %v1485, 5
      %v1488 = vsel %vm890, %v1483, %v1487
      %v1490 = vshrl.u32 %v1402, 16
      %v1492 = vrot.slane %v1490, 4
      %v1493 = vshll.u32 %v1402, 16
      %v1495 = vrot.slane %v1493, 5
      %v1496 = vor.u32 %v1492, %v1495
      %v1497 = vrot.slane %v1496, 4
      %v1499 = vshll.u32 %v1403, 16
      %v1501 = vrot.slane %v1499, 5
      %v1502 = vsel %vm890, %v1497, %v1501
      %v1503 = vshrl.u32 %v1403, 16
      %v1505 = vrot.slane %v1503, 4
      %v1506 = vor.u32 %v1505, %v1501
      %v1507 = vrot.slane %v1506, 4
      %v1509 = vshll.u32 %v1404, 16
      %v1511 = vrot.slane %v1509, 5
      %v1512 = vsel %vm890, %v1507, %v1511
      %v1514 = vshrl.u32 %v1405, 16
      %v1516 = vrot.slane %v1514, 4
      %v1517 = vshll.u32 %v1405, 16
      %v1519 = vrot.slane %v1517, 5
      %v1520 = vor.u32 %v1516, %v1519
      %v1521 = vrot.slane %v1520, 4
      %v1523 = vshll.u32 %v1406, 16
      %v1525 = vrot.slane %v1523, 5
      %v1526 = vsel %vm890, %v1521, %v1525
      %v1527 = vshrl.u32 %v1406, 16
      %v1529 = vrot.slane %v1527, 4
      %v1530 = vor.u32 %v1529, %v1525
      %v1531 = vrot.slane %v1530, 4
      %v1533 = vshll.u32 %v1407, 16
      %v1535 = vrot.slane %v1533, 5
      %v1536 = vsel %vm890, %v1531, %v1535
      %v1538 = vshrl.u32 %v1408, 16
      %v1540 = vrot.slane %v1538, 4
      %v1541 = vshll.u32 %v1408, 16
      %v1543 = vrot.slane %v1541, 5
      %v1544 = vor.u32 %v1540, %v1543
      %v1545 = vrot.slane %v1544, 4
      %v1547 = vshll.u32 %v1409, 16
      %v1549 = vrot.slane %v1547, 5
      %v1550 = vsel %vm890, %v1545, %v1549
      %v1551 = vshrl.u32 %v1409, 16
      %v1553 = vrot.slane %v1551, 4
      %v1554 = vor.u32 %v1553, %v1549
      %v1555 = vrot.slane %v1554, 4
      %v1557 = vshll.u32 %v1410, 16
      %v1559 = vrot.slane %v1557, 5
      %v1560 = vsel %vm890, %v1555, %v1559
      %v1562 = vshrl.u32 %v1411, 16
      %v1564 = vrot.slane %v1562, 4
      %v1565 = vshll.u32 %v1411, 16
      %v1567 = vrot.slane %v1565, 5
      %v1568 = vor.u32 %v1564, %v1567
      %v1569 = vrot.slane %v1568, 4
      %v1571 = vshll.u32 %v1412, 16
      %v1573 = vrot.slane %v1571, 5
      %v1574 = vsel %vm890, %v1569, %v1573
      %v1575 = vshrl.u32 %v1412, 16
      %v1577 = vrot.slane %v1575, 4
      %v1578 = vor.u32 %v1577, %v1573
      %v1579 = vrot.slane %v1578, 4
      %v1581 = vshll.u32 %v1413, 16
      %v1583 = vrot.slane %v1581, 5
      %v1584 = vsel %vm890, %v1579, %v1583
      %v1586 = vshrl.u32 %v1414, 16
      %v1588 = vrot.slane %v1586, 4
      %v1589 = vshll.u32 %v1414, 16
      %v1591 = vrot.slane %v1589, 5
      %v1592 = vor.u32 %v1588, %v1591
      %v1593 = vrot.slane %v1592, 4
      %v1595 = vshll.u32 %v1415, 16
      %v1597 = vrot.slane %v1595, 5
      %v1598 = vsel %vm890, %v1593, %v1597
      %v1599 = vshrl.u32 %v1415, 16
      %v1601 = vrot.slane %v1599, 4
      %v1602 = vor.u32 %v1601, %v1597
      %v1603 = vrot.slane %v1602, 4
      %v1605 = vshll.u32 %v1416, 16
      %v1607 = vrot.slane %v1605, 5
      %v1608 = vsel %vm890, %v1603, %v1607
      %v1609 = vunpack.c.l.b16 %v1430
      %v1610 = vunpack.c.l.b16 %v1440
      %v1611 = vunpack.c.l.b16 %v1454
      %v1612 = vunpack.c.l.b16 %v1464
      %v1613 = vunpack.c.l.b16 %v1478
      %v1614 = vunpack.c.l.b16 %v1488
      %v1615 = vunpack.c.l.b16 %v1502
      %v1616 = vunpack.c.l.b16 %v1512
      %v1617 = vunpack.c.l.b16 %v1526
      %v1618 = vunpack.c.l.b16 %v1536
      %v1619 = vunpack.c.l.b16 %v1550
      %v1620 = vunpack.c.l.b16 %v1560
      %v1621 = vunpack.c.l.b16 %v1574
      %v1622 = vunpack.c.l.b16 %v1584
      %v1623 = vunpack.c.l.b16 %v1598
      %v1624 = vunpack.c.l.b16 %v1608
      %v1625 = vpack.c.b16 %v1610, %v1609
      %v1626 = vpack.c.b16 %v1612, %v1611
      %v1627 = vpack.c.b16 %v1614, %v1613
      %v1628 = vpack.c.b16 %v1616, %v1615
      %v1629 = vpack.c.b16 %v1618, %v1617
      %v1630 = vpack.c.b16 %v1620, %v1619
      %v1631 = vpack.c.b16 %v1622, %v1621
      %v1632 = vpack.c.b16 %v1624, %v1623
      %1633 = vrot.lane.b32.xlu0 %v1625, 16
      %v1634 = vpop.permute.xlu0 %1633
      %1635 = vrot.lane.b32.xlu0 %v1626, 16
      %v1636 = vpop.permute.xlu0 %1635
      %1637 = vrot.lane.b32.xlu0 %v1627, 16
      %v1638 = vpop.permute.xlu0 %1637
      %1639 = vrot.lane.b32.xlu0 %v1628, 16
      %v1640 = vpop.permute.xlu0 %1639
      %1641 = vrot.lane.b32.xlu0 %v1629, 16
      %v1642 = vpop.permute.xlu0 %1641
      %1643 = vrot.lane.b32.xlu0 %v1630, 16
      %v1644 = vpop.permute.xlu0 %1643
      %1645 = vrot.lane.b32.xlu0 %v1631, 16
      %v1646 = vpop.permute.xlu0 %1645
      %1647 = vrot.lane.b32.xlu0 %v1632, 16
      %v1648 = vpop.permute.xlu0 %1647
      %vm1657 = vcmask 162944
      %1658 = vst.msk [vmem:[#allocation3] sm:$0xff] %vm1657, %v1634
      %1659 = vst.msk [vmem:[#allocation3 + $0x8] sm:$0xff] %vm1657, %v1636
      %1660 = vst.msk [vmem:[#allocation3 + $0x10] sm:$0xff] %vm1657, %v1638
      %1661 = vst.msk [vmem:[#allocation3 + $0x18] sm:$0xff] %vm1657, %v1640
      %1662 = vst.msk [vmem:[#allocation3 + $0x20] sm:$0xff] %vm1657, %v1642
      %1663 = vst.msk [vmem:[#allocation3 + $0x28] sm:$0xff] %vm1657, %v1644
      %1664 = vst.msk [vmem:[#allocation3 + $0x30] sm:$0xff] %vm1657, %v1646
      %1665 = vst.msk [vmem:[#allocation3 + $0x38] sm:$0xff] %vm1657, %v1648
      %v1666 = vld [vmem:[%s700] sm:$0xe]
      %v1667 = vld [vmem:[%s700 + $0x4] sm:$0xf]
      %v1668 = vld [vmem:[%s700 + $0x8] sm:$0x1]
      %v1669 = vld [vmem:[%s700 + $0xc] sm:$0xe]
      %v1670 = vld [vmem:[%s700 + $0x10] sm:$0xf]
      %v1671 = vld [vmem:[%s700 + $0x14] sm:$0x1]
      %v1672 = vld [vmem:[%s700 + $0x18] sm:$0xe]
      %v1673 = vld [vmem:[%s700 + $0x1c] sm:$0xf]
      %v1674 = vld [vmem:[%s700 + $0x20] sm:$0x1]
      %v1675 = vld [vmem:[%s700 + $0x24] sm:$0xe]
      %v1676 = vld [vmem:[%s700 + $0x28] sm:$0xf]
      %v1677 = vld [vmem:[%s700 + $0x2c] sm:$0x1]
      %v1678 = vld [vmem:[%s700 + $0x30] sm:$0xe]
      %v1679 = vld [vmem:[%s700 + $0x34] sm:$0xf]
      %v1680 = vld [vmem:[%s700 + $0x38] sm:$0x1]
      %v1681 = vld [vmem:[%s700 + $0x3c] sm:$0xe]
      %v1682 = vld [vmem:[%s700 + $0x40] sm:$0xf]
      %v1683 = vld [vmem:[%s700 + $0x44] sm:$0x1]
      %v1684 = vld [vmem:[%s700 + $0x48] sm:$0xe]
      %v1685 = vld [vmem:[%s700 + $0x4c] sm:$0xf]
      %v1686 = vld [vmem:[%s700 + $0x50] sm:$0x1]
      %v1687 = vld [vmem:[%s700 + $0x54] sm:$0xe]
      %v1688 = vld [vmem:[%s700 + $0x58] sm:$0xf]
      %v1689 = vld [vmem:[%s700 + $0x5c] sm:$0x1]
      %v1714 = vrot.slane %v1666, 5
      %v1715 = vrot.slane %v1714, 4
      %v1716 = vrot.slane %v1667, 5
      %v1717 = vsel %vm1190, %v1715, %v1716
      %v1718 = vrot.slane %v1716, 4
      %v1719 = vrot.slane %v1668, 5
      %v1720 = vsel %vm1190, %v1718, %v1719
      %v1721 = vrot.slane %v1669, 5
      %v1722 = vrot.slane %v1721, 4
      %v1723 = vrot.slane %v1670, 5
      %v1724 = vsel %vm1190, %v1722, %v1723
      %v1725 = vrot.slane %v1723, 4
      %v1726 = vrot.slane %v1671, 5
      %v1727 = vsel %vm1190, %v1725, %v1726
      %v1728 = vrot.slane %v1672, 5
      %v1729 = vrot.slane %v1728, 4
      %v1730 = vrot.slane %v1673, 5
      %v1731 = vsel %vm1190, %v1729, %v1730
      %v1732 = vrot.slane %v1730, 4
      %v1733 = vrot.slane %v1674, 5
      %v1734 = vsel %vm1190, %v1732, %v1733
      %v1735 = vrot.slane %v1675, 5
      %v1736 = vrot.slane %v1735, 4
      %v1737 = vrot.slane %v1676, 5
      %v1738 = vsel %vm1190, %v1736, %v1737
      %v1739 = vrot.slane %v1737, 4
      %v1740 = vrot.slane %v1677, 5
      %v1741 = vsel %vm1190, %v1739, %v1740
      %v1742 = vrot.slane %v1678, 5
      %v1743 = vrot.slane %v1742, 4
      %v1744 = vrot.slane %v1679, 5
      %v1745 = vsel %vm1190, %v1743, %v1744
      %v1746 = vrot.slane %v1744, 4
      %v1747 = vrot.slane %v1680, 5
      %v1748 = vsel %vm1190, %v1746, %v1747
      %v1749 = vrot.slane %v1681, 5
      %v1750 = vrot.slane %v1749, 4
      %v1751 = vrot.slane %v1682, 5
      %v1752 = vsel %vm1190, %v1750, %v1751
      %v1753 = vrot.slane %v1751, 4
      %v1754 = vrot.slane %v1683, 5
      %v1755 = vsel %vm1190, %v1753, %v1754
      %v1756 = vrot.slane %v1684, 5
      %v1757 = vrot.slane %v1756, 4
      %v1758 = vrot.slane %v1685, 5
      %v1759 = vsel %vm1190, %v1757, %v1758
      %v1760 = vrot.slane %v1758, 4
      %v1761 = vrot.slane %v1686, 5
      %v1762 = vsel %vm1190, %v1760, %v1761
      %v1763 = vrot.slane %v1687, 5
      %v1764 = vrot.slane %v1763, 4
      %v1765 = vrot.slane %v1688, 5
      %v1766 = vsel %vm1190, %v1764, %v1765
      %v1767 = vrot.slane %v1765, 4
      %v1768 = vrot.slane %v1689, 5
      %v1769 = vsel %vm1190, %v1767, %v1768
      %v1770 = vunpack.c.l.b16 %v1717
      %v1771 = vunpack.c.l.b16 %v1720
      %v1772 = vunpack.c.l.b16 %v1724
      %v1773 = vunpack.c.l.b16 %v1727
      %v1774 = vunpack.c.l.b16 %v1731
      %v1775 = vunpack.c.l.b16 %v1734
      %v1776 = vunpack.c.l.b16 %v1738
      %v1777 = vunpack.c.l.b16 %v1741
      %v1778 = vunpack.c.l.b16 %v1745
      %v1779 = vunpack.c.l.b16 %v1748
      %v1780 = vunpack.c.l.b16 %v1752
      %v1781 = vunpack.c.l.b16 %v1755
      %v1782 = vunpack.c.l.b16 %v1759
      %v1783 = vunpack.c.l.b16 %v1762
      %v1784 = vunpack.c.l.b16 %v1766
      %v1785 = vunpack.c.l.b16 %v1769
      %v1786 = vpack.c.b16 %v1771, %v1770
      %v1787 = vpack.c.b16 %v1773, %v1772
      %v1788 = vpack.c.b16 %v1775, %v1774
      %v1789 = vpack.c.b16 %v1777, %v1776
      %v1790 = vpack.c.b16 %v1779, %v1778
      %v1791 = vpack.c.b16 %v1781, %v1780
      %v1792 = vpack.c.b16 %v1783, %v1782
      %v1793 = vpack.c.b16 %v1785, %v1784
      %1794 = vrot.lane.b32.xlu0 %v1786, 20
      %v1795 = vpop.permute.xlu0 %1794
      %1796 = vrot.lane.b32.xlu0 %v1787, 20
      %v1797 = vpop.permute.xlu0 %1796
      %1798 = vrot.lane.b32.xlu0 %v1788, 20
      %v1799 = vpop.permute.xlu0 %1798
      %1800 = vrot.lane.b32.xlu0 %v1789, 20
      %v1801 = vpop.permute.xlu0 %1800
      %1802 = vrot.lane.b32.xlu0 %v1790, 20
      %v1803 = vpop.permute.xlu0 %1802
      %1804 = vrot.lane.b32.xlu0 %v1791, 20
      %v1805 = vpop.permute.xlu0 %1804
      %1806 = vrot.lane.b32.xlu0 %v1792, 20
      %v1807 = vpop.permute.xlu0 %1806
      %1808 = vrot.lane.b32.xlu0 %v1793, 20
      %v1809 = vpop.permute.xlu0 %1808
      %vm1818 = vcmask 195744
      %1819 = vst.msk [vmem:[#allocation3] sm:$0xff] %vm1818, %v1795
      %1820 = vst.msk [vmem:[#allocation3 + $0x8] sm:$0xff] %vm1818, %v1797
      %1821 = vst.msk [vmem:[#allocation3 + $0x10] sm:$0xff] %vm1818, %v1799
      %1822 = vst.msk [vmem:[#allocation3 + $0x18] sm:$0xff] %vm1818, %v1801
      %1823 = vst.msk [vmem:[#allocation3 + $0x20] sm:$0xff] %vm1818, %v1803
      %1824 = vst.msk [vmem:[#allocation3 + $0x28] sm:$0xff] %vm1818, %v1805
      %1825 = vst.msk [vmem:[#allocation3 + $0x30] sm:$0xff] %vm1818, %v1807
      %1826 = vst.msk [vmem:[#allocation3 + $0x38] sm:$0xff] %vm1818, %v1809
      %s1827 = scalar_lea.vmem [#allocation2], 24
      %v1828 = vld [vmem:[%s1827] sm:$0xf]
      %v1829 = vld [vmem:[%s1827 + $0x4] sm:$0xf]
      %v1830 = vld [vmem:[%s1827 + $0xc] sm:$0xf]
      %v1831 = vld [vmem:[%s1827 + $0x10] sm:$0xf]
      %v1832 = vld [vmem:[%s1827 + $0x18] sm:$0xf]
      %v1833 = vld [vmem:[%s1827 + $0x1c] sm:$0xf]
      %v1834 = vld [vmem:[%s1827 + $0x24] sm:$0xf]
      %v1835 = vld [vmem:[%s1827 + $0x28] sm:$0xf]
      %v1836 = vld [vmem:[%s1827 + $0x30] sm:$0xf]
      %v1837 = vld [vmem:[%s1827 + $0x34] sm:$0xf]
      %v1838 = vld [vmem:[%s1827 + $0x3c] sm:$0xf]
      %v1839 = vld [vmem:[%s1827 + $0x40] sm:$0xf]
      %v1840 = vld [vmem:[%s1827 + $0x48] sm:$0xf]
      %v1841 = vld [vmem:[%s1827 + $0x4c] sm:$0xf]
      %v1842 = vld [vmem:[%s1827 + $0x54] sm:$0xf]
      %v1843 = vld [vmem:[%s1827 + $0x58] sm:$0xf]
      %v1860 = vunpack.c.l.b16 %v1828
      %v1861 = vunpack.c.l.b16 %v1829
      %v1862 = vunpack.c.l.b16 %v1830
      %v1863 = vunpack.c.l.b16 %v1831
      %v1864 = vunpack.c.l.b16 %v1832
      %v1865 = vunpack.c.l.b16 %v1833
      %v1866 = vunpack.c.l.b16 %v1834
      %v1867 = vunpack.c.l.b16 %v1835
      %v1868 = vunpack.c.l.b16 %v1836
      %v1869 = vunpack.c.l.b16 %v1837
      %v1870 = vunpack.c.l.b16 %v1838
      %v1871 = vunpack.c.l.b16 %v1839
      %v1872 = vunpack.c.l.b16 %v1840
      %v1873 = vunpack.c.l.b16 %v1841
      %v1874 = vunpack.c.l.b16 %v1842
      %v1875 = vunpack.c.l.b16 %v1843
      %v1876 = vpack.c.b16 %v1861, %v1860
      %v1877 = vpack.c.b16 %v1863, %v1862
      %v1878 = vpack.c.b16 %v1865, %v1864
      %v1879 = vpack.c.b16 %v1867, %v1866
      %v1880 = vpack.c.b16 %v1869, %v1868
      %v1881 = vpack.c.b16 %v1871, %v1870
      %v1882 = vpack.c.b16 %v1873, %v1872
      %v1883 = vpack.c.b16 %v1875, %v1874
      %1884 = vrot.lane.b32.xlu0 %v1876, 24
      %v1885 = vpop.permute.xlu0 %1884
      %1886 = vrot.lane.b32.xlu0 %v1877, 24
      %v1887 = vpop.permute.xlu0 %1886
      %1888 = vrot.lane.b32.xlu0 %v1878, 24
      %v1889 = vpop.permute.xlu0 %1888
      %1890 = vrot.lane.b32.xlu0 %v1879, 24
      %v1891 = vpop.permute.xlu0 %1890
      %1892 = vrot.lane.b32.xlu0 %v1880, 24
      %v1893 = vpop.permute.xlu0 %1892
      %1894 = vrot.lane.b32.xlu0 %v1881, 24
      %v1895 = vpop.permute.xlu0 %1894
      %1896 = vrot.lane.b32.xlu0 %v1882, 24
      %v1897 = vpop.permute.xlu0 %1896
      %1898 = vrot.lane.b32.xlu0 %v1883, 24
      %v1899 = vpop.permute.xlu0 %1898
      %vm1908 = vcmask 228544
      %1909 = vst.msk [vmem:[#allocation3] sm:$0xff] %vm1908, %v1885
      %1910 = vst.msk [vmem:[#allocation3 + $0x8] sm:$0xff] %vm1908, %v1887
      %1911 = vst.msk [vmem:[#allocation3 + $0x10] sm:$0xff] %vm1908, %v1889
      %1912 = vst.msk [vmem:[#allocation3 + $0x18] sm:$0xff] %vm1908, %v1891
      %1913 = vst.msk [vmem:[#allocation3 + $0x20] sm:$0xff] %vm1908, %v1893
      %1914 = vst.msk [vmem:[#allocation3 + $0x28] sm:$0xff] %vm1908, %v1895
      %1915 = vst.msk [vmem:[#allocation3 + $0x30] sm:$0xff] %vm1908, %v1897
      %1916 = vst.msk [vmem:[#allocation3 + $0x38] sm:$0xff] %vm1908, %v1899
      %v1917 = vld [vmem:[%s1827] sm:$0xf]
      %v1918 = vld [vmem:[%s1827 + $0x4] sm:$0xf]
      %v1919 = vld [vmem:[%s1827 + $0x8] sm:$0x1]
      %v1920 = vld [vmem:[%s1827 + $0xc] sm:$0xf]
      %v1921 = vld [vmem:[%s1827 + $0x10] sm:$0xf]
      %v1922 = vld [vmem:[%s1827 + $0x14] sm:$0x1]
      %v1923 = vld [vmem:[%s1827 + $0x18] sm:$0xf]
      %v1924 = vld [vmem:[%s1827 + $0x1c] sm:$0xf]
      %v1925 = vld [vmem:[%s1827 + $0x20] sm:$0x1]
      %v1926 = vld [vmem:[%s1827 + $0x24] sm:$0xf]
      %v1927 = vld [vmem:[%s1827 + $0x28] sm:$0xf]
      %v1928 = vld [vmem:[%s1827 + $0x2c] sm:$0x1]
      %v1929 = vld [vmem:[%s1827 + $0x30] sm:$0xf]
      %v1930 = vld [vmem:[%s1827 + $0x34] sm:$0xf]
      %v1931 = vld [vmem:[%s1827 + $0x38] sm:$0x1]
      %v1932 = vld [vmem:[%s1827 + $0x3c] sm:$0xf]
      %v1933 = vld [vmem:[%s1827 + $0x40] sm:$0xf]
      %v1934 = vld [vmem:[%s1827 + $0x44] sm:$0x1]
      %v1935 = vld [vmem:[%s1827 + $0x48] sm:$0xf]
      %v1936 = vld [vmem:[%s1827 + $0x4c] sm:$0xf]
      %v1937 = vld [vmem:[%s1827 + $0x50] sm:$0x1]
      %v1938 = vld [vmem:[%s1827 + $0x54] sm:$0xf]
      %v1939 = vld [vmem:[%s1827 + $0x58] sm:$0xf]
      %v1940 = vld [vmem:[%s1827 + $0x5c] sm:$0x1]
      %v1942 = vshrl.u32 %v1917, 16
      %v1944 = vrot.slane %v1942, 4
      %v1945 = vshll.u32 %v1917, 16
      %v1947 = vrot.slane %v1945, 5
      %v1948 = vor.u32 %v1944, %v1947
      %v1949 = vrot.slane %v1948, 4
      %v1951 = vshll.u32 %v1918, 16
      %v1953 = vrot.slane %v1951, 5
      %v1954 = vsel %vm890, %v1949, %v1953
      %v1955 = vshrl.u32 %v1918, 16
      %v1957 = vrot.slane %v1955, 4
      %v1958 = vor.u32 %v1957, %v1953
      %v1959 = vrot.slane %v1958, 4
      %v1961 = vshll.u32 %v1919, 16
      %v1963 = vrot.slane %v1961, 5
      %v1964 = vsel %vm890, %v1959, %v1963
      %v1966 = vshrl.u32 %v1920, 16
      %v1968 = vrot.slane %v1966, 4
      %v1969 = vshll.u32 %v1920, 16
      %v1971 = vrot.slane %v1969, 5
      %v1972 = vor.u32 %v1968, %v1971
      %v1973 = vrot.slane %v1972, 4
      %v1975 = vshll.u32 %v1921, 16
      %v1977 = vrot.slane %v1975, 5
      %v1978 = vsel %vm890, %v1973, %v1977
      %v1979 = vshrl.u32 %v1921, 16
      %v1981 = vrot.slane %v1979, 4
      %v1982 = vor.u32 %v1981, %v1977
      %v1983 = vrot.slane %v1982, 4
      %v1985 = vshll.u32 %v1922, 16
      %v1987 = vrot.slane %v1985, 5
      %v1988 = vsel %vm890, %v1983, %v1987
      %v1990 = vshrl.u32 %v1923, 16
      %v1992 = vrot.slane %v1990, 4
      %v1993 = vshll.u32 %v1923, 16
      %v1995 = vrot.slane %v1993, 5
      %v1996 = vor.u32 %v1992, %v1995
      %v1997 = vrot.slane %v1996, 4
      %v1999 = vshll.u32 %v1924, 16
      %v2001 = vrot.slane %v1999, 5
      %v2002 = vsel %vm890, %v1997, %v2001
      %v2003 = vshrl.u32 %v1924, 16
      %v2005 = vrot.slane %v2003, 4
      %v2006 = vor.u32 %v2005, %v2001
      %v2007 = vrot.slane %v2006, 4
      %v2009 = vshll.u32 %v1925, 16
      %v2011 = vrot.slane %v2009, 5
      %v2012 = vsel %vm890, %v2007, %v2011
      %v2014 = vshrl.u32 %v1926, 16
      %v2016 = vrot.slane %v2014, 4
      %v2017 = vshll.u32 %v1926, 16
      %v2019 = vrot.slane %v2017, 5
      %v2020 = vor.u32 %v2016, %v2019
      %v2021 = vrot.slane %v2020, 4
      %v2023 = vshll.u32 %v1927, 16
      %v2025 = vrot.slane %v2023, 5
      %v2026 = vsel %vm890, %v2021, %v2025
      %v2027 = vshrl.u32 %v1927, 16
      %v2029 = vrot.slane %v2027, 4
      %v2030 = vor.u32 %v2029, %v2025
      %v2031 = vrot.slane %v2030, 4
      %v2033 = vshll.u32 %v1928, 16
      %v2035 = vrot.slane %v2033, 5
      %v2036 = vsel %vm890, %v2031, %v2035
      %v2038 = vshrl.u32 %v1929, 16
      %v2040 = vrot.slane %v2038, 4
      %v2041 = vshll.u32 %v1929, 16
      %v2043 = vrot.slane %v2041, 5
      %v2044 = vor.u32 %v2040, %v2043
      %v2045 = vrot.slane %v2044, 4
      %v2047 = vshll.u32 %v1930, 16
      %v2049 = vrot.slane %v2047, 5
      %v2050 = vsel %vm890, %v2045, %v2049
      %v2051 = vshrl.u32 %v1930, 16
      %v2053 = vrot.slane %v2051, 4
      %v2054 = vor.u32 %v2053, %v2049
      %v2055 = vrot.slane %v2054, 4
      %v2057 = vshll.u32 %v1931, 16
      %v2059 = vrot.slane %v2057, 5
      %v2060 = vsel %vm890, %v2055, %v2059
      %v2062 = vshrl.u32 %v1932, 16
      %v2064 = vrot.slane %v2062, 4
      %v2065 = vshll.u32 %v1932, 16
      %v2067 = vrot.slane %v2065, 5
      %v2068 = vor.u32 %v2064, %v2067
      %v2069 = vrot.slane %v2068, 4
      %v2071 = vshll.u32 %v1933, 16
      %v2073 = vrot.slane %v2071, 5
      %v2074 = vsel %vm890, %v2069, %v2073
      %v2075 = vshrl.u32 %v1933, 16
      %v2077 = vrot.slane %v2075, 4
      %v2078 = vor.u32 %v2077, %v2073
      %v2079 = vrot.slane %v2078, 4
      %v2081 = vshll.u32 %v1934, 16
      %v2083 = vrot.slane %v2081, 5
      %v2084 = vsel %vm890, %v2079, %v2083
      %v2086 = vshrl.u32 %v1935, 16
      %v2088 = vrot.slane %v2086, 4
      %v2089 = vshll.u32 %v1935, 16
      %v2091 = vrot.slane %v2089, 5
      %v2092 = vor.u32 %v2088, %v2091
      %v2093 = vrot.slane %v2092, 4
      %v2095 = vshll.u32 %v1936, 16
      %v2097 = vrot.slane %v2095, 5
      %v2098 = vsel %vm890, %v2093, %v2097
      %v2099 = vshrl.u32 %v1936, 16
      %v2101 = vrot.slane %v2099, 4
      %v2102 = vor.u32 %v2101, %v2097
      %v2103 = vrot.slane %v2102, 4
      %v2105 = vshll.u32 %v1937, 16
      %v2107 = vrot.slane %v2105, 5
      %v2108 = vsel %vm890, %v2103, %v2107
      %v2110 = vshrl.u32 %v1938, 16
      %v2112 = vrot.slane %v2110, 4
      %v2113 = vshll.u32 %v1938, 16
      %v2115 = vrot.slane %v2113, 5
      %v2116 = vor.u32 %v2112, %v2115
      %v2117 = vrot.slane %v2116, 4
      %v2119 = vshll.u32 %v1939, 16
      %v2121 = vrot.slane %v2119, 5
      %v2122 = vsel %vm890, %v2117, %v2121
      %v2123 = vshrl.u32 %v1939, 16
      %v2125 = vrot.slane %v2123, 4
      %v2126 = vor.u32 %v2125, %v2121
      %v2127 = vrot.slane %v2126, 4
      %v2129 = vshll.u32 %v1940, 16
      %v2131 = vrot.slane %v2129, 5
      %v2132 = vsel %vm890, %v2127, %v2131
      %v2133 = vunpack.c.l.b16 %v1954
      %v2134 = vunpack.c.l.b16 %v1964
      %v2135 = vunpack.c.l.b16 %v1978
      %v2136 = vunpack.c.l.b16 %v1988
      %v2137 = vunpack.c.l.b16 %v2002
      %v2138 = vunpack.c.l.b16 %v2012
      %v2139 = vunpack.c.l.b16 %v2026
      %v2140 = vunpack.c.l.b16 %v2036
      %v2141 = vunpack.c.l.b16 %v2050
      %v2142 = vunpack.c.l.b16 %v2060
      %v2143 = vunpack.c.l.b16 %v2074
      %v2144 = vunpack.c.l.b16 %v2084
      %v2145 = vunpack.c.l.b16 %v2098
      %v2146 = vunpack.c.l.b16 %v2108
      %v2147 = vunpack.c.l.b16 %v2122
      %v2148 = vunpack.c.l.b16 %v2132
      %v2149 = vpack.c.b16 %v2134, %v2133
      %v2150 = vpack.c.b16 %v2136, %v2135
      %v2151 = vpack.c.b16 %v2138, %v2137
      %v2152 = vpack.c.b16 %v2140, %v2139
      %v2153 = vpack.c.b16 %v2142, %v2141
      %v2154 = vpack.c.b16 %v2144, %v2143
      %v2155 = vpack.c.b16 %v2146, %v2145
      %v2156 = vpack.c.b16 %v2148, %v2147
      %2157 = vrot.lane.b32.xlu0 %v2149, 28
      %v2158 = vpop.permute.xlu0 %2157
      %2159 = vrot.lane.b32.xlu0 %v2150, 28
      %v2160 = vpop.permute.xlu0 %2159
      %2161 = vrot.lane.b32.xlu0 %v2151, 28
      %v2162 = vpop.permute.xlu0 %2161
      %2163 = vrot.lane.b32.xlu0 %v2152, 28
      %v2164 = vpop.permute.xlu0 %2163
      %2165 = vrot.lane.b32.xlu0 %v2153, 28
      %v2166 = vpop.permute.xlu0 %2165
      %2167 = vrot.lane.b32.xlu0 %v2154, 28
      %v2168 = vpop.permute.xlu0 %2167
      %2169 = vrot.lane.b32.xlu0 %v2155, 28
      %v2170 = vpop.permute.xlu0 %2169
      %2171 = vrot.lane.b32.xlu0 %v2156, 28
      %v2172 = vpop.permute.xlu0 %2171
      %vm2181 = vcmask 261344
      %2182 = vst.msk [vmem:[#allocation3] sm:$0xff] %vm2181, %v2158
      %2183 = vst.msk [vmem:[#allocation3 + $0x8] sm:$0xff] %vm2181, %v2160
      %2184 = vst.msk [vmem:[#allocation3 + $0x10] sm:$0xff] %vm2181, %v2162
      %2185 = vst.msk [vmem:[#allocation3 + $0x18] sm:$0xff] %vm2181, %v2164
      %2186 = vst.msk [vmem:[#allocation3 + $0x20] sm:$0xff] %vm2181, %v2166
      %2187 = vst.msk [vmem:[#allocation3 + $0x28] sm:$0xff] %vm2181, %v2168
      %2188 = vst.msk [vmem:[#allocation3 + $0x30] sm:$0xff] %vm2181, %v2170
      %2189 = vst.msk [vmem:[#allocation3 + $0x38] sm:$0xff] %vm2181, %v2172
      %v2190 = vld [vmem:[%s1827] sm:$0xe]
      %v2191 = vld [vmem:[%s1827 + $0x4] sm:$0xf]
      %v2192 = vld [vmem:[%s1827 + $0x8] sm:$0x1]
      %v2193 = vld [vmem:[%s1827 + $0xc] sm:$0xe]
      %v2194 = vld [vmem:[%s1827 + $0x10] sm:$0xf]
      %v2195 = vld [vmem:[%s1827 + $0x14] sm:$0x1]
      %v2196 = vld [vmem:[%s1827 + $0x18] sm:$0xe]
      %v2197 = vld [vmem:[%s1827 + $0x1c] sm:$0xf]
      %v2198 = vld [vmem:[%s1827 + $0x20] sm:$0x1]
      %v2199 = vld [vmem:[%s1827 + $0x24] sm:$0xe]
      %v2200 = vld [vmem:[%s1827 + $0x28] sm:$0xf]
      %v2201 = vld [vmem:[%s1827 + $0x2c] sm:$0x1]
      %v2202 = vld [vmem:[%s1827 + $0x30] sm:$0xe]
      %v2203 = vld [vmem:[%s1827 + $0x34] sm:$0xf]
      %v2204 = vld [vmem:[%s1827 + $0x38] sm:$0x1]
      %v2205 = vld [vmem:[%s1827 + $0x3c] sm:$0xe]
      %v2206 = vld [vmem:[%s1827 + $0x40] sm:$0xf]
      %v2207 = vld [vmem:[%s1827 + $0x44] sm:$0x1]
      %v2208 = vld [vmem:[%s1827 + $0x48] sm:$0xe]
      %v2209 = vld [vmem:[%s1827 + $0x4c] sm:$0xf]
      %v2210 = vld [vmem:[%s1827 + $0x50] sm:$0x1]
      %v2211 = vld [vmem:[%s1827 + $0x54] sm:$0xe]
      %v2212 = vld [vmem:[%s1827 + $0x58] sm:$0xf]
      %v2213 = vld [vmem:[%s1827 + $0x5c] sm:$0x1]
      %v2238 = vrot.slane %v2190, 5
      %v2239 = vrot.slane %v2238, 4
      %v2240 = vrot.slane %v2191, 5
      %v2241 = vsel %vm1190, %v2239, %v2240
      %v2242 = vrot.slane %v2240, 4
      %v2243 = vrot.slane %v2192, 5
      %v2244 = vsel %vm1190, %v2242, %v2243
      %v2245 = vrot.slane %v2193, 5
      %v2246 = vrot.slane %v2245, 4
      %v2247 = vrot.slane %v2194, 5
      %v2248 = vsel %vm1190, %v2246, %v2247
      %v2249 = vrot.slane %v2247, 4
      %v2250 = vrot.slane %v2195, 5
      %v2251 = vsel %vm1190, %v2249, %v2250
      %v2252 = vrot.slane %v2196, 5
      %v2253 = vrot.slane %v2252, 4
      %v2254 = vrot.slane %v2197, 5
      %v2255 = vsel %vm1190, %v2253, %v2254
      %v2256 = vrot.slane %v2254, 4
      %v2257 = vrot.slane %v2198, 5
      %v2258 = vsel %vm1190, %v2256, %v2257
      %v2259 = vrot.slane %v2199, 5
      %v2260 = vrot.slane %v2259, 4
      %v2261 = vrot.slane %v2200, 5
      %v2262 = vsel %vm1190, %v2260, %v2261
      %v2263 = vrot.slane %v2261, 4
      %v2264 = vrot.slane %v2201, 5
      %v2265 = vsel %vm1190, %v2263, %v2264
      %v2266 = vrot.slane %v2202, 5
      %v2267 = vrot.slane %v2266, 4
      %v2268 = vrot.slane %v2203, 5
      %v2269 = vsel %vm1190, %v2267, %v2268
      %v2270 = vrot.slane %v2268, 4
      %v2271 = vrot.slane %v2204, 5
      %v2272 = vsel %vm1190, %v2270, %v2271
      %v2273 = vrot.slane %v2205, 5
      %v2274 = vrot.slane %v2273, 4
      %v2275 = vrot.slane %v2206, 5
      %v2276 = vsel %vm1190, %v2274, %v2275
      %v2277 = vrot.slane %v2275, 4
      %v2278 = vrot.slane %v2207, 5
      %v2279 = vsel %vm1190, %v2277, %v2278
      %v2280 = vrot.slane %v2208, 5
      %v2281 = vrot.slane %v2280, 4
      %v2282 = vrot.slane %v2209, 5
      %v2283 = vsel %vm1190, %v2281, %v2282
      %v2284 = vrot.slane %v2282, 4
      %v2285 = vrot.slane %v2210, 5
      %v2286 = vsel %vm1190, %v2284, %v2285
      %v2287 = vrot.slane %v2211, 5
      %v2288 = vrot.slane %v2287, 4
      %v2289 = vrot.slane %v2212, 5
      %v2290 = vsel %vm1190, %v2288, %v2289
      %v2291 = vrot.slane %v2289, 4
      %v2292 = vrot.slane %v2213, 5
      %v2293 = vsel %vm1190, %v2291, %v2292
      %v2294 = vunpack.c.l.b16 %v2241
      %v2295 = vunpack.c.l.b16 %v2244
      %v2296 = vunpack.c.l.b16 %v2248
      %v2297 = vunpack.c.l.b16 %v2251
      %v2298 = vunpack.c.l.b16 %v2255
      %v2299 = vunpack.c.l.b16 %v2258
      %v2300 = vunpack.c.l.b16 %v2262
      %v2301 = vunpack.c.l.b16 %v2265
      %v2302 = vunpack.c.l.b16 %v2269
      %v2303 = vunpack.c.l.b16 %v2272
      %v2304 = vunpack.c.l.b16 %v2276
      %v2305 = vunpack.c.l.b16 %v2279
      %v2306 = vunpack.c.l.b16 %v2283
      %v2307 = vunpack.c.l.b16 %v2286
      %v2308 = vunpack.c.l.b16 %v2290
      %v2309 = vunpack.c.l.b16 %v2293
      %v2310 = vpack.c.b16 %v2295, %v2294
      %v2311 = vpack.c.b16 %v2297, %v2296
      %v2312 = vpack.c.b16 %v2299, %v2298
      %v2313 = vpack.c.b16 %v2301, %v2300
      %v2314 = vpack.c.b16 %v2303, %v2302
      %v2315 = vpack.c.b16 %v2305, %v2304
      %v2316 = vpack.c.b16 %v2307, %v2306
      %v2317 = vpack.c.b16 %v2309, %v2308
      %2318 = vrot.lane.b32.xlu0 %v2310, 32
      %v2319 = vpop.permute.xlu0 %2318
      %2320 = vrot.lane.b32.xlu0 %v2311, 32
      %v2321 = vpop.permute.xlu0 %2320
      %2322 = vrot.lane.b32.xlu0 %v2312, 32
      %v2323 = vpop.permute.xlu0 %2322
      %2324 = vrot.lane.b32.xlu0 %v2313, 32
      %v2325 = vpop.permute.xlu0 %2324
      %2326 = vrot.lane.b32.xlu0 %v2314, 32
      %v2327 = vpop.permute.xlu0 %2326
      %2328 = vrot.lane.b32.xlu0 %v2315, 32
      %v2329 = vpop.permute.xlu0 %2328
      %2330 = vrot.lane.b32.xlu0 %v2316, 32
      %v2331 = vpop.permute.xlu0 %2330
      %2332 = vrot.lane.b32.xlu0 %v2317, 32
      %v2333 = vpop.permute.xlu0 %2332
      %vm2342 = vcmask 294144
      %2343 = vst.msk [vmem:[#allocation3] sm:$0xff] %vm2342, %v2319
      %2344 = vst.msk [vmem:[#allocation3 + $0x8] sm:$0xff] %vm2342, %v2321
      %2345 = vst.msk [vmem:[#allocation3 + $0x10] sm:$0xff] %vm2342, %v2323
      %2346 = vst.msk [vmem:[#allocation3 + $0x18] sm:$0xff] %vm2342, %v2325
      %2347 = vst.msk [vmem:[#allocation3 + $0x20] sm:$0xff] %vm2342, %v2327
      %2348 = vst.msk [vmem:[#allocation3 + $0x28] sm:$0xff] %vm2342, %v2329
      %2349 = vst.msk [vmem:[#allocation3 + $0x30] sm:$0xff] %vm2342, %v2331
      %2350 = vst.msk [vmem:[#allocation3 + $0x38] sm:$0xff] %vm2342, %v2333
      %v2351 = vld [vmem:[#allocation3] sm:$0xff]
      %v2352 = vld [vmem:[#allocation3 + $0x8] sm:$0xff]
      %v2353 = vld [vmem:[#allocation3 + $0x10] sm:$0xff]
      %v2354 = vld [vmem:[#allocation3 + $0x18] sm:$0xff]
      %v2355 = vld [vmem:[#allocation3 + $0x20] sm:$0xff]
      %v2356 = vld [vmem:[#allocation3 + $0x28] sm:$0xff]
      %v2357 = vld [vmem:[#allocation3 + $0x30] sm:$0xff]
      %v2358 = vld [vmem:[#allocation3 + $0x38] sm:$0xff]
      %v2359 = vld [vmem:[%s3] sm:$0xf]
      %v2360 = vld [vmem:[%s3 + $0x4] sm:$0xf]
      %v2361 = vld [vmem:[%s3 + $0x8] sm:$0xf]
      %v2362 = vld [vmem:[%s3 + $0xc] sm:$0xf]
      %v2363 = vld [vmem:[%s3 + $0x10] sm:$0x3]
      %v2369 = vunpack.c.l.b16 %v2359
      %v2370 = vunpack.c.l.b16 %v2360
      %v2371 = vunpack.c.l.b16 %v2361
      %v2372 = vunpack.c.l.b16 %v2362
      %v2373 = vunpack.c.l.b16 %v2363
      %v2374 = vpack.c.b16 %v2370, %v2369
      %v2375 = vpack.c.b16 %v2372, %v2371
      %v2376 = vpack.c.b16 %v2373, %v2373
      %vm2379 = vcmask 293888
      %v2381 = vsel %vm2379, %v2351, 0
      %v2384 = vsel %vm2379, %v2352, 0
      %v2387 = vsel %vm2379, %v2353, 0
      %v2390 = vsel %vm2379, %v2354, 0
      %v2393 = vsel %vm2379, %v2355, 0
      %v2396 = vsel %vm2379, %v2356, 0
      %v2399 = vsel %vm2379, %v2357, 0
      %v2402 = vsel %vm2379, %v2358, 0
      %vm2404 = vcmask 1041408
      %v2406 = vsel %vm2404, %v2376, 0
      %2408 = vmatprep.subr.bf16.mxu0 0
      %2409 = vmatpush1.bf16.msra.mxu0 %v2374
      %2410 = vmatprep.subr.bf16.mxu0 0
      %2411 = vmatpush1.bf16.msra.mxu0 %v2375
      %2412 = vmatprep.subr.bf16.mxu0 0
      %2413 = vmatpush1.bf16.msra.mxu0 %v2406
      %2414 = vmatprep.subr.bf16.mxu0 0
      %2415 = vmatpush1.bf16.msra.mxu0 0
      %2416 = vmatprep.subr.bf16.mxu0 0
      %2417 = vmatpush1.bf16.msra.mxu0 0
      %2418 = vmatprep.subr.bf16.mxu0 0
      %2419 = vmatpush1.bf16.msra.mxu0 0
      %2420 = vmatprep.subr.bf16.mxu0 0
      %2421 = vmatpush1.bf16.msra.mxu0 0
      %2422 = vmatprep.subr.bf16.mxu0 0
      %2423 = vmatpush1.bf16.msra.mxu0 0
      %2424 = vmatprep.subr.bf16.mxu0 0
      %2425 = vmatpush1.bf16.msra.mxu0 0
      %2426 = vmatprep.subr.bf16.mxu0 0
      %2427 = vmatpush1.bf16.msra.mxu0 0
      %2428 = vmatprep.subr.bf16.mxu0 0
      %2429 = vmatpush1.bf16.msra.mxu0 0
      %2430 = vmatprep.subr.bf16.mxu0 0
      %2431 = vmatpush1.bf16.msra.mxu0 0
      %2432 = vmatprep.subr.bf16.mxu0 0
      %2433 = vmatpush1.bf16.msra.mxu0 0
      %2434 = vmatprep.subr.bf16.mxu0 0
      %2435 = vmatpush1.bf16.msra.mxu0 0
      %2436 = vmatprep.subr.bf16.mxu0 0
      %2437 = vmatpush1.bf16.msra.mxu0 0
      %2438 = vmatprep.subr.bf16.mxu0 0
      %2439 = vmatpush1.bf16.msra.mxu0 0
      %2440 = vmatprep.mubr.bf16.mxu0 0
      %2441 = vmatmul.mubr.bf16.gmra.mrb[0].mxu0 %v2381
      %v2442 = vpop.f32.mrb[0].mxu0
      %v2443 = vadd.f32 0.0, %v2442
      %v2444 = vpop.f32.mrb[0].mxu0
      %v2445 = vpop.f32.mrb[0].mxu0
      %v2446 = vadd.f32 0.0, %v2445
      %v2447 = vpop.f32.mrb[0].mxu0
      %2448 = vmatprep.mubr.bf16.mxu0 0
      %2449 = vmatmul.mubr.bf16.gmra.mrb[0].mxu0 %v2384
      %v2450 = vpop.f32.mrb[0].mxu0
      %v2451 = vadd.f32 0.0, %v2450
      %v2452 = vpop.f32.mrb[0].mxu0
      %v2453 = vpop.f32.mrb[0].mxu0
      %v2454 = vadd.f32 0.0, %v2453
      %v2455 = vpop.f32.mrb[0].mxu0
      %2456 = vmatprep.mubr.bf16.mxu0 0
      %2457 = vmatmul.mubr.bf16.gmra.mrb[0].mxu0 %v2387
      %v2458 = vpop.f32.mrb[0].mxu0
      %v2459 = vadd.f32 0.0, %v2458
      %v2460 = vpop.f32.mrb[0].mxu0
      %v2461 = vpop.f32.mrb[0].mxu0
      %v2462 = vadd.f32 0.0, %v2461
      %v2463 = vpop.f32.mrb[0].mxu0
      %2464 = vmatprep.mubr.bf16.mxu0 0
      %2465 = vmatmul.mubr.bf16.gmra.mrb[0].mxu0 %v2390
      %v2466 = vpop.f32.mrb[0].mxu0
      %v2467 = vadd.f32 0.0, %v2466
      %v2468 = vpop.f32.mrb[0].mxu0
      %v2469 = vpop.f32.mrb[0].mxu0
      %v2470 = vadd.f32 0.0, %v2469
      %v2471 = vpop.f32.mrb[0].mxu0
      %2472 = vmatprep.mubr.bf16.mxu0 0
      %2473 = vmatmul.mubr.bf16.gmra.mrb[0].mxu0 %v2393
      %v2474 = vpop.f32.mrb[0].mxu0
      %v2475 = vadd.f32 0.0, %v2474
      %v2476 = vpop.f32.mrb[0].mxu0
      %v2477 = vpop.f32.mrb[0].mxu0
      %v2478 = vadd.f32 0.0, %v2477
      %v2479 = vpop.f32.mrb[0].mxu0
      %2480 = vmatprep.mubr.bf16.mxu0 0
      %2481 = vmatmul.mubr.bf16.gmra.mrb[0].mxu0 %v2396
      %v2482 = vpop.f32.mrb[0].mxu0
      %v2483 = vadd.f32 0.0, %v2482
      %v2484 = vpop.f32.mrb[0].mxu0
      %v2485 = vpop.f32.mrb[0].mxu0
      %v2486 = vadd.f32 0.0, %v2485
      %v2487 = vpop.f32.mrb[0].mxu0
      %2488 = vmatprep.mubr.bf16.mxu0 0
      %2489 = vmatmul.mubr.bf16.gmra.mrb[0].mxu0 %v2399
      %v2490 = vpop.f32.mrb[0].mxu0
      %v2491 = vadd.f32 0.0, %v2490
      %v2492 = vpop.f32.mrb[0].mxu0
      %v2493 = vpop.f32.mrb[0].mxu0
      %v2494 = vadd.f32 0.0, %v2493
      %v2495 = vpop.f32.mrb[0].mxu0
      %2496 = vmatprep.mubr.bf16.mxu0 0
      %2497 = vmatmul.mubr.bf16.gmra.mrb[0].mxu0 %v2402
      %v2498 = vpop.f32.mrb[0].mxu0
      %v2499 = vadd.f32 0.0, %v2498
      %v2500 = vpop.f32.mrb[0].mxu0
      %v2501 = vpop.f32.mrb[0].mxu0
      %v2502 = vadd.f32 0.0, %v2501
      %v2503 = vpop.f32.mrb[0].mxu0
      %2504 = vdwg.mxu0
      %2505 = vst.msk [vmem:[%s261] sm:$0xff] %vm855, %v2443
      %2506 = vst.msk [vmem:[%s261 + $0x8] sm:$0xff] %vm855, %v2446
      %2507 = vst.msk [vmem:[%s261 + $0x10] sm:$0xff] %vm855, %v2451
      %2508 = vst.msk [vmem:[%s261 + $0x18] sm:$0xff] %vm855, %v2454
      %2509 = vst.msk [vmem:[%s261 + $0x20] sm:$0xff] %vm855, %v2459
      %2510 = vst.msk [vmem:[%s261 + $0x28] sm:$0xff] %vm855, %v2462
      %2511 = vst.msk [vmem:[%s261 + $0x30] sm:$0xff] %vm855, %v2467
      %2512 = vst.msk [vmem:[%s261 + $0x38] sm:$0xff] %vm855, %v2470
      %2513 = vst.msk [vmem:[%s261 + $0x40] sm:$0xff] %vm855, %v2475
      %2514 = vst.msk [vmem:[%s261 + $0x48] sm:$0xff] %vm855, %v2478
      %2515 = vst.msk [vmem:[%s261 + $0x50] sm:$0xff] %vm855, %v2483
      %2516 = vst.msk [vmem:[%s261 + $0x58] sm:$0xff] %vm855, %v2486
      %2517 = vst.msk [vmem:[%s261 + $0x60] sm:$0xff] %vm855, %v2491
      %2518 = vst.msk [vmem:[%s261 + $0x68] sm:$0xff] %vm855, %v2494
      %2519 = vst.msk [vmem:[%s261 + $0x70] sm:$0xff] %vm855, %v2499
      %2520 = vst.msk [vmem:[%s261 + $0x78] sm:$0xff] %vm855, %v2502
      %v2521 = vsel %vm855, %v2443, 0.0
      %v2522 = vsel %vm855, %v2446, 0.0
      %v2523 = vadd.f32 %v2521, %v2522
      %v2524 = vsel %vm855, %v2451, 0.0
      %v2525 = vadd.f32 %v2523, %v2524
      %v2526 = vsel %vm855, %v2454, 0.0
      %v2527 = vadd.f32 %v2525, %v2526
      %v2528 = vsel %vm855, %v2459, 0.0
      %v2529 = vadd.f32 %v2527, %v2528
      %v2530 = vsel %vm855, %v2462, 0.0
      %v2531 = vadd.f32 %v2529, %v2530
      %v2532 = vsel %vm855, %v2467, 0.0
      %v2533 = vadd.f32 %v2531, %v2532
      %v2534 = vsel %vm855, %v2470, 0.0
      %v2535 = vadd.f32 %v2533, %v2534
      %v2536 = vsel %vm855, %v2475, 0.0
      %v2537 = vadd.f32 %v2535, %v2536
      %v2538 = vsel %vm855, %v2478, 0.0
      %v2539 = vadd.f32 %v2537, %v2538
      %v2540 = vsel %vm855, %v2483, 0.0
      %v2541 = vadd.f32 %v2539, %v2540
      %v2542 = vsel %vm855, %v2486, 0.0
      %v2543 = vadd.f32 %v2541, %v2542
      %v2544 = vsel %vm855, %v2491, 0.0
      %v2545 = vadd.f32 %v2543, %v2544
      %v2546 = vsel %vm855, %v2494, 0.0
      %v2547 = vadd.f32 %v2545, %v2546
      %v2548 = vsel %vm855, %v2499, 0.0
      %v2549 = vadd.f32 %v2547, %v2548
      %v2550 = vsel %vm855, %v2502, 0.0
      %v2551 = vadd.f32 %v2549, %v2550
      %v2552 = vrot.slane %v2551, 4
      %v2553 = vadd.f32 %v2551, %v2552
      %v2554 = vrot.slane %v2553, 2
      %v2555 = vadd.f32 %v2553, %v2554
      %v2556 = vrot.slane %v2555, 1
      %v2557 = vadd.f32 %v2555, %v2556
      %vm2558 = vcmask 24576
      %2559 = vst.msk [vmem:[%s270] sm:$0x1] %vm2558, %v2557
      %v2560 = vmul.f32 %v2443, %v2443
      %v2561 = vmul.f32 %v2446, %v2446
      %v2562 = vmul.f32 %v2451, %v2451
      %v2563 = vmul.f32 %v2454, %v2454
      %v2564 = vmul.f32 %v2459, %v2459
      %v2565 = vmul.f32 %v2462, %v2462
      %v2566 = vmul.f32 %v2467, %v2467
      %v2567 = vmul.f32 %v2470, %v2470
      %v2568 = vmul.f32 %v2475, %v2475
      %v2569 = vmul.f32 %v2478, %v2478
      %v2570 = vmul.f32 %v2483, %v2483
      %v2571 = vmul.f32 %v2486, %v2486
      %v2572 = vmul.f32 %v2491, %v2491
      %v2573 = vmul.f32 %v2494, %v2494
      %v2574 = vmul.f32 %v2499, %v2499
      %v2575 = vmul.f32 %v2502, %v2502
      %v2576 = vsel %vm855, %v2560, 0.0
      %v2577 = vsel %vm855, %v2561, 0.0
      %v2578 = vadd.f32 %v2576, %v2577
      %v2579 = vsel %vm855, %v2562, 0.0
      %v2580 = vadd.f32 %v2578, %v2579
      %v2581 = vsel %vm855, %v2563, 0.0
      %v2582 = vadd.f32 %v2580, %v2581
      %v2583 = vsel %vm855, %v2564, 0.0
      %v2584 = vadd.f32 %v2582, %v2583
      %v2585 = vsel %vm855, %v2565, 0.0
      %v2586 = vadd.f32 %v2584, %v2585
      %v2587 = vsel %vm855, %v2566, 0.0
      %v2588 = vadd.f32 %v2586, %v2587
      %v2589 = vsel %vm855, %v2567, 0.0
      %v2590 = vadd.f32 %v2588, %v2589
      %v2591 = vsel %vm855, %v2568, 0.0
      %v2592 = vadd.f32 %v2590, %v2591
      %v2593 = vsel %vm855, %v2569, 0.0
      %v2594 = vadd.f32 %v2592, %v2593
      %v2595 = vsel %vm855, %v2570, 0.0
      %v2596 = vadd.f32 %v2594, %v2595
      %v2597 = vsel %vm855, %v2571, 0.0
      %v2598 = vadd.f32 %v2596, %v2597
      %v2599 = vsel %vm855, %v2572, 0.0
      %v2600 = vadd.f32 %v2598, %v2599
      %v2601 = vsel %vm855, %v2573, 0.0
      %v2602 = vadd.f32 %v2600, %v2601
      %v2603 = vsel %vm855, %v2574, 0.0
      %v2604 = vadd.f32 %v2602, %v2603
      %v2605 = vsel %vm855, %v2575, 0.0
      %v2606 = vadd.f32 %v2604, %v2605
      %v2607 = vrot.slane %v2606, 4
      %v2608 = vadd.f32 %v2606, %v2607
      %v2609 = vrot.slane %v2608, 2
      %v2610 = vadd.f32 %v2608, %v2609
      %v2611 = vrot.slane %v2610, 1
      %v2612 = vadd.f32 %v2610, %v2611
      %2613 = vst.msk [vmem:[%s270 + $0x1] sm:$0x1] %vm2558, %v2612
      %s2614 = smul.u32 8, %s22
      %p2615 = scmp.lt.s32.totalorder %s21, 1
      %s2616 = scalar_select %p2615, %s21, 1
      %p2617 = scmp.lt.s32.totalorder %s2614, 15
      %s2618 = scalar_select %p2617, %s2614, 15
      %s2619 = smul.addr %s2618, 2
      %s2620 = smul.addr %s2616, 32
      %s2621 = sadd.s32 %s2619, %s2620
      %s2622 = smul.addr %s2621, 8
      %s2623 = scalar_lea.vmem %s4, %s2622
      %p2624 = scmp.lt.s32.totalorder %s21, 1
      %s2625 = scalar_select %p2624, %s21, 1
      %p2626 = scmp.lt.s32.totalorder %s22, 1
      %s2627 = scalar_select %p2626, %s22, 1
      %s2628 = smul.addr %s2625, 2
      %s2629 = sadd.s32 %s2627, %s2628
      %s2630 = smul.addr %s2629, 2
      %s2631 = scalar_lea.vmem %s5, %s2630
      // Predicated region
      $region37: #{basic_block.4} parent=35 // pred_check
        %p2632 = pneg %p138
      $region38: #{basic_block.4} parent=35 // pred_check_branch
        %2634 = sbr.rel (%p2632) target = $region40
      $region39: #{basic_block.4} parent=35 // pred_region
        %s2635 = smul.u32 8, %s22
      $region40: #{basic_block.4} parent=35 // pred_fallthru
        _
      // Predicated region
      $region41: #{basic_block.4} parent=35 // pred_check
        %p2636 = pneg %p166
      $region42: #{basic_block.4} parent=35 // pred_check_branch
        %2638 = sbr.rel (%p2636) target = $region44
      $region43: #{basic_block.4} parent=35 // pred_region
        _
      $region44: #{basic_block.4} parent=35 // pred_fallthru
        _
    $region36: #{basic_block.4} parent=5 // pred_fallthru
      _
    %p2639 = scmp.le.s32.totalorder 2, %s12
    // Predicated region
    $region45: #{basic_block.4} parent=5 // pred_check
      %p2640 = pneg %p2639
    $region46: #{basic_block.4} parent=5 // pred_check_branch
      %2642 = sbr.rel (%p2640) target = $region48
    $region47: #{basic_block.4} parent=5 // pred_region
      %s2643 = ssub.s32 %s12, 2
      // Predicated region
      $region49: #{basic_block.4} parent=47 // pred_check
        %p2644 = pneg %p144
      $region50: #{basic_block.4} parent=47 // pred_check_branch
        %2646 = sbr.rel (%p2644) target = $region52
      $region51: #{basic_block.4} parent=47 // pred_region
        %s2647 = smul.u32 8, %s24
        %p2648 = scmp.lt.s32.totalorder %s23, 1
        %s2649 = scalar_select %p2648, %s23, 1
        %p2650 = scmp.lt.s32.totalorder %s2647, 15
        %s2651 = scalar_select %p2650, %s2647, 15
        %s2652 = smul.addr %s2651, 2
        %s2653 = smul.addr %s2649, 32
        %s2654 = sadd.s32 %s2652, %s2653
        %s2655 = smul.addr %s2654, 8
        %s2656 = scalar_lea.vmem %s4, %s2655
      $region52: #{basic_block.4} parent=47 // pred_fallthru
        _
      // Predicated region
      $region53: #{basic_block.4} parent=47 // pred_check
        %p2657 = pneg %p172
      $region54: #{basic_block.4} parent=47 // pred_check_branch
        %2659 = sbr.rel (%p2657) target = $region56
      $region55: #{basic_block.4} parent=47 // pred_region
        %p2660 = scmp.lt.s32.totalorder %s23, 1
        %s2661 = scalar_select %p2660, %s23, 1
        %p2662 = scmp.lt.s32.totalorder %s24, 1
        %s2663 = scalar_select %p2662, %s24, 1
        %s2664 = smul.addr %s2661, 2
        %s2665 = sadd.s32 %s2663, %s2664
        %s2666 = smul.addr %s2665, 2
        %s2667 = scalar_lea.vmem %s5, %s2666
      $region56: #{basic_block.4} parent=47 // pred_fallthru
        _
    $region48: #{basic_block.4} parent=5 // pred_fallthru
      _
  $region6: #{basic_block.4} parent=0 // loop_footer
    %s16 = sadd.s32 1, %s12
  $region7: #{basic_block.4} parent=0 // loop_footer_branch
    %11 = sbr.rel target = $region3
  $region8: #{basic_block.4} parent=0 // loop_exit
    _

</llo_original>
